<compile_context>
chip_gen: v7x
topology: tpu7x:2x2x1
jax: 0.10.0
libtpu: 0.0.40
codegen_flags: <defaults>
</compile_context>

<pallas_src>
import functools
import math

import numpy as np
import jax
import jax.numpy as jnp
from jax import lax
from jax.experimental import pallas as pl
from jax.experimental.pallas import tpu as pltpu

BN_EPS = 1e-5


# ----------------------------- fused forward kernel ---------------------------

def _fused_kernel(*refs, tap_offs, id_off, L, Lr, inv_hw, resize):
    if resize:
        (xpoly_ref, pmask_ref, omask_ref, w1_ref, b1_ref, w2_ref, b2_ref,
         w3_ref, b3_ref, sw1_ref, sb1_ref, sw2_ref, sb2_ref, wi_ref, bi_ref,
         o_ref, y1_ref) = refs
    else:
        (xpoly_ref, pmask_ref, omask_ref, w1_ref, b1_ref, w2_ref, b2_ref,
         w3_ref, b3_ref, sw1_ref, sb1_ref, sw2_ref, sb2_ref,
         o_ref, y1_ref) = refs
        wi_ref = bi_ref = None

    # ---- conv1 (1x1) + BN + ReLU on every padded/polyphase pixel (bf16 MXU, f32 acc);
    #      padded positions are forced back to zero so the 3x3 conv sees zero-padding.
    xall = xpoly_ref[0]                                              # (Mq, Cin) bf16
    y1 = jnp.dot(xall, w1_ref[...], preferred_element_type=jnp.float32) + b1_ref[...]
    y1_ref[...] = jnp.maximum(y1, 0.0) * pmask_ref[...]              # (Mq, Gw) f32 VMEM

    # ---- grouped 3x3 conv (stride folded into static polyphase slab offsets) + BN + ReLU.
    acc = None
    for t, off in enumerate(tap_offs):
        slab = y1_ref[off:off + L, :].astype(jnp.bfloat16)           # (L, Gw)
        part = jnp.dot(slab, w2_ref[t], preferred_element_type=jnp.float32)
        acc = part if acc is None else acc + part
    y2 = jnp.maximum(acc + b2_ref[...], 0.0).astype(jnp.bfloat16)    # (L, Gw)

    # ---- conv3 (1x1) + BN.
    y3 = jnp.dot(y2, w3_ref[...], preferred_element_type=jnp.float32) + b3_ref[...]

    # ---- SE gate: masked global average pool -> FC -> ReLU -> FC -> sigmoid.
    pool = jnp.sum(y3 * omask_ref[...], axis=0, keepdims=True) * inv_hw        # (1, Cout)
    hmid = jnp.maximum(
        jnp.dot(pool, sw1_ref[...], preferred_element_type=jnp.float32) + sb1_ref[...],
        0.0)
    gate = jax.nn.sigmoid(
        jnp.dot(hmid, sw2_ref[...], preferred_element_type=jnp.float32) + sb2_ref[...])

    # ---- identity branch (strided pixels come from the same polyphase buffer),
    #      SE channel scale, residual add, final ReLU.
    xid = xpoly_ref[0, id_off:id_off + L, :]                         # (L, Cin) bf16
    if resize:
        ident = jnp.dot(xid, wi_ref[...], preferred_element_type=jnp.float32) + bi_ref[...]
    else:
        ident = xid.astype(jnp.float32)
    out = jnp.maximum(y3 * gate + ident, 0.0)

    o_ref[0, 0:L, :] = out.astype(o_ref.dtype)
    if L < Lr:                         # zero the unused slab rows (no uninitialized HBM)
        o_ref[0, L:Lr, :] = jnp.zeros((Lr - L, out.shape[1]), o_ref.dtype)


def se_resnext_forward(x_nchw, params, stride):
    x = jnp.transpose(x_nchw, (0, 2, 3, 1)).astype(jnp.float32)      # NCHW -> NHWC
    N, H, W, Cin = x.shape
    w1, b1 = params["body_conv1"]
    w2, b2 = params["body_conv2"]
    w3, b3 = params["body_conv3"]
    sw1, sb1, sw2, sb2 = params["se"]
    Gw = w1.shape[1]
    Cout = w3.shape[1]
    Cmid = sw1.shape[1]
    resize = "identity" in params

    s = int(stride)
    Ho, Wo = (H - 1) // s + 1, (W - 1) // s + 1
    Hp, Wp = H + 2, W + 2
    Hq, Wq = -(-Hp // s), -(-Wp // s)
    HqWq = Hq * Wq
    Mq = s * s * HqWq                  # padded polyphase pixels per image
    L = (Ho - 1) * Wq + Wo             # covering slab length (rows) in the output layout
    Lr = Ho * Wq                       # full output slab rows (junk cols w' >= Wo)

    # ---- the single XLA re-layout: pad + polyphase split of the INPUT, stored bf16.
    #      poly row ((i*s+j)*Hq + a)*Wq + b  <->  padded pixel (a*s+i, b*s+j)
    xp = jnp.pad(x, ((0, 0), (1, Hq * s - Hp + 1), (1, Wq * s - Wp + 1), (0, 0)))
    xpoly = (xp.reshape(N, Hq, s, Wq, s, Cin)
               .transpose(0, 2, 4, 1, 3, 5)
               .reshape(N, Mq, Cin)
               .astype(jnp.bfloat16))

    # ---- compile-time masks (numpy constants; no runtime XLA work)
    mp = np.zeros((Hq * s, Wq * s), np.float32)
    mp[1:H + 1, 1:W + 1] = 1.0
    pmask = jnp.asarray(mp.reshape(Hq, s, Wq, s).transpose(1, 3, 0, 2).reshape(Mq, 1))
    om = np.tile((np.arange(Wq) < Wo).astype(np.float32), Ho)[:L].reshape(L, 1)
    omask = jnp.asarray(om)

    # ---- static slab offsets for the 9 conv taps and for the identity pixels
    tap_offs = []
    for kh in range(3):
        for kw in range(3):
            p = (kh % s) * s + (kw % s)
            start = (kh // s) * Wq + (kw // s)
            tap_offs.append(p * HqWq + start)
    tap_offs = tuple(tap_offs)
    id_off = ((1 % s) * s + (1 % s)) * HqWq + (1 // s) * Wq + (1 // s)

    def bs_full(shape):
        return pl.BlockSpec(shape, lambda n: (0,) * len(shape))

    in_specs = [
        pl.BlockSpec((1, Mq, Cin), lambda n: (n, 0, 0)),   # xpoly (per image)
        bs_full((Mq, 1)),                                  # pad-validity mask
        bs_full((L, 1)),                                   # output-row validity mask
        bs_full((Cin, Gw)), bs_full((1, Gw)),              # conv1 (folded BN)
        bs_full((9, Gw, Gw)), bs_full((1, Gw)),            # conv2 taps (folded BN)
        bs_full((Gw, Cout)), bs_full((1, Cout)),           # conv3 (folded BN)
        bs_full((Cout, Cmid)), bs_full((1, Cmid)),         # SE fc1
        bs_full((Cmid, Cout)), bs_full((1, Cout)),         # SE fc2
    ]
    args = [xpoly, pmask, omask, w1, b1, w2, b2, w3, b3, sw1, sb1, sw2, sb2]
    if resize:
        wi, bi = params["identity"]
        in_specs += [bs_full((Cin, Cout)), bs_full((1, Cout))]
        args += [wi, bi]

    flops = 2 * N * (Mq * Cin * Gw + 9 * L * Gw * Gw + L * Gw * Cout
                     + (L * Cin * Cout if resize else 0))
    bytes_accessed = 2 * N * Mq * Cin + 4 * N * Lr * Cout

    out_slab = pl.pallas_call(
        functools.partial(_fused_kernel, tap_offs=tap_offs, id_off=id_off,
                          L=L, Lr=Lr, inv_hw=1.0 / (Ho * Wo), resize=resize),
        out_shape=jax.ShapeDtypeStruct((N, Lr, Cout), jnp.float32),
        grid=(N,),
        in_specs=in_specs,
        out_specs=pl.BlockSpec((1, Lr, Cout), lambda n: (n, 0, 0)),
        scratch_shapes=[pltpu.VMEM((Mq, Gw), jnp.float32)],
        compiler_params=pltpu.CompilerParams(dimension_semantics=("parallel",)),
        cost_estimate=pl.CostEstimate(flops=int(flops), transcendentals=int(N * Cout),
                                      bytes_accessed=int(bytes_accessed)),
    )(*args)

    # Junk-column drop fuses into the (mandatory) NHWC->NCHW relayout of the final output.
    out = out_slab.reshape(N, Ho, Wq, Cout)[:, :, :Wo, :]
    return jnp.transpose(out, (0, 3, 1, 2))                          # NHWC -> NCHW


# ----------------------- parameter init / BN folding --------------------------

def _fold_bn_1x1(w, gamma, beta, mean, var):
    # torch layout (Cout, Cin, 1, 1) -> matmul weight (Cin, Cout), bias (Cout,)
    scale = gamma / jnp.sqrt(var + BN_EPS)
    w_mat = (w[:, :, 0, 0] * scale[:, None]).T
    b = beta - mean * scale
    return w_mat, b


def _fold_bn_grouped3x3(w, gamma, beta, mean, var, groups):
    # torch layout (Gw, D, 3, 3) -> 9 block-diagonal tap matrices (9, Gw, Gw)
    scale = gamma / jnp.sqrt(var + BN_EPS)
    w_f = w * scale[:, None, None, None]
    b = beta - mean * scale
    gw, din = w_f.shape[0], w_f.shape[1]
    dout = gw // groups
    w_g = (w_f.reshape(groups, dout, din, 3, 3)
              .transpose(3, 4, 0, 2, 1)          # (kh, kw, g, din, dout)
              .reshape(9, groups, din, dout))
    w_tap = jnp.zeros((9, gw, gw), jnp.float32)
    for g in range(groups):
        w_tap = w_tap.at[:, g * din:(g + 1) * din, g * dout:(g + 1) * dout].set(w_g[:, g])
    return w_f, w_tap, b


def init_params(key, in_channels, out_channels, stride, cardinality, bottleneck_width):
    resize_identity = (in_channels != out_channels) or (stride != 1)
    mid_channels = out_channels // 4
    D = int(math.floor(mid_channels * (bottleneck_width / 64.0)))
    group_width = cardinality * D
    se_mid = out_channels // 16

    it = iter(jax.random.split(key, 32))
    nrm = lambda shape: 0.1 * jax.random.normal(next(it), shape, jnp.float32)

    def bn(c):
        gamma = 1.0 + 0.1 * jax.random.normal(next(it), (c,), jnp.float32)
        beta = 0.1 * jax.random.normal(next(it), (c,), jnp.float32)
        mean = 0.1 * jax.random.normal(next(it), (c,), jnp.float32)
        var = 0.5 + 0.25 * jax.random.uniform(next(it), (c,), jnp.float32)
        return gamma, beta, mean, var

    w1_t = nrm((group_width, in_channels, 1, 1))
    w1, b1 = _fold_bn_1x1(w1_t, *bn(group_width))

    w2_t = nrm((group_width, D, 3, 3))
    w2_fold_torch, w2_tap, b2 = _fold_bn_grouped3x3(w2_t, *bn(group_width),
                                                    groups=cardinality)

    w3_t = nrm((out_channels, group_width, 1, 1))
    w3, b3 = _fold_bn_1x1(w3_t, *bn(out_channels))

    bf = lambda a: a.astype(jnp.bfloat16)
    params = {
        "body_conv1": (bf(w1), b1.reshape(1, -1)),
        "body_conv2": (bf(w2_tap), b2.reshape(1, -1)),
        "body_conv3": (bf(w3), b3.reshape(1, -1)),
    }
    raw = {"w1": w1, "b1": b1, "w2_fold_torch": w2_fold_torch, "b2": b2,
           "w3": w3, "b3": b3}

    if resize_identity:
        wi_t = nrm((out_channels, in_channels, 1, 1))
        wi, bi = _fold_bn_1x1(wi_t, *bn(out_channels))
        params["identity"] = (bf(wi), bi.reshape(1, -1))
        raw["wi"], raw["bi"] = wi, bi

    sw1 = nrm((se_mid, out_channels, 1, 1))[:, :, 0, 0].T    # (Cout, Cmid)
    sb1 = nrm((se_mid,))
    sw2 = nrm((out_channels, se_mid, 1, 1))[:, :, 0, 0].T    # (Cmid, Cout)
    sb2 = nrm((out_channels,))
    params["se"] = (sw1, sb1.reshape(1, -1), sw2, sb2.reshape(1, -1))
    return params, raw


# ----------------------------- pure-JAX reference ------------------------------

def reference_forward(x_nchw, raw, se_params, stride, cardinality):
    x = jnp.transpose(x_nchw, (0, 2, 3, 1)).astype(jnp.float32)
    sw1, sb1, sw2, sb2 = se_params

    def pw(t, w, b, relu):
        y = jnp.einsum("nhwc,co->nhwo", t, w) + b
        return jnp.maximum(y, 0.0) if relu else y

    y1 = pw(x, raw["w1"], raw["b1"], True)
    w2_hwio = jnp.transpose(raw["w2_fold_torch"], (2, 3, 1, 0))   # (3,3,Din,Cout)
    y2 = lax.conv_general_dilated(
        y1, w2_hwio, (stride, stride), ((1, 1), (1, 1)),
        dimension_numbers=("NHWC", "HWIO", "NHWC"),
        feature_group_count=cardinality) + raw["b2"]
    y2 = jnp.maximum(y2, 0.0)
    y3 = pw(y2, raw["w3"], raw["b3"], False)
    if "wi" in raw:
        ident = pw(x[:, ::stride, ::stride, :], raw["wi"], raw["bi"], False)
    else:
        ident = x
    s = jnp.mean(y3, axis=(1, 2))
    s = jnp.maximum(s @ sw1 + sb1, 0.0)
    s = jax.nn.sigmoid(s @ sw2 + sb2)
    out = jnp.maximum(y3 * s[:, None, None, :] + ident, 0.0)
    return jnp.transpose(out, (0, 3, 1, 2))


# ----------------------------------- main ---------------------------------------

if __name__ == "__main__":
    in_channels, out_channels = 16, 32
    stride, cardinality, bottleneck_width = 2, 4, 16
    N, H, W = 2, 16, 16

    key = jax.random.PRNGKey(0)
    pkey, xkey = jax.random.split(key)
    params, raw = init_params(pkey, in_channels, out_channels, stride,
                              cardinality, bottleneck_width)
    x = jax.random.normal(xkey, (N, in_channels, H, W), jnp.float32)

    fwd = jax.jit(functools.partial(se_resnext_forward, stride=stride))
    out = jax.block_until_ready(fwd(x, params))
    ref = jax.block_until_ready(
        reference_forward(x, raw, params["se"], stride, cardinality))

    assert out.shape == (N, out_channels, H // stride, W // stride), out.shape
    assert bool(jnp.all(jnp.isfinite(out)))
    max_err = float(jnp.max(jnp.abs(out - ref)))
    assert jnp.allclose(out, ref, atol=5e-2, rtol=5e-2), max_err
    print("KERNEL_OK")
</pallas_src>

<mosaic_0001>
module attributes {stable_mosaic.version = 11 : i64} {
  func.func @_fused_kernel(%arg0: i32, %arg1: memref<1x324x16xbf16, #tpu.memory_space<vmem>>, %arg2: memref<324x1xf32, #tpu.memory_space<vmem>>, %arg3: memref<71x1xf32, #tpu.memory_space<vmem>>, %arg4: memref<16x8xbf16, #tpu.memory_space<vmem>>, %arg5: memref<1x8xf32, #tpu.memory_space<vmem>>, %arg6: memref<9x8x8xbf16, #tpu.memory_space<vmem>>, %arg7: memref<1x8xf32, #tpu.memory_space<vmem>>, %arg8: memref<8x32xbf16, #tpu.memory_space<vmem>>, %arg9: memref<1x32xf32, #tpu.memory_space<vmem>>, %arg10: memref<32x2xf32, #tpu.memory_space<vmem>>, %arg11: memref<1x2xf32, #tpu.memory_space<vmem>>, %arg12: memref<2x32xf32, #tpu.memory_space<vmem>>, %arg13: memref<1x32xf32, #tpu.memory_space<vmem>>, %arg14: memref<16x32xbf16, #tpu.memory_space<vmem>>, %arg15: memref<1x32xf32, #tpu.memory_space<vmem>>, %arg16: memref<1x72x32xf32, #tpu.memory_space<vmem>>, %arg17: memref<324x8xf32, #tpu.memory_space<vmem>>) attributes {dimension_semantics = [#tpu.dimension_semantics<parallel>], iteration_bounds = array<i64: 2>, scalar_prefetch = 0 : i64, scratch_operands = 1 : i64, tpu.core_type = #tpu.core_type<tc>, window_params = [{transform_indices = @transform_0, window_bounds = array<i64: 1, 324, 16>}, {pipeline_mode = #tpu.pipeline_mode<synchronous>, transform_indices = @transform_1, window_bounds = array<i64: 324, 1>}, {pipeline_mode = #tpu.pipeline_mode<synchronous>, transform_indices = @transform_2, window_bounds = array<i64: 71, 1>}, {pipeline_mode = #tpu.pipeline_mode<synchronous>, transform_indices = @transform_3, window_bounds = array<i64: 16, 8>}, {pipeline_mode = #tpu.pipeline_mode<synchronous>, transform_indices = @transform_4, window_bounds = array<i64: 1, 8>}, {pipeline_mode = #tpu.pipeline_mode<synchronous>, transform_indices = @transform_5, window_bounds = array<i64: 9, 8, 8>}, {pipeline_mode = #tpu.pipeline_mode<synchronous>, transform_indices = @transform_6, window_bounds = array<i64: 1, 8>}, {pipeline_mode = #tpu.pipeline_mode<synchronous>, transform_indices = @transform_7, window_bounds = array<i64: 8, 32>}, {pipeline_mode = #tpu.pipeline_mode<synchronous>, transform_indices = @transform_8, window_bounds = array<i64: 1, 32>}, {pipeline_mode = #tpu.pipeline_mode<synchronous>, transform_indices = @transform_9, window_bounds = array<i64: 32, 2>}, {pipeline_mode = #tpu.pipeline_mode<synchronous>, transform_indices = @transform_10, window_bounds = array<i64: 1, 2>}, {pipeline_mode = #tpu.pipeline_mode<synchronous>, transform_indices = @transform_11, window_bounds = array<i64: 2, 32>}, {pipeline_mode = #tpu.pipeline_mode<synchronous>, transform_indices = @transform_12, window_bounds = array<i64: 1, 32>}, {pipeline_mode = #tpu.pipeline_mode<synchronous>, transform_indices = @transform_13, window_bounds = array<i64: 16, 32>}, {pipeline_mode = #tpu.pipeline_mode<synchronous>, transform_indices = @transform_14, window_bounds = array<i64: 1, 32>}, {transform_indices = @transform_15, window_bounds = array<i64: 1, 72, 32>}]} {
    %c0 = arith.constant 0 : index
    %c0_0 = arith.constant 0 : index
    %c0_1 = arith.constant 0 : index
    %0 = vector.load %arg1[%c0, %c0_0, %c0_1] : memref<1x324x16xbf16, #tpu.memory_space<vmem>>, vector<1x324x16xbf16>
    %1 = vector.shape_cast %0 : vector<1x324x16xbf16> to vector<324x16xbf16>
    %c0_2 = arith.constant 0 : index
    %c0_3 = arith.constant 0 : index
    %2 = vector.load %arg4[%c0_2, %c0_3] : memref<16x8xbf16, #tpu.memory_space<vmem>>, vector<16x8xbf16>
    %cst = arith.constant dense<0.000000e+00> : vector<324x8xf32>
    %3 = tpu.matmul %1, %2, %cst {dimension_numbers = #tpu.dot_dimension_numbers<[1], [0], [0], [1], [0, 0, 1, 1], [], []>} : vector<324x16xbf16>, vector<16x8xbf16>, vector<324x8xf32> -> vector<324x8xf32>
    %c0_4 = arith.constant 0 : index
    %c0_5 = arith.constant 0 : index
    %4 = vector.load %arg5[%c0_4, %c0_5] : memref<1x8xf32, #tpu.memory_space<vmem>>, vector<1x8xf32>
    %5 = vector.broadcast %4 : vector<1x8xf32> to vector<324x8xf32>
    %6 = arith.addf %3, %5 : vector<324x8xf32>
    %cst_6 = arith.constant 0.000000e+00 : f32
    %7 = vector.broadcast %cst_6 : f32 to vector<324x8xf32>
    %8 = arith.maximumf %6, %7 : vector<324x8xf32>
    %c0_7 = arith.constant 0 : index
    %c0_8 = arith.constant 0 : index
    %9 = vector.load %arg2[%c0_7, %c0_8] : memref<324x1xf32, #tpu.memory_space<vmem>>, vector<324x1xf32>
    %10 = vector.broadcast %9 : vector<324x1xf32> to vector<324x8xf32>
    %11 = arith.mulf %8, %10 : vector<324x8xf32>
    %c0_9 = arith.constant 0 : index
    %c0_10 = arith.constant 0 : index
    %12 = vector.load %arg17[%c0_9, %c0_10] : memref<324x8xf32, #tpu.memory_space<vmem>>, vector<324x8xf32>
    tpu.vector_store %arg17[%c0_9, %c0_10], %11 {strides = array<i32>} : memref<324x8xf32, #tpu.memory_space<vmem>>, vector<324x8xf32>,
    %c0_11 = arith.constant 0 : index
    %c0_12 = arith.constant 0 : index
    %13 = vector.load %arg17[%c0_11, %c0_12] : memref<324x8xf32, #tpu.memory_space<vmem>>, vector<71x8xf32>
    %14 = arith.truncf %13 : vector<71x8xf32> to vector<71x8xbf16>
    %c0_13 = arith.constant 0 : index
    %c0_14 = arith.constant 0 : index
    %c0_15 = arith.constant 0 : index
    %15 = vector.load %arg6[%c0_13, %c0_14, %c0_15] : memref<9x8x8xbf16, #tpu.memory_space<vmem>>, vector<1x8x8xbf16>
    %16 = vector.shape_cast %15 : vector<1x8x8xbf16> to vector<8x8xbf16>
    %cst_16 = arith.constant dense<0.000000e+00> : vector<71x8xf32>
    %17 = tpu.matmul %14, %16, %cst_16 {dimension_numbers = #tpu.dot_dimension_numbers<[1], [0], [0], [1], [0, 0, 1, 1], [], []>} : vector<71x8xbf16>, vector<8x8xbf16>, vector<71x8xf32> -> vector<71x8xf32>
    %c81 = arith.constant 81 : index
    %c0_17 = arith.constant 0 : index
    %18 = vector.load %arg17[%c81, %c0_17] : memref<324x8xf32, #tpu.memory_space<vmem>>, vector<71x8xf32>
    %19 = arith.truncf %18 : vector<71x8xf32> to vector<71x8xbf16>
    %c1 = arith.constant 1 : index
    %c0_18 = arith.constant 0 : index
    %c0_19 = arith.constant 0 : index
    %20 = vector.load %arg6[%c1, %c0_18, %c0_19] : memref<9x8x8xbf16, #tpu.memory_space<vmem>>, vector<1x8x8xbf16>
    %21 = vector.shape_cast %20 : vector<1x8x8xbf16> to vector<8x8xbf16>
    %cst_20 = arith.constant dense<0.000000e+00> : vector<71x8xf32>
    %22 = tpu.matmul %19, %21, %cst_20 {dimension_numbers = #tpu.dot_dimension_numbers<[1], [0], [0], [1], [0, 0, 1, 1], [], []>} : vector<71x8xbf16>, vector<8x8xbf16>, vector<71x8xf32> -> vector<71x8xf32>
    %23 = arith.addf %17, %22 : vector<71x8xf32>
    %c1_21 = arith.constant 1 : index
    %c0_22 = arith.constant 0 : index
    %24 = vector.load %arg17[%c1_21, %c0_22] : memref<324x8xf32, #tpu.memory_space<vmem>>, vector<71x8xf32>
    %25 = arith.truncf %24 : vector<71x8xf32> to vector<71x8xbf16>
    %c2 = arith.constant 2 : index
    %c0_23 = arith.constant 0 : index
    %c0_24 = arith.constant 0 : index
    %26 = vector.load %arg6[%c2, %c0_23, %c0_24] : memref<9x8x8xbf16, #tpu.memory_space<vmem>>, vector<1x8x8xbf16>
    %27 = vector.shape_cast %26 : vector<1x8x8xbf16> to vector<8x8xbf16>
    %cst_25 = arith.constant dense<0.000000e+00> : vector<71x8xf32>
    %28 = tpu.matmul %25, %27, %cst_25 {dimension_numbers = #tpu.dot_dimension_numbers<[1], [0], [0], [1], [0, 0, 1, 1], [], []>} : vector<71x8xbf16>, vector<8x8xbf16>, vector<71x8xf32> -> vector<71x8xf32>
    %29 = arith.addf %23, %28 : vector<71x8xf32>
    %c162 = arith.constant 162 : index
    %c0_26 = arith.constant 0 : index
    %30 = vector.load %arg17[%c162, %c0_26] : memref<324x8xf32, #tpu.memory_space<vmem>>, vector<71x8xf32>
    %31 = arith.truncf %30 : vector<71x8xf32> to vector<71x8xbf16>
    %c3 = arith.constant 3 : index
    %c0_27 = arith.constant 0 : index
    %c0_28 = arith.constant 0 : index
    %32 = vector.load %arg6[%c3, %c0_27, %c0_28] : memref<9x8x8xbf16, #tpu.memory_space<vmem>>, vector<1x8x8xbf16>
    %33 = vector.shape_cast %32 : vector<1x8x8xbf16> to vector<8x8xbf16>
    %cst_29 = arith.constant dense<0.000000e+00> : vector<71x8xf32>
    %34 = tpu.matmul %31, %33, %cst_29 {dimension_numbers = #tpu.dot_dimension_numbers<[1], [0], [0], [1], [0, 0, 1, 1], [], []>} : vector<71x8xbf16>, vector<8x8xbf16>, vector<71x8xf32> -> vector<71x8xf32>
    %35 = arith.addf %29, %34 : vector<71x8xf32>
    %c243 = arith.constant 243 : index
    %c0_30 = arith.constant 0 : index
    %36 = vector.load %arg17[%c243, %c0_30] : memref<324x8xf32, #tpu.memory_space<vmem>>, vector<71x8xf32>
    %37 = arith.truncf %36 : vector<71x8xf32> to vector<71x8xbf16>
    %c4 = arith.constant 4 : index
    %c0_31 = arith.constant 0 : index
    %c0_32 = arith.constant 0 : index
    %38 = vector.load %arg6[%c4, %c0_31, %c0_32] : memref<9x8x8xbf16, #tpu.memory_space<vmem>>, vector<1x8x8xbf16>
    %39 = vector.shape_cast %38 : vector<1x8x8xbf16> to vector<8x8xbf16>
    %cst_33 = arith.constant dense<0.000000e+00> : vector<71x8xf32>
    %40 = tpu.matmul %37, %39, %cst_33 {dimension_numbers = #tpu.dot_dimension_numbers<[1], [0], [0], [1], [0, 0, 1, 1], [], []>} : vector<71x8xbf16>, vector<8x8xbf16>, vector<71x8xf32> -> vector<71x8xf32>
    %41 = arith.addf %35, %40 : vector<71x8xf32>
    %c163 = arith.constant 163 : index
    %c0_34 = arith.constant 0 : index
    %42 = vector.load %arg17[%c163, %c0_34] : memref<324x8xf32, #tpu.memory_space<vmem>>, vector<71x8xf32>
    %43 = arith.truncf %42 : vector<71x8xf32> to vector<71x8xbf16>
    %c5 = arith.constant 5 : index
    %c0_35 = arith.constant 0 : index
    %c0_36 = arith.constant 0 : index
    %44 = vector.load %arg6[%c5, %c0_35, %c0_36] : memref<9x8x8xbf16, #tpu.memory_space<vmem>>, vector<1x8x8xbf16>
    %45 = vector.shape_cast %44 : vector<1x8x8xbf16> to vector<8x8xbf16>
    %cst_37 = arith.constant dense<0.000000e+00> : vector<71x8xf32>
    %46 = tpu.matmul %43, %45, %cst_37 {dimension_numbers = #tpu.dot_dimension_numbers<[1], [0], [0], [1], [0, 0, 1, 1], [], []>} : vector<71x8xbf16>, vector<8x8xbf16>, vector<71x8xf32> -> vector<71x8xf32>
    %47 = arith.addf %41, %46 : vector<71x8xf32>
    %c9 = arith.constant 9 : index
    %c0_38 = arith.constant 0 : index
    %48 = vector.load %arg17[%c9, %c0_38] : memref<324x8xf32, #tpu.memory_space<vmem>>, vector<71x8xf32>
    %49 = arith.truncf %48 : vector<71x8xf32> to vector<71x8xbf16>
    %c6 = arith.constant 6 : index
    %c0_39 = arith.constant 0 : index
    %c0_40 = arith.constant 0 : index
    %50 = vector.load %arg6[%c6, %c0_39, %c0_40] : memref<9x8x8xbf16, #tpu.memory_space<vmem>>, vector<1x8x8xbf16>
    %51 = vector.shape_cast %50 : vector<1x8x8xbf16> to vector<8x8xbf16>
    %cst_41 = arith.constant dense<0.000000e+00> : vector<71x8xf32>
    %52 = tpu.matmul %49, %51, %cst_41 {dimension_numbers = #tpu.dot_dimension_numbers<[1], [0], [0], [1], [0, 0, 1, 1], [], []>} : vector<71x8xbf16>, vector<8x8xbf16>, vector<71x8xf32> -> vector<71x8xf32>
    %53 = arith.addf %47, %52 : vector<71x8xf32>
    %c90 = arith.constant 90 : index
    %c0_42 = arith.constant 0 : index
    %54 = vector.load %arg17[%c90, %c0_42] : memref<324x8xf32, #tpu.memory_space<vmem>>, vector<71x8xf32>
    %55 = arith.truncf %54 : vector<71x8xf32> to vector<71x8xbf16>
    %c7 = arith.constant 7 : index
    %c0_43 = arith.constant 0 : index
    %c0_44 = arith.constant 0 : index
    %56 = vector.load %arg6[%c7, %c0_43, %c0_44] : memref<9x8x8xbf16, #tpu.memory_space<vmem>>, vector<1x8x8xbf16>
    %57 = vector.shape_cast %56 : vector<1x8x8xbf16> to vector<8x8xbf16>
    %cst_45 = arith.constant dense<0.000000e+00> : vector<71x8xf32>
    %58 = tpu.matmul %55, %57, %cst_45 {dimension_numbers = #tpu.dot_dimension_numbers<[1], [0], [0], [1], [0, 0, 1, 1], [], []>} : vector<71x8xbf16>, vector<8x8xbf16>, vector<71x8xf32> -> vector<71x8xf32>
    %59 = arith.addf %53, %58 : vector<71x8xf32>
    %c10 = arith.constant 10 : index
    %c0_46 = arith.constant 0 : index
    %60 = vector.load %arg17[%c10, %c0_46] : memref<324x8xf32, #tpu.memory_space<vmem>>, vector<71x8xf32>
    %61 = arith.truncf %60 : vector<71x8xf32> to vector<71x8xbf16>
    %c8 = arith.constant 8 : index
    %c0_47 = arith.constant 0 : index
    %c0_48 = arith.constant 0 : index
    %62 = vector.load %arg6[%c8, %c0_47, %c0_48] : memref<9x8x8xbf16, #tpu.memory_space<vmem>>, vector<1x8x8xbf16>
    %63 = vector.shape_cast %62 : vector<1x8x8xbf16> to vector<8x8xbf16>
    %cst_49 = arith.constant dense<0.000000e+00> : vector<71x8xf32>
    %64 = tpu.matmul %61, %63, %cst_49 {dimension_numbers = #tpu.dot_dimension_numbers<[1], [0], [0], [1], [0, 0, 1, 1], [], []>} : vector<71x8xbf16>, vector<8x8xbf16>, vector<71x8xf32> -> vector<71x8xf32>
    %65 = arith.addf %59, %64 : vector<71x8xf32>
    %c0_50 = arith.constant 0 : index
    %c0_51 = arith.constant 0 : index
    %66 = vector.load %arg7[%c0_50, %c0_51] : memref<1x8xf32, #tpu.memory_space<vmem>>, vector<1x8xf32>
    %67 = vector.broadcast %66 : vector<1x8xf32> to vector<71x8xf32>
    %68 = arith.addf %65, %67 : vector<71x8xf32>
    %cst_52 = arith.constant 0.000000e+00 : f32
    %69 = vector.broadcast %cst_52 : f32 to vector<71x8xf32>
    %70 = arith.maximumf %68, %69 : vector<71x8xf32>
    %71 = arith.truncf %70 : vector<71x8xf32> to vector<71x8xbf16>
    %c0_53 = arith.constant 0 : index
    %c0_54 = arith.constant 0 : index
    %72 = vector.load %arg8[%c0_53, %c0_54] : memref<8x32xbf16, #tpu.memory_space<vmem>>, vector<8x32xbf16>
    %cst_55 = arith.constant dense<0.000000e+00> : vector<71x32xf32>
    %73 = tpu.matmul %71, %72, %cst_55 {dimension_numbers = #tpu.dot_dimension_numbers<[1], [0], [0], [1], [0, 0, 1, 1], [], []>} : vector<71x8xbf16>, vector<8x32xbf16>, vector<71x32xf32> -> vector<71x32xf32>
    %c0_56 = arith.constant 0 : index
    %c0_57 = arith.constant 0 : index
    %74 = vector.load %arg9[%c0_56, %c0_57] : memref<1x32xf32, #tpu.memory_space<vmem>>, vector<1x32xf32>
    %75 = vector.broadcast %74 : vector<1x32xf32> to vector<71x32xf32>
    %76 = arith.addf %73, %75 : vector<71x32xf32>
    %c0_58 = arith.constant 0 : index
    %c0_59 = arith.constant 0 : index
    %77 = vector.load %arg3[%c0_58, %c0_59] : memref<71x1xf32, #tpu.memory_space<vmem>>, vector<71x1xf32>
    %78 = vector.broadcast %77 : vector<71x1xf32> to vector<71x32xf32>
    %79 = arith.mulf %76, %78 : vector<71x32xf32>
    %cst_60 = arith.constant dense<0.000000e+00> : vector<32xf32>
    %80 = vector.multi_reduction <add>, %79, %cst_60 [0] : vector<71x32xf32> to vector<32xf32>
    %81 = vector.shape_cast %80 : vector<32xf32> to vector<1x32xf32>
    %cst_61 = arith.constant 1.562500e-02 : f32
    %82 = vector.broadcast %cst_61 : f32 to vector<1x32xf32>
    %83 = arith.mulf %81, %82 : vector<1x32xf32>
    %c0_62 = arith.constant 0 : index
    %c0_63 = arith.constant 0 : index
    %84 = vector.load %arg10[%c0_62, %c0_63] : memref<32x2xf32, #tpu.memory_space<vmem>>, vector<32x2xf32>
    %cst_64 = arith.constant dense<0.000000e+00> : vector<1x2xf32>
    %85 = tpu.matmul %83, %84, %cst_64 {dimension_numbers = #tpu.dot_dimension_numbers<[1], [0], [0], [1], [0, 0, 1, 1], [], []>} : vector<1x32xf32>, vector<32x2xf32>, vector<1x2xf32> -> vector<1x2xf32>
    %c0_65 = arith.constant 0 : index
    %c0_66 = arith.constant 0 : index
    %86 = vector.load %arg11[%c0_65, %c0_66] : memref<1x2xf32, #tpu.memory_space<vmem>>, vector<1x2xf32>
    %87 = arith.addf %85, %86 : vector<1x2xf32>
    %cst_67 = arith.constant 0.000000e+00 : f32
    %88 = vector.broadcast %cst_67 : f32 to vector<1x2xf32>
    %89 = arith.maximumf %87, %88 : vector<1x2xf32>
    %c0_68 = arith.constant 0 : index
    %c0_69 = arith.constant 0 : index
    %90 = vector.load %arg12[%c0_68, %c0_69] : memref<2x32xf32, #tpu.memory_space<vmem>>, vector<2x32xf32>
    %cst_70 = arith.constant dense<0.000000e+00> : vector<1x32xf32>
    %91 = tpu.matmul %89, %90, %cst_70 {dimension_numbers = #tpu.dot_dimension_numbers<[1], [0], [0], [1], [0, 0, 1, 1], [], []>} : vector<1x2xf32>, vector<2x32xf32>, vector<1x32xf32> -> vector<1x32xf32>
    %c0_71 = arith.constant 0 : index
    %c0_72 = arith.constant 0 : index
    %92 = vector.load %arg13[%c0_71, %c0_72] : memref<1x32xf32, #tpu.memory_space<vmem>>, vector<1x32xf32>
    %93 = arith.addf %91, %92 : vector<1x32xf32>
    %94 = arith.negf %93 : vector<1x32xf32>
    %95 = math.exp %94 : vector<1x32xf32>
    %cst_73 = arith.constant 1.000000e+00 : f32
    %96 = vector.broadcast %cst_73 : f32 to vector<1x32xf32>
    %97 = arith.addf %96, %95 : vector<1x32xf32>
    %98 = arith.divf %96, %97 : vector<1x32xf32>
    %c0_74 = arith.constant 0 : index
    %c243_75 = arith.constant 243 : index
    %c0_76 = arith.constant 0 : index
    %99 = vector.load %arg1[%c0_74, %c243_75, %c0_76] : memref<1x324x16xbf16, #tpu.memory_space<vmem>>, vector<1x71x16xbf16>
    %100 = vector.shape_cast %99 : vector<1x71x16xbf16> to vector<71x16xbf16>
    %c0_77 = arith.constant 0 : index
    %c0_78 = arith.constant 0 : index
    %101 = vector.load %arg14[%c0_77, %c0_78] : memref<16x32xbf16, #tpu.memory_space<vmem>>, vector<16x32xbf16>
    %cst_79 = arith.constant dense<0.000000e+00> : vector<71x32xf32>
    %102 = tpu.matmul %100, %101, %cst_79 {dimension_numbers = #tpu.dot_dimension_numbers<[1], [0], [0], [1], [0, 0, 1, 1], [], []>} : vector<71x16xbf16>, vector<16x32xbf16>, vector<71x32xf32> -> vector<71x32xf32>
    %c0_80 = arith.constant 0 : index
    %c0_81 = arith.constant 0 : index
    %103 = vector.load %arg15[%c0_80, %c0_81] : memref<1x32xf32, #tpu.memory_space<vmem>>, vector<1x32xf32>
    %104 = vector.broadcast %103 : vector<1x32xf32> to vector<71x32xf32>
    %105 = arith.addf %102, %104 : vector<71x32xf32>
    %106 = vector.broadcast %98 : vector<1x32xf32> to vector<71x32xf32>
    %107 = arith.mulf %76, %106 : vector<71x32xf32>
    %108 = arith.addf %107, %105 : vector<71x32xf32>
    %cst_82 = arith.constant 0.000000e+00 : f32
    %109 = vector.broadcast %cst_82 : f32 to vector<71x32xf32>
    %110 = arith.maximumf %108, %109 : vector<71x32xf32>
    %c0_83 = arith.constant 0 : index
    %c0_84 = arith.constant 0 : index
    %c0_85 = arith.constant 0 : index
    %111 = vector.load %arg16[%c0_83, %c0_84, %c0_85] : memref<1x72x32xf32, #tpu.memory_space<vmem>>, vector<1x71x32xf32>
    %112 = vector.shape_cast %111 : vector<1x71x32xf32> to vector<71x32xf32>
    %113 = vector.shape_cast %110 : vector<71x32xf32> to vector<1x71x32xf32>
    tpu.vector_store %arg16[%c0_83, %c0_84, %c0_85], %113 {strides = array<i32>} : memref<1x72x32xf32, #tpu.memory_space<vmem>>, vector<1x71x32xf32>,
    %cst_86 = arith.constant 0.000000e+00 : f32
    %114 = vector.broadcast %cst_86 : f32 to vector<1x32xf32>
    %c0_87 = arith.constant 0 : index
    %c71 = arith.constant 71 : index
    %c0_88 = arith.constant 0 : index
    %115 = vector.load %arg16[%c0_87, %c71, %c0_88] : memref<1x72x32xf32, #tpu.memory_space<vmem>>, vector<1x1x32xf32>
    %116 = vector.shape_cast %115 : vector<1x1x32xf32> to vector<1x32xf32>
    %117 = vector.shape_cast %114 : vector<1x32xf32> to vector<1x1x32xf32>
    tpu.vector_store %arg16[%c0_87, %c71, %c0_88], %117 {strides = array<i32>} : memref<1x72x32xf32, #tpu.memory_space<vmem>>, vector<1x1x32xf32>,
    return
  }
  func.func @transform_0(%arg0: i32) -> (i32, i32, i32) {
    %c0_i32 = arith.constant 0 : i32
    %c0_i32_0 = arith.constant 0 : i32
    %c0_i32_1 = arith.constant 0 : i32
    return %arg0, %c0_i32, %c0_i32_0 : i32, i32, i32
  }
  func.func @transform_1(%arg0: i32) -> (i32, i32) {
    %c0_i32 = arith.constant 0 : i32
    %c0_i32_0 = arith.constant 0 : i32
    %c0_i32_1 = arith.constant 0 : i32
    return %c0_i32, %c0_i32_0 : i32, i32
  }
  func.func @transform_2(%arg0: i32) -> (i32, i32) {
    %c0_i32 = arith.constant 0 : i32
    %c0_i32_0 = arith.constant 0 : i32
    %c0_i32_1 = arith.constant 0 : i32
    return %c0_i32, %c0_i32_0 : i32, i32
  }
  func.func @transform_3(%arg0: i32) -> (i32, i32) {
    %c0_i32 = arith.constant 0 : i32
    %c0_i32_0 = arith.constant 0 : i32
    %c0_i32_1 = arith.constant 0 : i32
    return %c0_i32, %c0_i32_0 : i32, i32
  }
  func.func @transform_4(%arg0: i32) -> (i32, i32) {
    %c0_i32 = arith.constant 0 : i32
    %c0_i32_0 = arith.constant 0 : i32
    %c0_i32_1 = arith.constant 0 : i32
    return %c0_i32, %c0_i32_0 : i32, i32
  }
  func.func @transform_5(%arg0: i32) -> (i32, i32, i32) {
    %c0_i32 = arith.constant 0 : i32
    %c0_i32_0 = arith.constant 0 : i32
    %c0_i32_1 = arith.constant 0 : i32
    %c0_i32_2 = arith.constant 0 : i32
    return %c0_i32, %c0_i32_0, %c0_i32_1 : i32, i32, i32
  }
  func.func @transform_6(%arg0: i32) -> (i32, i32) {
    %c0_i32 = arith.constant 0 : i32
    %c0_i32_0 = arith.constant 0 : i32
    %c0_i32_1 = arith.constant 0 : i32
    return %c0_i32, %c0_i32_0 : i32, i32
  }
  func.func @transform_7(%arg0: i32) -> (i32, i32) {
    %c0_i32 = arith.constant 0 : i32
    %c0_i32_0 = arith.constant 0 : i32
    %c0_i32_1 = arith.constant 0 : i32
    return %c0_i32, %c0_i32_0 : i32, i32
  }
  func.func @transform_8(%arg0: i32) -> (i32, i32) {
    %c0_i32 = arith.constant 0 : i32
    %c0_i32_0 = arith.constant 0 : i32
    %c0_i32_1 = arith.constant 0 : i32
    return %c0_i32, %c0_i32_0 : i32, i32
  }
  func.func @transform_9(%arg0: i32) -> (i32, i32) {
    %c0_i32 = arith.constant 0 : i32
    %c0_i32_0 = arith.constant 0 : i32
    %c0_i32_1 = arith.constant 0 : i32
    return %c0_i32, %c0_i32_0 : i32, i32
  }
  func.func @transform_10(%arg0: i32) -> (i32, i32) {
    %c0_i32 = arith.constant 0 : i32
    %c0_i32_0 = arith.constant 0 : i32
    %c0_i32_1 = arith.constant 0 : i32
    return %c0_i32, %c0_i32_0 : i32, i32
  }
  func.func @transform_11(%arg0: i32) -> (i32, i32) {
    %c0_i32 = arith.constant 0 : i32
    %c0_i32_0 = arith.constant 0 : i32
    %c0_i32_1 = arith.constant 0 : i32
    return %c0_i32, %c0_i32_0 : i32, i32
  }
  func.func @transform_12(%arg0: i32) -> (i32, i32) {
    %c0_i32 = arith.constant 0 : i32
    %c0_i32_0 = arith.constant 0 : i32
    %c0_i32_1 = arith.constant 0 : i32
    return %c0_i32, %c0_i32_0 : i32, i32
  }
  func.func @transform_13(%arg0: i32) -> (i32, i32) {
    %c0_i32 = arith.constant 0 : i32
    %c0_i32_0 = arith.constant 0 : i32
    %c0_i32_1 = arith.constant 0 : i32
    return %c0_i32, %c0_i32_0 : i32, i32
  }
  func.func @transform_14(%arg0: i32) -> (i32, i32) {
    %c0_i32 = arith.constant 0 : i32
    %c0_i32_0 = arith.constant 0 : i32
    %c0_i32_1 = arith.constant 0 : i32
    return %c0_i32, %c0_i32_0 : i32, i32
  }
  func.func @transform_15(%arg0: i32) -> (i32, i32, i32) {
    %c0_i32 = arith.constant 0 : i32
    %c0_i32_0 = arith.constant 0 : i32
    %c0_i32_1 = arith.constant 0 : i32
    return %arg0, %c0_i32, %c0_i32_0 : i32, i32, i32
  }
}

</mosaic_0001>

<llo_original>
// kernel: se_resnext_forward.1
$region0: #{se_resnext_forward.1}
  #allocation0 [shape = 'u32[]', space=smem, size = 0x4, offset = 0x4, fixed_abs, tag = 'smem constant byte address 0x4 - core index']
  #allocation1 [shape = 'u32[144,128]{1,0:T(1,128)}', space=vmem, size = 0x12000, scoped, tag = 'internal scratch']
  #allocation2 [shape = 'f32[324,8]{1,0:T(8,128)}', space=vmem, size = 0x29000, scoped, tag = 'scratch operand']
  %s0 = inlined_call_operand.vmem [shape: bf16[2,324,16], index: 0, kind: input, shape index: {}]
  %s1 = inlined_call_operand.vmem [shape: f32[324,1], index: 1, kind: input, shape index: {}]
  %s2 = inlined_call_operand.vmem [shape: f32[71,1], index: 2, kind: input, shape index: {}]
  %s3 = inlined_call_operand.vmem [shape: bf16[16,8], index: 3, kind: input, shape index: {}]
  %s4 = inlined_call_operand.vmem [shape: f32[1,8], index: 4, kind: input, shape index: {}]
  %s5 = inlined_call_operand.vmem [shape: bf16[9,8,8], index: 5, kind: input, shape index: {}]
  %s6 = inlined_call_operand.vmem [shape: f32[1,8], index: 6, kind: input, shape index: {}]
  %s7 = inlined_call_operand.vmem [shape: bf16[8,32], index: 7, kind: input, shape index: {}]
  %s8 = inlined_call_operand.vmem [shape: f32[1,32], index: 8, kind: input, shape index: {}]
  %s9 = inlined_call_operand.vmem [shape: f32[32,2], index: 9, kind: input, shape index: {}]
  %s10 = inlined_call_operand.vmem [shape: f32[1,2], index: 10, kind: input, shape index: {}]
  %s11 = inlined_call_operand.vmem [shape: f32[2,32], index: 11, kind: input, shape index: {}]
  %s12 = inlined_call_operand.vmem [shape: f32[1,32], index: 12, kind: input, shape index: {}]
  %s13 = inlined_call_operand.vmem [shape: bf16[16,32], index: 13, kind: input, shape index: {}]
  %s14 = inlined_call_operand.vmem [shape: f32[1,32], index: 14, kind: input, shape index: {}]
  %s15 = inlined_call_operand.vmem [shape: f32[2,72,32], index: 15, kind: output, shape index: {}]
  %s16 = sld [smem:[#allocation0]]
  $region93: #{se_resnext_forward.1} parent=0
    _
  %s18 = ssub.s32 1, %s16
  %s19 = scalar_select 0, %s18, %s16
  loop: start=0, step=1, limit=4
  $region2: #{se_resnext_forward.1} parent=0 // loop_pre_header
    _
  $region3: #{se_resnext_forward.1} parent=0 // loop_header
    %s21 = sphi 0, %s25
    %p22 = scmp.ge.s32.totalorder %s21, 4
    %s31 = sphi 0, %s33
    %s34 = sphi 0, %s31
    %s35 = sphi 0, %s34
    %s51 = sphi 0, %s35
    %s55 = sphi 0, %s55
    %s57 = sphi 0, %s55
    %s58 = sphi 0, %s57
    %s72 = sphi 0, %s58
    %s76 = sphi 0, %s76
    %s78 = sphi 0, %s76
    %s79 = sphi 0, %s78
    %s93 = sphi 0, %s79
    %s97 = sphi 0, %s97
    %s99 = sphi 0, %s97
    %s100 = sphi 0, %s99
    %s114 = sphi 0, %s100
    %s118 = sphi 0, %s118
    %s120 = sphi 0, %s118
    %s121 = sphi 0, %s120
    %s135 = sphi 0, %s121
    %s139 = sphi 0, %s139
    %s141 = sphi 0, %s139
    %s142 = sphi 0, %s141
    %s156 = sphi 0, %s142
    %s160 = sphi 0, %s160
    %s162 = sphi 0, %s160
    %s163 = sphi 0, %s162
    %s177 = sphi 0, %s163
    %s181 = sphi 0, %s181
    %s183 = sphi 0, %s181
    %s184 = sphi 0, %s183
    %s198 = sphi 0, %s184
    %s202 = sphi 0, %s202
    %s204 = sphi 0, %s202
    %s205 = sphi 0, %s204
    %s219 = sphi 0, %s205
    %s223 = sphi 0, %s223
    %s225 = sphi 0, %s223
    %s226 = sphi 0, %s225
    %s240 = sphi 0, %s226
    %s244 = sphi 0, %s244
    %s246 = sphi 0, %s244
    %s247 = sphi 0, %s246
    %s261 = sphi 0, %s247
    %s265 = sphi 0, %s265
    %s267 = sphi 0, %s265
    %s268 = sphi 0, %s267
    %s282 = sphi 0, %s268
    %s286 = sphi 0, %s286
    %s288 = sphi 0, %s286
    %s289 = sphi 0, %s288
    %s303 = sphi 0, %s289
    %s307 = sphi 0, %s307
    %s309 = sphi 0, %s307
    %s310 = sphi 0, %s309
    %s324 = sphi 0, %s310
    %s328 = sphi 0, %s328
    %s330 = sphi 0, %s328
    %s331 = sphi 0, %s330
    %s345 = sphi 0, %s331
    %s351 = sphi 0, %s353
    %s354 = sphi 0, %s351
    %s355 = sphi 0, %s354
    %s371 = sphi 0, %s355
  $region4: #{se_resnext_forward.1} parent=0 // loop_header_branch
    %24 = sbr.rel (%p22) target = $region8
  $region5: #{se_resnext_forward.1} parent=0 // loop_body
    %s26 = ssub.s32 %s21, 1
    %s27 = ssub.s32 %s21, 2
    %s28 = sadd.s32 %s21, 1
    %s29 = ssub.s32 %s21, %s28
    %p30 = scmp.eq.s32.totalorder %s29, 0
    %s32 = sadd.s32 %s31, 1
    %s33 = scalar_select %p30, %s31, %s32
    %p36 = pneg %p30
    %p37 = scmp.eq.s32.totalorder %s21, 1
    %p38 = por %p36, %p37
    %p39 = scmp.ne.s32.totalorder %s31, %s34
    %p40 = scmp.eq.s32.totalorder %s21, 0
    %p41 = por %p39, %p40
    %p42 = scmp.ne.s32.totalorder %s31, %s34
    %p43 = scmp.eq.s32.totalorder %s26, 1
    %p44 = por %p42, %p43
    %p45 = scmp.ne.s32.totalorder %s34, %s35
    %p46 = scmp.eq.s32.totalorder %s26, 0
    %p47 = por %p45, %p46
    %p48 = scmp.ne.s32.totalorder %s34, %s35
    %p49 = scmp.eq.s32.totalorder %s27, 1
    %p50 = por %p48, %p49
    %p52 = scmp.ne.s32.totalorder %s35, %s51
    %p53 = scmp.eq.s32.totalorder %s27, 0
    %p54 = por %p52, %p53
    %s56 = sadd.s32 %s55, 1
    %p59 = scmp.eq.s32.totalorder %s21, 1
    %p60 = scmp.ne.s32.totalorder %s55, %s57
    %p61 = scmp.eq.s32.totalorder %s21, 0
    %p62 = por %p60, %p61
    %p63 = scmp.ne.s32.totalorder %s55, %s57
    %p64 = scmp.eq.s32.totalorder %s26, 1
    %p65 = por %p63, %p64
    %p66 = scmp.ne.s32.totalorder %s57, %s58
    %p67 = scmp.eq.s32.totalorder %s26, 0
    %p68 = por %p66, %p67
    %p69 = scmp.ne.s32.totalorder %s57, %s58
    %p70 = scmp.eq.s32.totalorder %s27, 1
    %p71 = por %p69, %p70
    %p73 = scmp.ne.s32.totalorder %s58, %s72
    %p74 = scmp.eq.s32.totalorder %s27, 0
    %p75 = por %p73, %p74
    %s77 = sadd.s32 %s76, 1
    %p80 = scmp.eq.s32.totalorder %s21, 1
    %p81 = scmp.ne.s32.totalorder %s76, %s78
    %p82 = scmp.eq.s32.totalorder %s21, 0
    %p83 = por %p81, %p82
    %p84 = scmp.ne.s32.totalorder %s76, %s78
    %p85 = scmp.eq.s32.totalorder %s26, 1
    %p86 = por %p84, %p85
    %p87 = scmp.ne.s32.totalorder %s78, %s79
    %p88 = scmp.eq.s32.totalorder %s26, 0
    %p89 = por %p87, %p88
    %p90 = scmp.ne.s32.totalorder %s78, %s79
    %p91 = scmp.eq.s32.totalorder %s27, 1
    %p92 = por %p90, %p91
    %p94 = scmp.ne.s32.totalorder %s79, %s93
    %p95 = scmp.eq.s32.totalorder %s27, 0
    %p96 = por %p94, %p95
    %s98 = sadd.s32 %s97, 1
    %p101 = scmp.eq.s32.totalorder %s21, 1
    %p102 = scmp.ne.s32.totalorder %s97, %s99
    %p103 = scmp.eq.s32.totalorder %s21, 0
    %p104 = por %p102, %p103
    %p105 = scmp.ne.s32.totalorder %s97, %s99
    %p106 = scmp.eq.s32.totalorder %s26, 1
    %p107 = por %p105, %p106
    %p108 = scmp.ne.s32.totalorder %s99, %s100
    %p109 = scmp.eq.s32.totalorder %s26, 0
    %p110 = por %p108, %p109
    %p111 = scmp.ne.s32.totalorder %s99, %s100
    %p112 = scmp.eq.s32.totalorder %s27, 1
    %p113 = por %p111, %p112
    %p115 = scmp.ne.s32.totalorder %s100, %s114
    %p116 = scmp.eq.s32.totalorder %s27, 0
    %p117 = por %p115, %p116
    %s119 = sadd.s32 %s118, 1
    %p122 = scmp.eq.s32.totalorder %s21, 1
    %p123 = scmp.ne.s32.totalorder %s118, %s120
    %p124 = scmp.eq.s32.totalorder %s21, 0
    %p125 = por %p123, %p124
    %p126 = scmp.ne.s32.totalorder %s118, %s120
    %p127 = scmp.eq.s32.totalorder %s26, 1
    %p128 = por %p126, %p127
    %p129 = scmp.ne.s32.totalorder %s120, %s121
    %p130 = scmp.eq.s32.totalorder %s26, 0
    %p131 = por %p129, %p130
    %p132 = scmp.ne.s32.totalorder %s120, %s121
    %p133 = scmp.eq.s32.totalorder %s27, 1
    %p134 = por %p132, %p133
    %p136 = scmp.ne.s32.totalorder %s121, %s135
    %p137 = scmp.eq.s32.totalorder %s27, 0
    %p138 = por %p136, %p137
    %s140 = sadd.s32 %s139, 1
    %p143 = scmp.eq.s32.totalorder %s21, 1
    %p144 = scmp.ne.s32.totalorder %s139, %s141
    %p145 = scmp.eq.s32.totalorder %s21, 0
    %p146 = por %p144, %p145
    %p147 = scmp.ne.s32.totalorder %s139, %s141
    %p148 = scmp.eq.s32.totalorder %s26, 1
    %p149 = por %p147, %p148
    %p150 = scmp.ne.s32.totalorder %s141, %s142
    %p151 = scmp.eq.s32.totalorder %s26, 0
    %p152 = por %p150, %p151
    %p153 = scmp.ne.s32.totalorder %s141, %s142
    %p154 = scmp.eq.s32.totalorder %s27, 1
    %p155 = por %p153, %p154
    %p157 = scmp.ne.s32.totalorder %s142, %s156
    %p158 = scmp.eq.s32.totalorder %s27, 0
    %p159 = por %p157, %p158
    %s161 = sadd.s32 %s160, 1
    %p164 = scmp.eq.s32.totalorder %s21, 1
    %p165 = scmp.ne.s32.totalorder %s160, %s162
    %p166 = scmp.eq.s32.totalorder %s21, 0
    %p167 = por %p165, %p166
    %p168 = scmp.ne.s32.totalorder %s160, %s162
    %p169 = scmp.eq.s32.totalorder %s26, 1
    %p170 = por %p168, %p169
    %p171 = scmp.ne.s32.totalorder %s162, %s163
    %p172 = scmp.eq.s32.totalorder %s26, 0
    %p173 = por %p171, %p172
    %p174 = scmp.ne.s32.totalorder %s162, %s163
    %p175 = scmp.eq.s32.totalorder %s27, 1
    %p176 = por %p174, %p175
    %p178 = scmp.ne.s32.totalorder %s163, %s177
    %p179 = scmp.eq.s32.totalorder %s27, 0
    %p180 = por %p178, %p179
    %s182 = sadd.s32 %s181, 1
    %p185 = scmp.eq.s32.totalorder %s21, 1
    %p186 = scmp.ne.s32.totalorder %s181, %s183
    %p187 = scmp.eq.s32.totalorder %s21, 0
    %p188 = por %p186, %p187
    %p189 = scmp.ne.s32.totalorder %s181, %s183
    %p190 = scmp.eq.s32.totalorder %s26, 1
    %p191 = por %p189, %p190
    %p192 = scmp.ne.s32.totalorder %s183, %s184
    %p193 = scmp.eq.s32.totalorder %s26, 0
    %p194 = por %p192, %p193
    %p195 = scmp.ne.s32.totalorder %s183, %s184
    %p196 = scmp.eq.s32.totalorder %s27, 1
    %p197 = por %p195, %p196
    %p199 = scmp.ne.s32.totalorder %s184, %s198
    %p200 = scmp.eq.s32.totalorder %s27, 0
    %p201 = por %p199, %p200
    %s203 = sadd.s32 %s202, 1
    %p206 = scmp.eq.s32.totalorder %s21, 1
    %p207 = scmp.ne.s32.totalorder %s202, %s204
    %p208 = scmp.eq.s32.totalorder %s21, 0
    %p209 = por %p207, %p208
    %p210 = scmp.ne.s32.totalorder %s202, %s204
    %p211 = scmp.eq.s32.totalorder %s26, 1
    %p212 = por %p210, %p211
    %p213 = scmp.ne.s32.totalorder %s204, %s205
    %p214 = scmp.eq.s32.totalorder %s26, 0
    %p215 = por %p213, %p214
    %p216 = scmp.ne.s32.totalorder %s204, %s205
    %p217 = scmp.eq.s32.totalorder %s27, 1
    %p218 = por %p216, %p217
    %p220 = scmp.ne.s32.totalorder %s205, %s219
    %p221 = scmp.eq.s32.totalorder %s27, 0
    %p222 = por %p220, %p221
    %s224 = sadd.s32 %s223, 1
    %p227 = scmp.eq.s32.totalorder %s21, 1
    %p228 = scmp.ne.s32.totalorder %s223, %s225
    %p229 = scmp.eq.s32.totalorder %s21, 0
    %p230 = por %p228, %p229
    %p231 = scmp.ne.s32.totalorder %s223, %s225
    %p232 = scmp.eq.s32.totalorder %s26, 1
    %p233 = por %p231, %p232
    %p234 = scmp.ne.s32.totalorder %s225, %s226
    %p235 = scmp.eq.s32.totalorder %s26, 0
    %p236 = por %p234, %p235
    %p237 = scmp.ne.s32.totalorder %s225, %s226
    %p238 = scmp.eq.s32.totalorder %s27, 1
    %p239 = por %p237, %p238
    %p241 = scmp.ne.s32.totalorder %s226, %s240
    %p242 = scmp.eq.s32.totalorder %s27, 0
    %p243 = por %p241, %p242
    %s245 = sadd.s32 %s244, 1
    %p248 = scmp.eq.s32.totalorder %s21, 1
    %p249 = scmp.ne.s32.totalorder %s244, %s246
    %p250 = scmp.eq.s32.totalorder %s21, 0
    %p251 = por %p249, %p250
    %p252 = scmp.ne.s32.totalorder %s244, %s246
    %p253 = scmp.eq.s32.totalorder %s26, 1
    %p254 = por %p252, %p253
    %p255 = scmp.ne.s32.totalorder %s246, %s247
    %p256 = scmp.eq.s32.totalorder %s26, 0
    %p257 = por %p255, %p256
    %p258 = scmp.ne.s32.totalorder %s246, %s247
    %p259 = scmp.eq.s32.totalorder %s27, 1
    %p260 = por %p258, %p259
    %p262 = scmp.ne.s32.totalorder %s247, %s261
    %p263 = scmp.eq.s32.totalorder %s27, 0
    %p264 = por %p262, %p263
    %s266 = sadd.s32 %s265, 1
    %p269 = scmp.eq.s32.totalorder %s21, 1
    %p270 = scmp.ne.s32.totalorder %s265, %s267
    %p271 = scmp.eq.s32.totalorder %s21, 0
    %p272 = por %p270, %p271
    %p273 = scmp.ne.s32.totalorder %s265, %s267
    %p274 = scmp.eq.s32.totalorder %s26, 1
    %p275 = por %p273, %p274
    %p276 = scmp.ne.s32.totalorder %s267, %s268
    %p277 = scmp.eq.s32.totalorder %s26, 0
    %p278 = por %p276, %p277
    %p279 = scmp.ne.s32.totalorder %s267, %s268
    %p280 = scmp.eq.s32.totalorder %s27, 1
    %p281 = por %p279, %p280
    %p283 = scmp.ne.s32.totalorder %s268, %s282
    %p284 = scmp.eq.s32.totalorder %s27, 0
    %p285 = por %p283, %p284
    %s287 = sadd.s32 %s286, 1
    %p290 = scmp.eq.s32.totalorder %s21, 1
    %p291 = scmp.ne.s32.totalorder %s286, %s288
    %p292 = scmp.eq.s32.totalorder %s21, 0
    %p293 = por %p291, %p292
    %p294 = scmp.ne.s32.totalorder %s286, %s288
    %p295 = scmp.eq.s32.totalorder %s26, 1
    %p296 = por %p294, %p295
    %p297 = scmp.ne.s32.totalorder %s288, %s289
    %p298 = scmp.eq.s32.totalorder %s26, 0
    %p299 = por %p297, %p298
    %p300 = scmp.ne.s32.totalorder %s288, %s289
    %p301 = scmp.eq.s32.totalorder %s27, 1
    %p302 = por %p300, %p301
    %p304 = scmp.ne.s32.totalorder %s289, %s303
    %p305 = scmp.eq.s32.totalorder %s27, 0
    %p306 = por %p304, %p305
    %s308 = sadd.s32 %s307, 1
    %p311 = scmp.eq.s32.totalorder %s21, 1
    %p312 = scmp.ne.s32.totalorder %s307, %s309
    %p313 = scmp.eq.s32.totalorder %s21, 0
    %p314 = por %p312, %p313
    %p315 = scmp.ne.s32.totalorder %s307, %s309
    %p316 = scmp.eq.s32.totalorder %s26, 1
    %p317 = por %p315, %p316
    %p318 = scmp.ne.s32.totalorder %s309, %s310
    %p319 = scmp.eq.s32.totalorder %s26, 0
    %p320 = por %p318, %p319
    %p321 = scmp.ne.s32.totalorder %s309, %s310
    %p322 = scmp.eq.s32.totalorder %s27, 1
    %p323 = por %p321, %p322
    %p325 = scmp.ne.s32.totalorder %s310, %s324
    %p326 = scmp.eq.s32.totalorder %s27, 0
    %p327 = por %p325, %p326
    %s329 = sadd.s32 %s328, 1
    %p332 = scmp.eq.s32.totalorder %s21, 1
    %p333 = scmp.ne.s32.totalorder %s328, %s330
    %p334 = scmp.eq.s32.totalorder %s21, 0
    %p335 = por %p333, %p334
    %p336 = scmp.ne.s32.totalorder %s328, %s330
    %p337 = scmp.eq.s32.totalorder %s26, 1
    %p338 = por %p336, %p337
    %p339 = scmp.ne.s32.totalorder %s330, %s331
    %p340 = scmp.eq.s32.totalorder %s26, 0
    %p341 = por %p339, %p340
    %p342 = scmp.ne.s32.totalorder %s330, %s331
    %p343 = scmp.eq.s32.totalorder %s27, 1
    %p344 = por %p342, %p343
    %p346 = scmp.ne.s32.totalorder %s331, %s345
    %p347 = scmp.eq.s32.totalorder %s27, 0
    %p348 = por %p346, %p347
    %s349 = ssub.s32 %s21, %s28
    %p350 = scmp.eq.s32.totalorder %s349, 0
    %s352 = sadd.s32 %s351, 1
    %s353 = scalar_select %p350, %s351, %s352
    %p356 = pneg %p350
    %p357 = scmp.eq.s32.totalorder %s21, 1
    %p358 = por %p356, %p357
    %p359 = scmp.ne.s32.totalorder %s351, %s354
    %p360 = scmp.eq.s32.totalorder %s21, 0
    %p361 = por %p359, %p360
    %p362 = scmp.ne.s32.totalorder %s351, %s354
    %p363 = scmp.eq.s32.totalorder %s26, 1
    %p364 = por %p362, %p363
    %p365 = scmp.ne.s32.totalorder %s354, %s355
    %p366 = scmp.eq.s32.totalorder %s26, 0
    %p367 = por %p365, %p366
    %p368 = scmp.ne.s32.totalorder %s354, %s355
    %p369 = scmp.eq.s32.totalorder %s27, 1
    %p370 = por %p368, %p369
    %p372 = scmp.ne.s32.totalorder %s355, %s371
    %p373 = scmp.eq.s32.totalorder %s27, 0
    %p374 = por %p372, %p373
    %p375 = scmp.le.s32.totalorder 1, %s21
    %p376 = scmp.lt.s32.totalorder %s21, 3
    %p377 = pnand %p375, %p376
    %p378 = pneg %p377
    // Predicated region
    $region9: #{se_resnext_forward.1} parent=5 // pred_check
      _
    $region10: #{se_resnext_forward.1} parent=5 // pred_check_branch
      %380 = sbr.rel (%p377) target = $region12
    $region11: #{se_resnext_forward.1} parent=5 // pred_region
      %s381 = ssub.s32 %s21, 1
      // Predicated region
      $region13: #{se_resnext_forward.1} parent=11 // pred_check
        %p382 = pneg %p68
      $region14: #{se_resnext_forward.1} parent=11 // pred_check_branch
        %384 = sbr.rel (%p382) target = $region16
      $region15: #{se_resnext_forward.1} parent=11 // pred_region
        _
      $region16: #{se_resnext_forward.1} parent=11 // pred_fallthru
        _
      // Predicated region
      $region17: #{se_resnext_forward.1} parent=11 // pred_check
        %p385 = pneg %p89
      $region18: #{se_resnext_forward.1} parent=11 // pred_check_branch
        %387 = sbr.rel (%p385) target = $region20
      $region19: #{se_resnext_forward.1} parent=11 // pred_region
        _
      $region20: #{se_resnext_forward.1} parent=11 // pred_fallthru
        _
      // Predicated region
      $region21: #{se_resnext_forward.1} parent=11 // pred_check
        %p388 = pneg %p110
      $region22: #{se_resnext_forward.1} parent=11 // pred_check_branch
        %390 = sbr.rel (%p388) target = $region24
      $region23: #{se_resnext_forward.1} parent=11 // pred_region
        _
      $region24: #{se_resnext_forward.1} parent=11 // pred_fallthru
        _
      // Predicated region
      $region25: #{se_resnext_forward.1} parent=11 // pred_check
        %p391 = pneg %p131
      $region26: #{se_resnext_forward.1} parent=11 // pred_check_branch
        %393 = sbr.rel (%p391) target = $region28
      $region27: #{se_resnext_forward.1} parent=11 // pred_region
        _
      $region28: #{se_resnext_forward.1} parent=11 // pred_fallthru
        _
      // Predicated region
      $region29: #{se_resnext_forward.1} parent=11 // pred_check
        %p394 = pneg %p152
      $region30: #{se_resnext_forward.1} parent=11 // pred_check_branch
        %396 = sbr.rel (%p394) target = $region32
      $region31: #{se_resnext_forward.1} parent=11 // pred_region
        _
      $region32: #{se_resnext_forward.1} parent=11 // pred_fallthru
        _
      // Predicated region
      $region33: #{se_resnext_forward.1} parent=11 // pred_check
        %p397 = pneg %p173
      $region34: #{se_resnext_forward.1} parent=11 // pred_check_branch
        %399 = sbr.rel (%p397) target = $region36
      $region35: #{se_resnext_forward.1} parent=11 // pred_region
        _
      $region36: #{se_resnext_forward.1} parent=11 // pred_fallthru
        _
      // Predicated region
      $region37: #{se_resnext_forward.1} parent=11 // pred_check
        %p400 = pneg %p194
      $region38: #{se_resnext_forward.1} parent=11 // pred_check_branch
        %402 = sbr.rel (%p400) target = $region40
      $region39: #{se_resnext_forward.1} parent=11 // pred_region
        _
      $region40: #{se_resnext_forward.1} parent=11 // pred_fallthru
        _
      // Predicated region
      $region41: #{se_resnext_forward.1} parent=11 // pred_check
        %p403 = pneg %p215
      $region42: #{se_resnext_forward.1} parent=11 // pred_check_branch
        %405 = sbr.rel (%p403) target = $region44
      $region43: #{se_resnext_forward.1} parent=11 // pred_region
        _
      $region44: #{se_resnext_forward.1} parent=11 // pred_fallthru
        _
      // Predicated region
      $region45: #{se_resnext_forward.1} parent=11 // pred_check
        %p406 = pneg %p236
      $region46: #{se_resnext_forward.1} parent=11 // pred_check_branch
        %408 = sbr.rel (%p406) target = $region48
      $region47: #{se_resnext_forward.1} parent=11 // pred_region
        _
      $region48: #{se_resnext_forward.1} parent=11 // pred_fallthru
        _
      // Predicated region
      $region49: #{se_resnext_forward.1} parent=11 // pred_check
        %p409 = pneg %p257
      $region50: #{se_resnext_forward.1} parent=11 // pred_check_branch
        %411 = sbr.rel (%p409) target = $region52
      $region51: #{se_resnext_forward.1} parent=11 // pred_region
        _
      $region52: #{se_resnext_forward.1} parent=11 // pred_fallthru
        _
      // Predicated region
      $region53: #{se_resnext_forward.1} parent=11 // pred_check
        %p412 = pneg %p278
      $region54: #{se_resnext_forward.1} parent=11 // pred_check_branch
        %414 = sbr.rel (%p412) target = $region56
      $region55: #{se_resnext_forward.1} parent=11 // pred_region
        _
      $region56: #{se_resnext_forward.1} parent=11 // pred_fallthru
        _
      // Predicated region
      $region57: #{se_resnext_forward.1} parent=11 // pred_check
        %p415 = pneg %p299
      $region58: #{se_resnext_forward.1} parent=11 // pred_check_branch
        %417 = sbr.rel (%p415) target = $region60
      $region59: #{se_resnext_forward.1} parent=11 // pred_region
        _
      $region60: #{se_resnext_forward.1} parent=11 // pred_fallthru
        _
      // Predicated region
      $region61: #{se_resnext_forward.1} parent=11 // pred_check
        %p418 = pneg %p320
      $region62: #{se_resnext_forward.1} parent=11 // pred_check_branch
        %420 = sbr.rel (%p418) target = $region64
      $region63: #{se_resnext_forward.1} parent=11 // pred_region
        _
      $region64: #{se_resnext_forward.1} parent=11 // pred_fallthru
        _
      // Predicated region
      $region65: #{se_resnext_forward.1} parent=11 // pred_check
        %p421 = pneg %p341
      $region66: #{se_resnext_forward.1} parent=11 // pred_check_branch
        %423 = sbr.rel (%p421) target = $region68
      $region67: #{se_resnext_forward.1} parent=11 // pred_region
        _
      $region68: #{se_resnext_forward.1} parent=11 // pred_fallthru
        _
    $region12: #{se_resnext_forward.1} parent=5 // pred_fallthru
      _
    %p424 = scmp.lt.s32.totalorder %s21, 2
    // Predicated region
    $region69: #{se_resnext_forward.1} parent=5 // pred_check
      %p425 = pneg %p424
    $region70: #{se_resnext_forward.1} parent=5 // pred_check_branch
      %427 = sbr.rel (%p425) target = $region72
    $region71: #{se_resnext_forward.1} parent=5 // pred_region
      // Predicated region
      $region73: #{se_resnext_forward.1} parent=71 // pred_check
        %p428 = pneg %p41
      $region74: #{se_resnext_forward.1} parent=71 // pred_check_branch
        %430 = sbr.rel (%p428) target = $region76
      $region75: #{se_resnext_forward.1} parent=71 // pred_region
        %p431 = scmp.lt.s32.totalorder %s21, 1
        %s432 = scalar_select %p431, %s21, 1
        %s433 = smul.addr %s432, 41
        %s434 = smul.addr %s433, 4
        %s435 = scalar_lea.vmem %s0, %s434
      $region76: #{se_resnext_forward.1} parent=71 // pred_fallthru
        _
    $region72: #{se_resnext_forward.1} parent=5 // pred_fallthru
      _
    %p436 = scmp.le.s32.totalorder 1, %s21
    %p437 = scmp.lt.s32.totalorder %s21, 3
    %p438 = pnand %p436, %p437
    %p439 = pneg %p438
    // Predicated region
    $region77: #{se_resnext_forward.1} parent=5 // pred_check
      _
    $region78: #{se_resnext_forward.1} parent=5 // pred_check_branch
      %441 = sbr.rel (%p438) target = $region80
    $region79: #{se_resnext_forward.1} parent=5 // pred_region
      %s442 = ssub.s32 %s21, 1
      %p443 = scmp.lt.s32.totalorder %s26, 1
      %s444 = scalar_select %p443, %s26, 1
      %s445 = smul.addr %s444, 41
      %s446 = smul.addr %s445, 4
      %s447 = scalar_lea.vmem %s0, %s446
      %p448 = pneg %p47
      %p449 = pneg %p44
      %p450 = pneg %p68
      %p451 = pneg %p65
      %p452 = pneg %p89
      %p453 = pneg %p86
      %p454 = pneg %p110
      %p455 = pneg %p107
      %p456 = pneg %p131
      %p457 = pneg %p128
      %p458 = pneg %p152
      %p459 = pneg %p149
      %p460 = pneg %p173
      %p461 = pneg %p170
      %p462 = pneg %p194
      %p463 = pneg %p191
      %p464 = pneg %p215
      %p465 = pneg %p212
      %p466 = pneg %p236
      %p467 = pneg %p233
      %p468 = pneg %p257
      %p469 = pneg %p254
      %p470 = pneg %p278
      %p471 = pneg %p275
      %p472 = pneg %p299
      %p473 = pneg %p296
      %p474 = pneg %p320
      %p475 = pneg %p317
      %p476 = pneg %p341
      %p477 = pneg %p338
      %p478 = pneg %p367
      %p479 = pneg %p364
      %p480 = scmp.lt.s32.totalorder %s26, 1
      %s481 = scalar_select %p480, %s26, 1
      %s482 = smul.addr %s481, 9
      %s483 = smul.addr %s482, 8
      %s484 = scalar_lea.vmem %s15, %s483
      %p485 = scmp.lt.s32.totalorder %s26, 1
      %s486 = scalar_select %p485, %s26, 1
      %s487 = smul.addr %s486, 41
      %s488 = smul.addr %s487, 4
      %s489 = scalar_lea.vmem %s0, %s488
      %p490 = scmp.lt.s32.totalorder %s26, 1
      %s491 = scalar_select %p490, %s26, 1
      %s492 = smul.addr %s491, 9
      %s493 = smul.addr %s492, 8
      %s494 = scalar_lea.vmem %s15, %s493
      %v496 = vld [vmem:[%s489] sm:$0xf]
      %v497 = vld [vmem:[%s489 + $0x4] sm:$0xf]
      %v498 = vld [vmem:[%s489 + $0x8] sm:$0xf]
      %v499 = vld [vmem:[%s489 + $0xc] sm:$0xf]
      %v500 = vld [vmem:[%s489 + $0x10] sm:$0xf]
      %v501 = vld [vmem:[%s489 + $0x14] sm:$0xf]
      %v502 = vld [vmem:[%s489 + $0x18] sm:$0xf]
      %v503 = vld [vmem:[%s489 + $0x1c] sm:$0xf]
      %v504 = vld [vmem:[%s489 + $0x20] sm:$0xf]
      %v505 = vld [vmem:[%s489 + $0x24] sm:$0xf]
      %v506 = vld [vmem:[%s489 + $0x28] sm:$0xf]
      %v507 = vld [vmem:[%s489 + $0x2c] sm:$0xf]
      %v508 = vld [vmem:[%s489 + $0x30] sm:$0xf]
      %v509 = vld [vmem:[%s489 + $0x34] sm:$0xf]
      %v510 = vld [vmem:[%s489 + $0x38] sm:$0xf]
      %v511 = vld [vmem:[%s489 + $0x3c] sm:$0xf]
      %v512 = vld [vmem:[%s489 + $0x40] sm:$0xf]
      %v513 = vld [vmem:[%s489 + $0x44] sm:$0xf]
      %v514 = vld [vmem:[%s489 + $0x48] sm:$0xf]
      %v515 = vld [vmem:[%s489 + $0x4c] sm:$0xf]
      %v516 = vld [vmem:[%s489 + $0x50] sm:$0xf]
      %v517 = vld [vmem:[%s489 + $0x54] sm:$0xf]
      %v518 = vld [vmem:[%s489 + $0x58] sm:$0xf]
      %v519 = vld [vmem:[%s489 + $0x5c] sm:$0xf]
      %v520 = vld [vmem:[%s489 + $0x60] sm:$0xf]
      %v521 = vld [vmem:[%s489 + $0x64] sm:$0xf]
      %v522 = vld [vmem:[%s489 + $0x68] sm:$0xf]
      %v523 = vld [vmem:[%s489 + $0x6c] sm:$0xf]
      %v524 = vld [vmem:[%s489 + $0x70] sm:$0xf]
      %v525 = vld [vmem:[%s489 + $0x74] sm:$0xf]
      %v526 = vld [vmem:[%s489 + $0x78] sm:$0xf]
      %v527 = vld [vmem:[%s489 + $0x7c] sm:$0xf]
      %v528 = vld [vmem:[%s489 + $0x80] sm:$0xf]
      %v529 = vld [vmem:[%s489 + $0x84] sm:$0xf]
      %v530 = vld [vmem:[%s489 + $0x88] sm:$0xf]
      %v531 = vld [vmem:[%s489 + $0x8c] sm:$0xf]
      %v532 = vld [vmem:[%s489 + $0x90] sm:$0xf]
      %v533 = vld [vmem:[%s489 + $0x94] sm:$0xf]
      %v534 = vld [vmem:[%s489 + $0x98] sm:$0xf]
      %v535 = vld [vmem:[%s489 + $0x9c] sm:$0xf]
      %v536 = vld [vmem:[%s489 + $0xa0] sm:$0x3]
      %v537 = vld [vmem:[%s3] sm:$0xf]
      %v538 = vld [vmem:[%s3 + $0x4] sm:$0xf]
      %v539 = vld [vmem:[%s4] sm:$0x1]
      %v541 = vlaneseq
      %v542 = vshrl.u32 %v541, 7
      %v543 = vsub.s32 0, %v542
      %v544 = vrot.slane %v539, %v543
      %v587 = vunpack.c.l.b16 %v496
      %v588 = vunpack.c.l.b16 %v497
      %v589 = vunpack.c.l.b16 %v498
      %v590 = vunpack.c.l.b16 %v499
      %v591 = vunpack.c.l.b16 %v500
      %v592 = vunpack.c.l.b16 %v501
      %v593 = vunpack.c.l.b16 %v502
      %v594 = vunpack.c.l.b16 %v503
      %v595 = vunpack.c.l.b16 %v504
      %v596 = vunpack.c.l.b16 %v505
      %v597 = vunpack.c.l.b16 %v506
      %v598 = vunpack.c.l.b16 %v507
      %v599 = vunpack.c.l.b16 %v508
      %v600 = vunpack.c.l.b16 %v509
      %v601 = vunpack.c.l.b16 %v510
      %v602 = vunpack.c.l.b16 %v511
      %v603 = vunpack.c.l.b16 %v512
      %v604 = vunpack.c.l.b16 %v513
      %v605 = vunpack.c.l.b16 %v514
      %v606 = vunpack.c.l.b16 %v515
      %v607 = vunpack.c.l.b16 %v516
      %v608 = vunpack.c.l.b16 %v517
      %v609 = vunpack.c.l.b16 %v518
      %v610 = vunpack.c.l.b16 %v519
      %v611 = vunpack.c.l.b16 %v520
      %v612 = vunpack.c.l.b16 %v521
      %v613 = vunpack.c.l.b16 %v522
      %v614 = vunpack.c.l.b16 %v523
      %v615 = vunpack.c.l.b16 %v524
      %v616 = vunpack.c.l.b16 %v525
      %v617 = vunpack.c.l.b16 %v526
      %v618 = vunpack.c.l.b16 %v527
      %v619 = vunpack.c.l.b16 %v528
      %v620 = vunpack.c.l.b16 %v529
      %v621 = vunpack.c.l.b16 %v530
      %v622 = vunpack.c.l.b16 %v531
      %v623 = vunpack.c.l.b16 %v532
      %v624 = vunpack.c.l.b16 %v533
      %v625 = vunpack.c.l.b16 %v534
      %v626 = vunpack.c.l.b16 %v535
      %v627 = vunpack.c.l.b16 %v536
      %v628 = vpack.c.b16 %v588, %v587
      %v629 = vpack.c.b16 %v590, %v589
      %v630 = vpack.c.b16 %v592, %v591
      %v631 = vpack.c.b16 %v594, %v593
      %v632 = vpack.c.b16 %v596, %v595
      %v633 = vpack.c.b16 %v598, %v597
      %v634 = vpack.c.b16 %v600, %v599
      %v635 = vpack.c.b16 %v602, %v601
      %v636 = vpack.c.b16 %v604, %v603
      %v637 = vpack.c.b16 %v606, %v605
      %v638 = vpack.c.b16 %v608, %v607
      %v639 = vpack.c.b16 %v610, %v609
      %v640 = vpack.c.b16 %v612, %v611
      %v641 = vpack.c.b16 %v614, %v613
      %v642 = vpack.c.b16 %v616, %v615
      %v643 = vpack.c.b16 %v618, %v617
      %v644 = vpack.c.b16 %v620, %v619
      %v645 = vpack.c.b16 %v622, %v621
      %v646 = vpack.c.b16 %v624, %v623
      %v647 = vpack.c.b16 %v626, %v625
      %v648 = vpack.c.b16 %v627, %v627
      %v651 = vunpack.c.l.b16 %v537
      %v652 = vunpack.c.l.b16 %v538
      %v653 = vpack.c.b16 %v652, %v651
      %vm655 = vcmask 130048
      %v657 = vsel %vm655, %v628, 0
      %v660 = vsel %vm655, %v629, 0
      %v663 = vsel %vm655, %v630, 0
      %v666 = vsel %vm655, %v631, 0
      %v669 = vsel %vm655, %v632, 0
      %v672 = vsel %vm655, %v633, 0
      %v675 = vsel %vm655, %v634, 0
      %v678 = vsel %vm655, %v635, 0
      %v681 = vsel %vm655, %v636, 0
      %v684 = vsel %vm655, %v637, 0
      %v687 = vsel %vm655, %v638, 0
      %v690 = vsel %vm655, %v639, 0
      %v693 = vsel %vm655, %v640, 0
      %v696 = vsel %vm655, %v641, 0
      %v699 = vsel %vm655, %v642, 0
      %v702 = vsel %vm655, %v643, 0
      %v705 = vsel %vm655, %v644, 0
      %v708 = vsel %vm655, %v645, 0
      %v711 = vsel %vm655, %v646, 0
      %v714 = vsel %vm655, %v647, 0
      %v717 = vsel %vm655, %v648, 0
      %719 = vmatprep.subr.bf16.mxu0 0
      %720 = vmatpush1.bf16.msra.mxu0 %v653
      %721 = vmatprep.subr.bf16.mxu0 0
      %722 = vmatpush1.bf16.msra.mxu0 0
      %723 = vmatprep.subr.bf16.mxu0 0
      %724 = vmatpush1.bf16.msra.mxu0 0
      %725 = vmatprep.subr.bf16.mxu0 0
      %726 = vmatpush1.bf16.msra.mxu0 0
      %727 = vmatprep.subr.bf16.mxu0 0
      %728 = vmatpush1.bf16.msra.mxu0 0
      %729 = vmatprep.subr.bf16.mxu0 0
      %730 = vmatpush1.bf16.msra.mxu0 0
      %731 = vmatprep.subr.bf16.mxu0 0
      %732 = vmatpush1.bf16.msra.mxu0 0
      %733 = vmatprep.subr.bf16.mxu0 0
      %734 = vmatpush1.bf16.msra.mxu0 0
      %735 = vmatprep.subr.bf16.mxu0 0
      %736 = vmatpush1.bf16.msra.mxu0 0
      %737 = vmatprep.subr.bf16.mxu0 0
      %738 = vmatpush1.bf16.msra.mxu0 0
      %739 = vmatprep.subr.bf16.mxu0 0
      %740 = vmatpush1.bf16.msra.mxu0 0
      %741 = vmatprep.subr.bf16.mxu0 0
      %742 = vmatpush1.bf16.msra.mxu0 0
      %743 = vmatprep.subr.bf16.mxu0 0
      %744 = vmatpush1.bf16.msra.mxu0 0
      %745 = vmatprep.subr.bf16.mxu0 0
      %746 = vmatpush1.bf16.msra.mxu0 0
      %747 = vmatprep.subr.bf16.mxu0 0
      %748 = vmatpush1.bf16.msra.mxu0 0
      %749 = vmatprep.subr.bf16.mxu0 0
      %750 = vmatpush1.bf16.msra.mxu0 0
      %751 = vmatprep.mubr.bf16.mxu0 0
      %752 = vmatmul.mubr.bf16.gmra.mrb[0].mxu0 %v657
      %v753 = vpop.f32.mrb[0].mxu0
      %v754 = vadd.f32 %v544, %v753
      %v755 = vpop.f32.mrb[0].mxu0
      %v756 = vpop.f32.mrb[0].mxu0
      %v757 = vadd.f32 %v544, %v756
      %v758 = vpop.f32.mrb[0].mxu0
      %759 = vmatprep.mubr.bf16.mxu0 0
      %760 = vmatmul.mubr.bf16.gmra.mrb[0].mxu0 %v660
      %v761 = vpop.f32.mrb[0].mxu0
      %v762 = vadd.f32 %v544, %v761
      %v763 = vpop.f32.mrb[0].mxu0
      %v764 = vpop.f32.mrb[0].mxu0
      %v765 = vadd.f32 %v544, %v764
      %v766 = vpop.f32.mrb[0].mxu0
      %767 = vmatprep.mubr.bf16.mxu0 0
      %768 = vmatmul.mubr.bf16.gmra.mrb[0].mxu0 %v663
      %v769 = vpop.f32.mrb[0].mxu0
      %v770 = vadd.f32 %v544, %v769
      %v771 = vpop.f32.mrb[0].mxu0
      %v772 = vpop.f32.mrb[0].mxu0
      %v773 = vadd.f32 %v544, %v772
      %v774 = vpop.f32.mrb[0].mxu0
      %775 = vmatprep.mubr.bf16.mxu0 0
      %776 = vmatmul.mubr.bf16.gmra.mrb[0].mxu0 %v666
      %v777 = vpop.f32.mrb[0].mxu0
      %v778 = vadd.f32 %v544, %v777
      %v779 = vpop.f32.mrb[0].mxu0
      %v780 = vpop.f32.mrb[0].mxu0
      %v781 = vadd.f32 %v544, %v780
      %v782 = vpop.f32.mrb[0].mxu0
      %783 = vmatprep.mubr.bf16.mxu0 0
      %784 = vmatmul.mubr.bf16.gmra.mrb[0].mxu0 %v669
      %v785 = vpop.f32.mrb[0].mxu0
      %v786 = vadd.f32 %v544, %v785
      %v787 = vpop.f32.mrb[0].mxu0
      %v788 = vpop.f32.mrb[0].mxu0
      %v789 = vadd.f32 %v544, %v788
      %v790 = vpop.f32.mrb[0].mxu0
      %791 = vmatprep.mubr.bf16.mxu0 0
      %792 = vmatmul.mubr.bf16.gmra.mrb[0].mxu0 %v672
      %v793 = vpop.f32.mrb[0].mxu0
      %v794 = vadd.f32 %v544, %v793
      %v795 = vpop.f32.mrb[0].mxu0
      %v796 = vpop.f32.mrb[0].mxu0
      %v797 = vadd.f32 %v544, %v796
      %v798 = vpop.f32.mrb[0].mxu0
      %799 = vmatprep.mubr.bf16.mxu0 0
      %800 = vmatmul.mubr.bf16.gmra.mrb[0].mxu0 %v675
      %v801 = vpop.f32.mrb[0].mxu0
      %v802 = vadd.f32 %v544, %v801
      %v803 = vpop.f32.mrb[0].mxu0
      %v804 = vpop.f32.mrb[0].mxu0
      %v805 = vadd.f32 %v544, %v804
      %v806 = vpop.f32.mrb[0].mxu0
      %807 = vmatprep.mubr.bf16.mxu0 0
      %808 = vmatmul.mubr.bf16.gmra.mrb[0].mxu0 %v678
      %v809 = vpop.f32.mrb[0].mxu0
      %v810 = vadd.f32 %v544, %v809
      %v811 = vpop.f32.mrb[0].mxu0
      %v812 = vpop.f32.mrb[0].mxu0
      %v813 = vadd.f32 %v544, %v812
      %v814 = vpop.f32.mrb[0].mxu0
      %815 = vmatprep.mubr.bf16.mxu0 0
      %816 = vmatmul.mubr.bf16.gmra.mrb[0].mxu0 %v681
      %v817 = vpop.f32.mrb[0].mxu0
      %v818 = vadd.f32 %v544, %v817
      %v819 = vpop.f32.mrb[0].mxu0
      %v820 = vpop.f32.mrb[0].mxu0
      %v821 = vadd.f32 %v544, %v820
      %v822 = vpop.f32.mrb[0].mxu0
      %823 = vmatprep.mubr.bf16.mxu0 0
      %824 = vmatmul.mubr.bf16.gmra.mrb[0].mxu0 %v684
      %v825 = vpop.f32.mrb[0].mxu0
      %v826 = vadd.f32 %v544, %v825
      %v827 = vpop.f32.mrb[0].mxu0
      %v828 = vpop.f32.mrb[0].mxu0
      %v829 = vadd.f32 %v544, %v828
      %v830 = vpop.f32.mrb[0].mxu0
      %831 = vmatprep.mubr.bf16.mxu0 0
      %832 = vmatmul.mubr.bf16.gmra.mrb[0].mxu0 %v687
      %v833 = vpop.f32.mrb[0].mxu0
      %v834 = vadd.f32 %v544, %v833
      %v835 = vpop.f32.mrb[0].mxu0
      %v836 = vpop.f32.mrb[0].mxu0
      %v837 = vadd.f32 %v544, %v836
      %v838 = vpop.f32.mrb[0].mxu0
      %839 = vmatprep.mubr.bf16.mxu0 0
      %840 = vmatmul.mubr.bf16.gmra.mrb[0].mxu0 %v690
      %v841 = vpop.f32.mrb[0].mxu0
      %v842 = vadd.f32 %v544, %v841
      %v843 = vpop.f32.mrb[0].mxu0
      %v844 = vpop.f32.mrb[0].mxu0
      %v845 = vadd.f32 %v544, %v844
      %v846 = vpop.f32.mrb[0].mxu0
      %847 = vmatprep.mubr.bf16.mxu0 0
      %848 = vmatmul.mubr.bf16.gmra.mrb[0].mxu0 %v693
      %v849 = vpop.f32.mrb[0].mxu0
      %v850 = vadd.f32 %v544, %v849
      %v851 = vpop.f32.mrb[0].mxu0
      %v852 = vpop.f32.mrb[0].mxu0
      %v853 = vadd.f32 %v544, %v852
      %v854 = vpop.f32.mrb[0].mxu0
      %855 = vmatprep.mubr.bf16.mxu0 0
      %856 = vmatmul.mubr.bf16.gmra.mrb[0].mxu0 %v696
      %v857 = vpop.f32.mrb[0].mxu0
      %v858 = vadd.f32 %v544, %v857
      %v859 = vpop.f32.mrb[0].mxu0
      %v860 = vpop.f32.mrb[0].mxu0
      %v861 = vadd.f32 %v544, %v860
      %v862 = vpop.f32.mrb[0].mxu0
      %863 = vmatprep.mubr.bf16.mxu0 0
      %864 = vmatmul.mubr.bf16.gmra.mrb[0].mxu0 %v699
      %v865 = vpop.f32.mrb[0].mxu0
      %v866 = vadd.f32 %v544, %v865
      %v867 = vpop.f32.mrb[0].mxu0
      %v868 = vpop.f32.mrb[0].mxu0
      %v869 = vadd.f32 %v544, %v868
      %v870 = vpop.f32.mrb[0].mxu0
      %871 = vmatprep.mubr.bf16.mxu0 0
      %872 = vmatmul.mubr.bf16.gmra.mrb[0].mxu0 %v702
      %v873 = vpop.f32.mrb[0].mxu0
      %v874 = vadd.f32 %v544, %v873
      %v875 = vpop.f32.mrb[0].mxu0
      %v876 = vpop.f32.mrb[0].mxu0
      %v877 = vadd.f32 %v544, %v876
      %v878 = vpop.f32.mrb[0].mxu0
      %879 = vmatprep.mubr.bf16.mxu0 0
      %880 = vmatmul.mubr.bf16.gmra.mrb[0].mxu0 %v705
      %v881 = vpop.f32.mrb[0].mxu0
      %v882 = vadd.f32 %v544, %v881
      %v883 = vpop.f32.mrb[0].mxu0
      %v884 = vpop.f32.mrb[0].mxu0
      %v885 = vadd.f32 %v544, %v884
      %v886 = vpop.f32.mrb[0].mxu0
      %887 = vmatprep.mubr.bf16.mxu0 0
      %888 = vmatmul.mubr.bf16.gmra.mrb[0].mxu0 %v708
      %v889 = vpop.f32.mrb[0].mxu0
      %v890 = vadd.f32 %v544, %v889
      %v891 = vpop.f32.mrb[0].mxu0
      %v892 = vpop.f32.mrb[0].mxu0
      %v893 = vadd.f32 %v544, %v892
      %v894 = vpop.f32.mrb[0].mxu0
      %895 = vmatprep.mubr.bf16.mxu0 0
      %896 = vmatmul.mubr.bf16.gmra.mrb[0].mxu0 %v711
      %v897 = vpop.f32.mrb[0].mxu0
      %v898 = vadd.f32 %v544, %v897
      %v899 = vpop.f32.mrb[0].mxu0
      %v900 = vpop.f32.mrb[0].mxu0
      %v901 = vadd.f32 %v544, %v900
      %v902 = vpop.f32.mrb[0].mxu0
      %903 = vmatprep.mubr.bf16.mxu0 0
      %904 = vmatmul.mubr.bf16.gmra.mrb[0].mxu0 %v714
      %v905 = vpop.f32.mrb[0].mxu0
      %v906 = vadd.f32 %v544, %v905
      %v907 = vpop.f32.mrb[0].mxu0
      %v908 = vpop.f32.mrb[0].mxu0
      %v909 = vadd.f32 %v544, %v908
      %v910 = vpop.f32.mrb[0].mxu0
      %911 = vmatprep.mubr.bf16.mxu0 0
      %912 = vmatmul.mubr.bf16.gmra.mrb[0].mxu0 %v717
      %v913 = vpop.f32.mrb[0].mxu0
      %v914 = vadd.f32 %v544, %v913
      %v915 = vpop.f32.mrb[0].mxu0
      %v916 = vpop.f32.mrb[0].mxu0
      %v917 = vpop.f32.mrb[0].mxu0
      %918 = vdwg.mxu0
      %v919 = vmax.f32 %v754, 0.0
      %v920 = vmax.f32 %v757, 0.0
      %v921 = vmax.f32 %v762, 0.0
      %v922 = vmax.f32 %v765, 0.0
      %v923 = vmax.f32 %v770, 0.0
      %v924 = vmax.f32 %v773, 0.0
      %v925 = vmax.f32 %v778, 0.0
      %v926 = vmax.f32 %v781, 0.0
      %v927 = vmax.f32 %v786, 0.0
      %v928 = vmax.f32 %v789, 0.0
      %v929 = vmax.f32 %v794, 0.0
      %v930 = vmax.f32 %v797, 0.0
      %v931 = vmax.f32 %v802, 0.0
      %v932 = vmax.f32 %v805, 0.0
      %v933 = vmax.f32 %v810, 0.0
      %v934 = vmax.f32 %v813, 0.0
      %v935 = vmax.f32 %v818, 0.0
      %v936 = vmax.f32 %v821, 0.0
      %v937 = vmax.f32 %v826, 0.0
      %v938 = vmax.f32 %v829, 0.0
      %v939 = vmax.f32 %v834, 0.0
      %v940 = vmax.f32 %v837, 0.0
      %v941 = vmax.f32 %v842, 0.0
      %v942 = vmax.f32 %v845, 0.0
      %v943 = vmax.f32 %v850, 0.0
      %v944 = vmax.f32 %v853, 0.0
      %v945 = vmax.f32 %v858, 0.0
      %v946 = vmax.f32 %v861, 0.0
      %v947 = vmax.f32 %v866, 0.0
      %v948 = vmax.f32 %v869, 0.0
      %v949 = vmax.f32 %v874, 0.0
      %v950 = vmax.f32 %v877, 0.0
      %v951 = vmax.f32 %v882, 0.0
      %v952 = vmax.f32 %v885, 0.0
      %v953 = vmax.f32 %v890, 0.0
      %v954 = vmax.f32 %v893, 0.0
      %v955 = vmax.f32 %v898, 0.0
      %v956 = vmax.f32 %v901, 0.0
      %v957 = vmax.f32 %v906, 0.0
      %v958 = vmax.f32 %v909, 0.0
      %v959 = vmax.f32 %v914, 0.0
      %v960 = vld [vmem:[%s1] sm:$0xff]
      %v961 = vld [vmem:[%s1 + $0x8] sm:$0xff]
      %v962 = vld [vmem:[%s1 + $0x10] sm:$0xff]
      %v963 = vld [vmem:[%s1 + $0x18] sm:$0xff]
      %v964 = vld [vmem:[%s1 + $0x20] sm:$0xff]
      %v965 = vld [vmem:[%s1 + $0x28] sm:$0xff]
      %v966 = vld [vmem:[%s1 + $0x30] sm:$0xff]
      %v967 = vld [vmem:[%s1 + $0x38] sm:$0xff]
      %v968 = vld [vmem:[%s1 + $0x40] sm:$0xff]
      %v969 = vld [vmem:[%s1 + $0x48] sm:$0xff]
      %v970 = vld [vmem:[%s1 + $0x50] sm:$0xff]
      %v971 = vld [vmem:[%s1 + $0x58] sm:$0xff]
      %v972 = vld [vmem:[%s1 + $0x60] sm:$0xff]
      %v973 = vld [vmem:[%s1 + $0x68] sm:$0xff]
      %v974 = vld [vmem:[%s1 + $0x70] sm:$0xff]
      %v975 = vld [vmem:[%s1 + $0x78] sm:$0xff]
      %v976 = vld [vmem:[%s1 + $0x80] sm:$0xff]
      %v977 = vld [vmem:[%s1 + $0x88] sm:$0xff]
      %v978 = vld [vmem:[%s1 + $0x90] sm:$0xff]
      %v979 = vld [vmem:[%s1 + $0x98] sm:$0xff]
      %v980 = vld [vmem:[%s1 + $0xa0] sm:$0xff]
      %v981 = vld [vmem:[%s1 + $0xa8] sm:$0xff]
      %v982 = vld [vmem:[%s1 + $0xb0] sm:$0xff]
      %v983 = vld [vmem:[%s1 + $0xb8] sm:$0xff]
      %v984 = vld [vmem:[%s1 + $0xc0] sm:$0xff]
      %v985 = vld [vmem:[%s1 + $0xc8] sm:$0xff]
      %v986 = vld [vmem:[%s1 + $0xd0] sm:$0xff]
      %v987 = vld [vmem:[%s1 + $0xd8] sm:$0xff]
      %v988 = vld [vmem:[%s1 + $0xe0] sm:$0xff]
      %v989 = vld [vmem:[%s1 + $0xe8] sm:$0xff]
      %v990 = vld [vmem:[%s1 + $0xf0] sm:$0xff]
      %v991 = vld [vmem:[%s1 + $0xf8] sm:$0xff]
      %v992 = vld [vmem:[%s1 + $0x100] sm:$0xff]
      %v993 = vld [vmem:[%s1 + $0x108] sm:$0xff]
      %v994 = vld [vmem:[%s1 + $0x110] sm:$0xff]
      %v995 = vld [vmem:[%s1 + $0x118] sm:$0xff]
      %v996 = vld [vmem:[%s1 + $0x120] sm:$0xff]
      %v997 = vld [vmem:[%s1 + $0x128] sm:$0xff]
      %v998 = vld [vmem:[%s1 + $0x130] sm:$0xff]
      %v999 = vld [vmem:[%s1 + $0x138] sm:$0xff]
      %v1000 = vld [vmem:[%s1 + $0x140] sm:$0xf]
      %1002 = vset.pattern.permute.xlu0 0
      %1003 = vperm.xlu0 %1002, %v960
      %v1004 = vpop.permute.xlu0 %1003
      %1007 = vset.pattern.permute.xlu0 0
      %1008 = vperm.xlu0 %1007, %v961
      %v1009 = vpop.permute.xlu0 %1008
      %1012 = vset.pattern.permute.xlu0 0
      %1013 = vperm.xlu0 %1012, %v962
      %v1014 = vpop.permute.xlu0 %1013
      %1017 = vset.pattern.permute.xlu0 0
      %1018 = vperm.xlu0 %1017, %v963
      %v1019 = vpop.permute.xlu0 %1018
      %1022 = vset.pattern.permute.xlu0 0
      %1023 = vperm.xlu0 %1022, %v964
      %v1024 = vpop.permute.xlu0 %1023
      %1027 = vset.pattern.permute.xlu0 0
      %1028 = vperm.xlu0 %1027, %v965
      %v1029 = vpop.permute.xlu0 %1028
      %1032 = vset.pattern.permute.xlu0 0
      %1033 = vperm.xlu0 %1032, %v966
      %v1034 = vpop.permute.xlu0 %1033
      %1037 = vset.pattern.permute.xlu0 0
      %1038 = vperm.xlu0 %1037, %v967
      %v1039 = vpop.permute.xlu0 %1038
      %1042 = vset.pattern.permute.xlu0 0
      %1043 = vperm.xlu0 %1042, %v968
      %v1044 = vpop.permute.xlu0 %1043
      %1047 = vset.pattern.permute.xlu0 0
      %1048 = vperm.xlu0 %1047, %v969
      %v1049 = vpop.permute.xlu0 %1048
      %1052 = vset.pattern.permute.xlu0 0
      %1053 = vperm.xlu0 %1052, %v970
      %v1054 = vpop.permute.xlu0 %1053
      %1057 = vset.pattern.permute.xlu0 0
      %1058 = vperm.xlu0 %1057, %v971
      %v1059 = vpop.permute.xlu0 %1058
      %1062 = vset.pattern.permute.xlu0 0
      %1063 = vperm.xlu0 %1062, %v972
      %v1064 = vpop.permute.xlu0 %1063
      %1067 = vset.pattern.permute.xlu0 0
      %1068 = vperm.xlu0 %1067, %v973
      %v1069 = vpop.permute.xlu0 %1068
      %1072 = vset.pattern.permute.xlu0 0
      %1073 = vperm.xlu0 %1072, %v974
      %v1074 = vpop.permute.xlu0 %1073
      %1077 = vset.pattern.permute.xlu0 0
      %1078 = vperm.xlu0 %1077, %v975
      %v1079 = vpop.permute.xlu0 %1078
      %1082 = vset.pattern.permute.xlu0 0
      %1083 = vperm.xlu0 %1082, %v976
      %v1084 = vpop.permute.xlu0 %1083
      %1087 = vset.pattern.permute.xlu0 0
      %1088 = vperm.xlu0 %1087, %v977
      %v1089 = vpop.permute.xlu0 %1088
      %1092 = vset.pattern.permute.xlu0 0
      %1093 = vperm.xlu0 %1092, %v978
      %v1094 = vpop.permute.xlu0 %1093
      %1097 = vset.pattern.permute.xlu0 0
      %1098 = vperm.xlu0 %1097, %v979
      %v1099 = vpop.permute.xlu0 %1098
      %1102 = vset.pattern.permute.xlu0 0
      %1103 = vperm.xlu0 %1102, %v980
      %v1104 = vpop.permute.xlu0 %1103
      %1107 = vset.pattern.permute.xlu0 0
      %1108 = vperm.xlu0 %1107, %v981
      %v1109 = vpop.permute.xlu0 %1108
      %1112 = vset.pattern.permute.xlu0 0
      %1113 = vperm.xlu0 %1112, %v982
      %v1114 = vpop.permute.xlu0 %1113
      %1117 = vset.pattern.permute.xlu0 0
      %1118 = vperm.xlu0 %1117, %v983
      %v1119 = vpop.permute.xlu0 %1118
      %1122 = vset.pattern.permute.xlu0 0
      %1123 = vperm.xlu0 %1122, %v984
      %v1124 = vpop.permute.xlu0 %1123
      %1127 = vset.pattern.permute.xlu0 0
      %1128 = vperm.xlu0 %1127, %v985
      %v1129 = vpop.permute.xlu0 %1128
      %1132 = vset.pattern.permute.xlu0 0
      %1133 = vperm.xlu0 %1132, %v986
      %v1134 = vpop.permute.xlu0 %1133
      %1137 = vset.pattern.permute.xlu0 0
      %1138 = vperm.xlu0 %1137, %v987
      %v1139 = vpop.permute.xlu0 %1138
      %1142 = vset.pattern.permute.xlu0 0
      %1143 = vperm.xlu0 %1142, %v988
      %v1144 = vpop.permute.xlu0 %1143
      %1147 = vset.pattern.permute.xlu0 0
      %1148 = vperm.xlu0 %1147, %v989
      %v1149 = vpop.permute.xlu0 %1148
      %1152 = vset.pattern.permute.xlu0 0
      %1153 = vperm.xlu0 %1152, %v990
      %v1154 = vpop.permute.xlu0 %1153
      %1157 = vset.pattern.permute.xlu0 0
      %1158 = vperm.xlu0 %1157, %v991
      %v1159 = vpop.permute.xlu0 %1158
      %1162 = vset.pattern.permute.xlu0 0
      %1163 = vperm.xlu0 %1162, %v992
      %v1164 = vpop.permute.xlu0 %1163
      %1167 = vset.pattern.permute.xlu0 0
      %1168 = vperm.xlu0 %1167, %v993
      %v1169 = vpop.permute.xlu0 %1168
      %1172 = vset.pattern.permute.xlu0 0
      %1173 = vperm.xlu0 %1172, %v994
      %v1174 = vpop.permute.xlu0 %1173
      %1177 = vset.pattern.permute.xlu0 0
      %1178 = vperm.xlu0 %1177, %v995
      %v1179 = vpop.permute.xlu0 %1178
      %1182 = vset.pattern.permute.xlu0 0
      %1183 = vperm.xlu0 %1182, %v996
      %v1184 = vpop.permute.xlu0 %1183
      %1187 = vset.pattern.permute.xlu0 0
      %1188 = vperm.xlu0 %1187, %v997
      %v1189 = vpop.permute.xlu0 %1188
      %1192 = vset.pattern.permute.xlu0 0
      %1193 = vperm.xlu0 %1192, %v998
      %v1194 = vpop.permute.xlu0 %1193
      %1197 = vset.pattern.permute.xlu0 0
      %1198 = vperm.xlu0 %1197, %v999
      %v1199 = vpop.permute.xlu0 %1198
      %1202 = vset.pattern.permute.xlu0 0
      %1203 = vperm.xlu0 %1202, %v1000
      %v1204 = vpop.permute.xlu0 %1203
      %v1206 = vmul.f32 %v919, %v1004
      %v1207 = vmul.f32 %v920, %v1009
      %v1208 = vmul.f32 %v921, %v1014
      %v1209 = vmul.f32 %v922, %v1019
      %v1210 = vmul.f32 %v923, %v1024
      %v1211 = vmul.f32 %v924, %v1029
      %v1212 = vmul.f32 %v925, %v1034
      %v1213 = vmul.f32 %v926, %v1039
      %v1214 = vmul.f32 %v927, %v1044
      %v1215 = vmul.f32 %v928, %v1049
      %v1216 = vmul.f32 %v929, %v1054
      %v1217 = vmul.f32 %v930, %v1059
      %v1218 = vmul.f32 %v931, %v1064
      %v1219 = vmul.f32 %v932, %v1069
      %v1220 = vmul.f32 %v933, %v1074
      %v1221 = vmul.f32 %v934, %v1079
      %v1222 = vmul.f32 %v935, %v1084
      %v1223 = vmul.f32 %v936, %v1089
      %v1224 = vmul.f32 %v937, %v1094
      %v1225 = vmul.f32 %v938, %v1099
      %v1226 = vmul.f32 %v939, %v1104
      %v1227 = vmul.f32 %v940, %v1109
      %v1228 = vmul.f32 %v941, %v1114
      %v1229 = vmul.f32 %v942, %v1119
      %v1230 = vmul.f32 %v943, %v1124
      %v1231 = vmul.f32 %v944, %v1129
      %v1232 = vmul.f32 %v945, %v1134
      %v1233 = vmul.f32 %v946, %v1139
      %v1234 = vmul.f32 %v947, %v1144
      %v1235 = vmul.f32 %v948, %v1149
      %v1236 = vmul.f32 %v949, %v1154
      %v1237 = vmul.f32 %v950, %v1159
      %v1238 = vmul.f32 %v951, %v1164
      %v1239 = vmul.f32 %v952, %v1169
      %v1240 = vmul.f32 %v953, %v1174
      %v1241 = vmul.f32 %v954, %v1179
      %v1242 = vmul.f32 %v955, %v1184
      %v1243 = vmul.f32 %v956, %v1189
      %v1244 = vmul.f32 %v957, %v1194
      %v1245 = vmul.f32 %v958, %v1199
      %v1246 = vmul.f32 %v959, %v1204
      %vm1247 = vcmask 64512
      %1248 = vst.msk [vmem:[#allocation2] sm:$0xff] %vm1247, %v1206
      %1249 = vst.msk [vmem:[#allocation2 + $0x8] sm:$0xff] %vm1247, %v1207
      %1250 = vst.msk [vmem:[#allocation2 + $0x10] sm:$0xff] %vm1247, %v1208
      %1251 = vst.msk [vmem:[#allocation2 + $0x18] sm:$0xff] %vm1247, %v1209
      %1252 = vst.msk [vmem:[#allocation2 + $0x20] sm:$0xff] %vm1247, %v1210
      %1253 = vst.msk [vmem:[#allocation2 + $0x28] sm:$0xff] %vm1247, %v1211
      %1254 = vst.msk [vmem:[#allocation2 + $0x30] sm:$0xff] %vm1247, %v1212
      %1255 = vst.msk [vmem:[#allocation2 + $0x38] sm:$0xff] %vm1247, %v1213
      %1256 = vst.msk [vmem:[#allocation2 + $0x40] sm:$0xff] %vm1247, %v1214
      %1257 = vst.msk [vmem:[#allocation2 + $0x48] sm:$0xff] %vm1247, %v1215
      %1258 = vst.msk [vmem:[#allocation2 + $0x50] sm:$0xff] %vm1247, %v1216
      %1259 = vst.msk [vmem:[#allocation2 + $0x58] sm:$0xff] %vm1247, %v1217
      %1260 = vst.msk [vmem:[#allocation2 + $0x60] sm:$0xff] %vm1247, %v1218
      %1261 = vst.msk [vmem:[#allocation2 + $0x68] sm:$0xff] %vm1247, %v1219
      %1262 = vst.msk [vmem:[#allocation2 + $0x70] sm:$0xff] %vm1247, %v1220
      %1263 = vst.msk [vmem:[#allocation2 + $0x78] sm:$0xff] %vm1247, %v1221
      %1264 = vst.msk [vmem:[#allocation2 + $0x80] sm:$0xff] %vm1247, %v1222
      %1265 = vst.msk [vmem:[#allocation2 + $0x88] sm:$0xff] %vm1247, %v1223
      %1266 = vst.msk [vmem:[#allocation2 + $0x90] sm:$0xff] %vm1247, %v1224
      %1267 = vst.msk [vmem:[#allocation2 + $0x98] sm:$0xff] %vm1247, %v1225
      %1268 = vst.msk [vmem:[#allocation2 + $0xa0] sm:$0xff] %vm1247, %v1226
      %1269 = vst.msk [vmem:[#allocation2 + $0xa8] sm:$0xff] %vm1247, %v1227
      %1270 = vst.msk [vmem:[#allocation2 + $0xb0] sm:$0xff] %vm1247, %v1228
      %1271 = vst.msk [vmem:[#allocation2 + $0xb8] sm:$0xff] %vm1247, %v1229
      %1272 = vst.msk [vmem:[#allocation2 + $0xc0] sm:$0xff] %vm1247, %v1230
      %1273 = vst.msk [vmem:[#allocation2 + $0xc8] sm:$0xff] %vm1247, %v1231
      %1274 = vst.msk [vmem:[#allocation2 + $0xd0] sm:$0xff] %vm1247, %v1232
      %1275 = vst.msk [vmem:[#allocation2 + $0xd8] sm:$0xff] %vm1247, %v1233
      %1276 = vst.msk [vmem:[#allocation2 + $0xe0] sm:$0xff] %vm1247, %v1234
      %1277 = vst.msk [vmem:[#allocation2 + $0xe8] sm:$0xff] %vm1247, %v1235
      %1278 = vst.msk [vmem:[#allocation2 + $0xf0] sm:$0xff] %vm1247, %v1236
      %1279 = vst.msk [vmem:[#allocation2 + $0xf8] sm:$0xff] %vm1247, %v1237
      %1280 = vst.msk [vmem:[#allocation2 + $0x100] sm:$0xff] %vm1247, %v1238
      %1281 = vst.msk [vmem:[#allocation2 + $0x108] sm:$0xff] %vm1247, %v1239
      %1282 = vst.msk [vmem:[#allocation2 + $0x110] sm:$0xff] %vm1247, %v1240
      %1283 = vst.msk [vmem:[#allocation2 + $0x118] sm:$0xff] %vm1247, %v1241
      %1284 = vst.msk [vmem:[#allocation2 + $0x120] sm:$0xff] %vm1247, %v1242
      %1285 = vst.msk [vmem:[#allocation2 + $0x128] sm:$0xff] %vm1247, %v1243
      %1286 = vst.msk [vmem:[#allocation2 + $0x130] sm:$0xff] %vm1247, %v1244
      %1287 = vst.msk [vmem:[#allocation2 + $0x138] sm:$0xff] %vm1247, %v1245
      %vm1288 = vcmask 60416
      %1289 = vst.msk [vmem:[#allocation2 + $0x140] sm:$0xf] %vm1288, %v1246
      %v1290 = vld [vmem:[#allocation2] sm:$0xff]
      %v1291 = vld [vmem:[#allocation2 + $0x8] sm:$0xff]
      %v1292 = vld [vmem:[#allocation2 + $0x10] sm:$0xff]
      %v1293 = vld [vmem:[#allocation2 + $0x18] sm:$0xff]
      %v1294 = vld [vmem:[#allocation2 + $0x20] sm:$0xff]
      %v1295 = vld [vmem:[#allocation2 + $0x28] sm:$0xff]
      %v1296 = vld [vmem:[#allocation2 + $0x30] sm:$0xff]
      %v1297 = vld [vmem:[#allocation2 + $0x38] sm:$0xff]
      %v1298 = vld [vmem:[#allocation2 + $0x40] sm:$0x7f]
      %v1299 = vpack.c.bf16 %v1291, %v1290
      %v1300 = vpack.c.bf16 %v1293, %v1292
      %v1301 = vpack.c.bf16 %v1295, %v1294
      %v1302 = vpack.c.bf16 %v1297, %v1296
      %v1303 = vpack.c.bf16 %v1298, %v1298
      %v1304 = vld [vmem:[%s5] sm:$0xf]
      %v1305 = vld [vmem:[#allocation2 + $0x51] sm:$0xff]
      %v1306 = vld [vmem:[#allocation2 + $0x59] sm:$0xff]
      %v1307 = vld [vmem:[#allocation2 + $0x61] sm:$0xff]
      %v1308 = vld [vmem:[#allocation2 + $0x69] sm:$0xff]
      %v1309 = vld [vmem:[#allocation2 + $0x71] sm:$0xff]
      %v1310 = vld [vmem:[#allocation2 + $0x79] sm:$0xff]
      %v1311 = vld [vmem:[#allocation2 + $0x81] sm:$0xff]
      %v1312 = vld [vmem:[#allocation2 + $0x89] sm:$0xff]
      %v1313 = vld [vmem:[#allocation2 + $0x91] sm:$0x7f]
      %v1314 = vpack.c.bf16 %v1306, %v1305
      %v1315 = vpack.c.bf16 %v1308, %v1307
      %v1316 = vpack.c.bf16 %v1310, %v1309
      %v1317 = vpack.c.bf16 %v1312, %v1311
      %v1318 = vpack.c.bf16 %v1313, %v1313
      %s1319 = scalar_lea.vmem %s5, 4
      %v1320 = vld [vmem:[%s1319] sm:$0xf]
      %v1322 = vsel %vm1247, %v1314, 0
      %v1325 = vsel %vm1247, %v1315, 0
      %v1328 = vsel %vm1247, %v1316, 0
      %v1331 = vsel %vm1247, %v1317, 0
      %v1334 = vsel %vm1247, %v1318, 0
      %vm1336 = vcmask 1043456
      %v1338 = vsel %vm1336, %v1320, 0
      %1340 = vmatprep.subr.bf16.mxu0 0
      %1341 = vmatpush1.bf16.msra.mxu0 %v1338
      %1342 = vmatprep.subr.bf16.mxu0 0
      %1343 = vmatpush1.bf16.msra.mxu0 0
      %1344 = vmatprep.subr.bf16.mxu0 0
      %1345 = vmatpush1.bf16.msra.mxu0 0
      %1346 = vmatprep.subr.bf16.mxu0 0
      %1347 = vmatpush1.bf16.msra.mxu0 0
      %1348 = vmatprep.subr.bf16.mxu0 0
      %1349 = vmatpush1.bf16.msra.mxu0 0
      %1350 = vmatprep.subr.bf16.mxu0 0
      %1351 = vmatpush1.bf16.msra.mxu0 0
      %1352 = vmatprep.subr.bf16.mxu0 0
      %1353 = vmatpush1.bf16.msra.mxu0 0
      %1354 = vmatprep.subr.bf16.mxu0 0
      %1355 = vmatpush1.bf16.msra.mxu0 0
      %1356 = vmatprep.subr.bf16.mxu0 0
      %1357 = vmatpush1.bf16.msra.mxu0 0
      %1358 = vmatprep.subr.bf16.mxu0 0
      %1359 = vmatpush1.bf16.msra.mxu0 0
      %1360 = vmatprep.subr.bf16.mxu0 0
      %1361 = vmatpush1.bf16.msra.mxu0 0
      %1362 = vmatprep.subr.bf16.mxu0 0
      %1363 = vmatpush1.bf16.msra.mxu0 0
      %1364 = vmatprep.subr.bf16.mxu0 0
      %1365 = vmatpush1.bf16.msra.mxu0 0
      %1366 = vmatprep.subr.bf16.mxu0 0
      %1367 = vmatpush1.bf16.msra.mxu0 0
      %1368 = vmatprep.subr.bf16.mxu0 0
      %1369 = vmatpush1.bf16.msra.mxu0 0
      %1370 = vmatprep.subr.bf16.mxu0 0
      %1371 = vmatpush1.bf16.msra.mxu0 0
      %1372 = vmatprep.mubr.bf16.mxu0 0
      %1373 = vmatmul.mubr.bf16.gmra.mrb[0].mxu0 %v1322
      %v1374 = vpop.f32.mrb[0].mxu0
      %v1375 = vadd.f32 0.0, %v1374
      %v1376 = vpop.f32.mrb[0].mxu0
      %v1377 = vpop.f32.mrb[0].mxu0
      %v1378 = vadd.f32 0.0, %v1377
      %v1379 = vpop.f32.mrb[0].mxu0
      %1380 = vmatprep.mubr.bf16.mxu0 0
      %1381 = vmatmul.mubr.bf16.gmra.mrb[0].mxu0 %v1325
      %v1382 = vpop.f32.mrb[0].mxu0
      %v1383 = vadd.f32 0.0, %v1382
      %v1384 = vpop.f32.mrb[0].mxu0
      %v1385 = vpop.f32.mrb[0].mxu0
      %v1386 = vadd.f32 0.0, %v1385
      %v1387 = vpop.f32.mrb[0].mxu0
      %1388 = vmatprep.mubr.bf16.mxu0 0
      %1389 = vmatmul.mubr.bf16.gmra.mrb[0].mxu0 %v1328
      %v1390 = vpop.f32.mrb[0].mxu0
      %v1391 = vadd.f32 0.0, %v1390
      %v1392 = vpop.f32.mrb[0].mxu0
      %v1393 = vpop.f32.mrb[0].mxu0
      %v1394 = vadd.f32 0.0, %v1393
      %v1395 = vpop.f32.mrb[0].mxu0
      %1396 = vmatprep.mubr.bf16.mxu0 0
      %1397 = vmatmul.mubr.bf16.gmra.mrb[0].mxu0 %v1331
      %v1398 = vpop.f32.mrb[0].mxu0
      %v1399 = vadd.f32 0.0, %v1398
      %v1400 = vpop.f32.mrb[0].mxu0
      %v1401 = vpop.f32.mrb[0].mxu0
      %v1402 = vadd.f32 0.0, %v1401
      %v1403 = vpop.f32.mrb[0].mxu0
      %1404 = vmatprep.mubr.bf16.mxu0 0
      %1405 = vmatmul.mubr.bf16.gmra.mrb[0].mxu0 %v1334
      %v1406 = vpop.f32.mrb[0].mxu0
      %v1407 = vadd.f32 0.0, %v1406
      %v1408 = vpop.f32.mrb[0].mxu0
      %v1409 = vpop.f32.mrb[0].mxu0
      %v1410 = vpop.f32.mrb[0].mxu0
      %1411 = vdwg.mxu0
      %v1413 = vsel %vm1247, %v1299, 0
      %v1416 = vsel %vm1247, %v1300, 0
      %v1419 = vsel %vm1247, %v1301, 0
      %v1422 = vsel %vm1247, %v1302, 0
      %v1425 = vsel %vm1247, %v1303, 0
      %v1428 = vsel %vm1336, %v1304, 0
      %1430 = vmatprep.subr.bf16.mxu0 0
      %1431 = vmatpush1.bf16.msra.mxu0 %v1428
      %1432 = vmatprep.subr.bf16.mxu0 0
      %1433 = vmatpush1.bf16.msra.mxu0 0
      %1434 = vmatprep.subr.bf16.mxu0 0
      %1435 = vmatpush1.bf16.msra.mxu0 0
      %1436 = vmatprep.subr.bf16.mxu0 0
      %1437 = vmatpush1.bf16.msra.mxu0 0
      %1438 = vmatprep.subr.bf16.mxu0 0
      %1439 = vmatpush1.bf16.msra.mxu0 0
      %1440 = vmatprep.subr.bf16.mxu0 0
      %1441 = vmatpush1.bf16.msra.mxu0 0
      %1442 = vmatprep.subr.bf16.mxu0 0
      %1443 = vmatpush1.bf16.msra.mxu0 0
      %1444 = vmatprep.subr.bf16.mxu0 0
      %1445 = vmatpush1.bf16.msra.mxu0 0
      %1446 = vmatprep.subr.bf16.mxu0 0
      %1447 = vmatpush1.bf16.msra.mxu0 0
      %1448 = vmatprep.subr.bf16.mxu0 0
      %1449 = vmatpush1.bf16.msra.mxu0 0
      %1450 = vmatprep.subr.bf16.mxu0 0
      %1451 = vmatpush1.bf16.msra.mxu0 0
      %1452 = vmatprep.subr.bf16.mxu0 0
      %1453 = vmatpush1.bf16.msra.mxu0 0
      %1454 = vmatprep.subr.bf16.mxu0 0
      %1455 = vmatpush1.bf16.msra.mxu0 0
      %1456 = vmatprep.subr.bf16.mxu0 0
      %1457 = vmatpush1.bf16.msra.mxu0 0
      %1458 = vmatprep.subr.bf16.mxu0 0
      %1459 = vmatpush1.bf16.msra.mxu0 0
      %1460 = vmatprep.subr.bf16.mxu0 0
      %1461 = vmatpush1.bf16.msra.mxu0 0
      %1462 = vmatprep.mubr.bf16.mxu0 0
      %1463 = vmatmul.mubr.bf16.gmra.mrb[0].mxu0 %v1413
      %v1464 = vpop.f32.mrb[0].mxu0
      %v1465 = vadd.f32 %v1375, %v1464
      %v1466 = vpop.f32.mrb[0].mxu0
      %v1467 = vpop.f32.mrb[0].mxu0
      %v1468 = vadd.f32 %v1378, %v1467
      %v1469 = vpop.f32.mrb[0].mxu0
      %1470 = vmatprep.mubr.bf16.mxu0 0
      %1471 = vmatmul.mubr.bf16.gmra.mrb[0].mxu0 %v1416
      %v1472 = vpop.f32.mrb[0].mxu0
      %v1473 = vadd.f32 %v1383, %v1472
      %v1474 = vpop.f32.mrb[0].mxu0
      %v1475 = vpop.f32.mrb[0].mxu0
      %v1476 = vadd.f32 %v1386, %v1475
      %v1477 = vpop.f32.mrb[0].mxu0
      %1478 = vmatprep.mubr.bf16.mxu0 0
      %1479 = vmatmul.mubr.bf16.gmra.mrb[0].mxu0 %v1419
      %v1480 = vpop.f32.mrb[0].mxu0
      %v1481 = vadd.f32 %v1391, %v1480
      %v1482 = vpop.f32.mrb[0].mxu0
      %v1483 = vpop.f32.mrb[0].mxu0
      %v1484 = vadd.f32 %v1394, %v1483
      %v1485 = vpop.f32.mrb[0].mxu0
      %1486 = vmatprep.mubr.bf16.mxu0 0
      %1487 = vmatmul.mubr.bf16.gmra.mrb[0].mxu0 %v1422
      %v1488 = vpop.f32.mrb[0].mxu0
      %v1489 = vadd.f32 %v1399, %v1488
      %v1490 = vpop.f32.mrb[0].mxu0
      %v1491 = vpop.f32.mrb[0].mxu0
      %v1492 = vadd.f32 %v1402, %v1491
      %v1493 = vpop.f32.mrb[0].mxu0
      %1494 = vmatprep.mubr.bf16.mxu0 0
      %1495 = vmatmul.mubr.bf16.gmra.mrb[0].mxu0 %v1425
      %v1496 = vpop.f32.mrb[0].mxu0
      %v1497 = vadd.f32 %v1407, %v1496
      %v1498 = vpop.f32.mrb[0].mxu0
      %v1499 = vpop.f32.mrb[0].mxu0
      %v1500 = vpop.f32.mrb[0].mxu0
      %1501 = vdwg.mxu0
      %v1502 = vld [vmem:[#allocation2 + $0x1] sm:$0xff]
      %v1503 = vld [vmem:[#allocation2 + $0x9] sm:$0xff]
      %v1504 = vld [vmem:[#allocation2 + $0x11] sm:$0xff]
      %v1505 = vld [vmem:[#allocation2 + $0x19] sm:$0xff]
      %v1506 = vld [vmem:[#allocation2 + $0x21] sm:$0xff]
      %v1507 = vld [vmem:[#allocation2 + $0x29] sm:$0xff]
      %v1508 = vld [vmem:[#allocation2 + $0x31] sm:$0xff]
      %v1509 = vld [vmem:[#allocation2 + $0x39] sm:$0xff]
      %v1510 = vld [vmem:[#allocation2 + $0x41] sm:$0x7f]
      %v1511 = vpack.c.bf16 %v1503, %v1502
      %v1512 = vpack.c.bf16 %v1505, %v1504
      %v1513 = vpack.c.bf16 %v1507, %v1506
      %v1514 = vpack.c.bf16 %v1509, %v1508
      %v1515 = vpack.c.bf16 %v1510, %v1510
      %s1516 = scalar_lea.vmem %s5, 8
      %v1517 = vld [vmem:[%s1516] sm:$0xf]
      %v1519 = vsel %vm1247, %v1511, 0
      %v1522 = vsel %vm1247, %v1512, 0
      %v1525 = vsel %vm1247, %v1513, 0
      %v1528 = vsel %vm1247, %v1514, 0
      %v1531 = vsel %vm1247, %v1515, 0
      %v1534 = vsel %vm1336, %v1517, 0
      %1536 = vmatprep.subr.bf16.mxu0 0
      %1537 = vmatpush1.bf16.msra.mxu0 %v1534
      %1538 = vmatprep.subr.bf16.mxu0 0
      %1539 = vmatpush1.bf16.msra.mxu0 0
      %1540 = vmatprep.subr.bf16.mxu0 0
      %1541 = vmatpush1.bf16.msra.mxu0 0
      %1542 = vmatprep.subr.bf16.mxu0 0
      %1543 = vmatpush1.bf16.msra.mxu0 0
      %1544 = vmatprep.subr.bf16.mxu0 0
      %1545 = vmatpush1.bf16.msra.mxu0 0
      %1546 = vmatprep.subr.bf16.mxu0 0
      %1547 = vmatpush1.bf16.msra.mxu0 0
      %1548 = vmatprep.subr.bf16.mxu0 0
      %1549 = vmatpush1.bf16.msra.mxu0 0
      %1550 = vmatprep.subr.bf16.mxu0 0
      %1551 = vmatpush1.bf16.msra.mxu0 0
      %1552 = vmatprep.subr.bf16.mxu0 0
      %1553 = vmatpush1.bf16.msra.mxu0 0
      %1554 = vmatprep.subr.bf16.mxu0 0
      %1555 = vmatpush1.bf16.msra.mxu0 0
      %1556 = vmatprep.subr.bf16.mxu0 0
      %1557 = vmatpush1.bf16.msra.mxu0 0
      %1558 = vmatprep.subr.bf16.mxu0 0
      %1559 = vmatpush1.bf16.msra.mxu0 0
      %1560 = vmatprep.subr.bf16.mxu0 0
      %1561 = vmatpush1.bf16.msra.mxu0 0
      %1562 = vmatprep.subr.bf16.mxu0 0
      %1563 = vmatpush1.bf16.msra.mxu0 0
      %1564 = vmatprep.subr.bf16.mxu0 0
      %1565 = vmatpush1.bf16.msra.mxu0 0
      %1566 = vmatprep.subr.bf16.mxu0 0
      %1567 = vmatpush1.bf16.msra.mxu0 0
      %1568 = vmatprep.mubr.bf16.mxu0 0
      %1569 = vmatmul.mubr.bf16.gmra.mrb[0].mxu0 %v1519
      %v1570 = vpop.f32.mrb[0].mxu0
      %v1571 = vadd.f32 0.0, %v1570
      %v1572 = vpop.f32.mrb[0].mxu0
      %v1573 = vpop.f32.mrb[0].mxu0
      %v1574 = vadd.f32 0.0, %v1573
      %v1575 = vpop.f32.mrb[0].mxu0
      %1576 = vmatprep.mubr.bf16.mxu0 0
      %1577 = vmatmul.mubr.bf16.gmra.mrb[0].mxu0 %v1522
      %v1578 = vpop.f32.mrb[0].mxu0
      %v1579 = vadd.f32 0.0, %v1578
      %v1580 = vpop.f32.mrb[0].mxu0
      %v1581 = vpop.f32.mrb[0].mxu0
      %v1582 = vadd.f32 0.0, %v1581
      %v1583 = vpop.f32.mrb[0].mxu0
      %1584 = vmatprep.mubr.bf16.mxu0 0
      %1585 = vmatmul.mubr.bf16.gmra.mrb[0].mxu0 %v1525
      %v1586 = vpop.f32.mrb[0].mxu0
      %v1587 = vadd.f32 0.0, %v1586
      %v1588 = vpop.f32.mrb[0].mxu0
      %v1589 = vpop.f32.mrb[0].mxu0
      %v1590 = vadd.f32 0.0, %v1589
      %v1591 = vpop.f32.mrb[0].mxu0
      %1592 = vmatprep.mubr.bf16.mxu0 0
      %1593 = vmatmul.mubr.bf16.gmra.mrb[0].mxu0 %v1528
      %v1594 = vpop.f32.mrb[0].mxu0
      %v1595 = vadd.f32 0.0, %v1594
      %v1596 = vpop.f32.mrb[0].mxu0
      %v1597 = vpop.f32.mrb[0].mxu0
      %v1598 = vadd.f32 0.0, %v1597
      %v1599 = vpop.f32.mrb[0].mxu0
      %1600 = vmatprep.mubr.bf16.mxu0 0
      %1601 = vmatmul.mubr.bf16.gmra.mrb[0].mxu0 %v1531
      %v1602 = vpop.f32.mrb[0].mxu0
      %v1603 = vadd.f32 0.0, %v1602
      %v1604 = vpop.f32.mrb[0].mxu0
      %v1605 = vpop.f32.mrb[0].mxu0
      %v1606 = vpop.f32.mrb[0].mxu0
      %1607 = vdwg.mxu0
      %v1608 = vadd.f32 %v1465, %v1571
      %v1609 = vadd.f32 %v1468, %v1574
      %v1610 = vadd.f32 %v1473, %v1579
      %v1611 = vadd.f32 %v1476, %v1582
      %v1612 = vadd.f32 %v1481, %v1587
      %v1613 = vadd.f32 %v1484, %v1590
      %v1614 = vadd.f32 %v1489, %v1595
      %v1615 = vadd.f32 %v1492, %v1598
      %v1616 = vadd.f32 %v1497, %v1603
      %v1617 = vld [vmem:[#allocation2 + $0xa2] sm:$0xff]
      %v1618 = vld [vmem:[#allocation2 + $0xaa] sm:$0xff]
      %v1619 = vld [vmem:[#allocation2 + $0xb2] sm:$0xff]
      %v1620 = vld [vmem:[#allocation2 + $0xba] sm:$0xff]
      %v1621 = vld [vmem:[#allocation2 + $0xc2] sm:$0xff]
      %v1622 = vld [vmem:[#allocation2 + $0xca] sm:$0xff]
      %v1623 = vld [vmem:[#allocation2 + $0xd2] sm:$0xff]
      %v1624 = vld [vmem:[#allocation2 + $0xda] sm:$0xff]
      %v1625 = vld [vmem:[#allocation2 + $0xe2] sm:$0x7f]
      %v1626 = vpack.c.bf16 %v1618, %v1617
      %v1627 = vpack.c.bf16 %v1620, %v1619
      %v1628 = vpack.c.bf16 %v1622, %v1621
      %v1629 = vpack.c.bf16 %v1624, %v1623
      %v1630 = vpack.c.bf16 %v1625, %v1625
      %s1631 = scalar_lea.vmem %s5, 12
      %v1632 = vld [vmem:[%s1631] sm:$0xf]
      %v1634 = vsel %vm1247, %v1626, 0
      %v1637 = vsel %vm1247, %v1627, 0
      %v1640 = vsel %vm1247, %v1628, 0
      %v1643 = vsel %vm1247, %v1629, 0
      %v1646 = vsel %vm1247, %v1630, 0
      %v1649 = vsel %vm1336, %v1632, 0
      %1651 = vmatprep.subr.bf16.mxu0 0
      %1652 = vmatpush1.bf16.msra.mxu0 %v1649
      %1653 = vmatprep.subr.bf16.mxu0 0
      %1654 = vmatpush1.bf16.msra.mxu0 0
      %1655 = vmatprep.subr.bf16.mxu0 0
      %1656 = vmatpush1.bf16.msra.mxu0 0
      %1657 = vmatprep.subr.bf16.mxu0 0
      %1658 = vmatpush1.bf16.msra.mxu0 0
      %1659 = vmatprep.subr.bf16.mxu0 0
      %1660 = vmatpush1.bf16.msra.mxu0 0
      %1661 = vmatprep.subr.bf16.mxu0 0
      %1662 = vmatpush1.bf16.msra.mxu0 0
      %1663 = vmatprep.subr.bf16.mxu0 0
      %1664 = vmatpush1.bf16.msra.mxu0 0
      %1665 = vmatprep.subr.bf16.mxu0 0
      %1666 = vmatpush1.bf16.msra.mxu0 0
      %1667 = vmatprep.subr.bf16.mxu0 0
      %1668 = vmatpush1.bf16.msra.mxu0 0
      %1669 = vmatprep.subr.bf16.mxu0 0
      %1670 = vmatpush1.bf16.msra.mxu0 0
      %1671 = vmatprep.subr.bf16.mxu0 0
      %1672 = vmatpush1.bf16.msra.mxu0 0
      %1673 = vmatprep.subr.bf16.mxu0 0
      %1674 = vmatpush1.bf16.msra.mxu0 0
      %1675 = vmatprep.subr.bf16.mxu0 0
      %1676 = vmatpush1.bf16.msra.mxu0 0
      %1677 = vmatprep.subr.bf16.mxu0 0
      %1678 = vmatpush1.bf16.msra.mxu0 0
      %1679 = vmatprep.subr.bf16.mxu0 0
      %1680 = vmatpush1.bf16.msra.mxu0 0
      %1681 = vmatprep.subr.bf16.mxu0 0
      %1682 = vmatpush1.bf16.msra.mxu0 0
      %1683 = vmatprep.mubr.bf16.mxu0 0
      %1684 = vmatmul.mubr.bf16.gmra.mrb[0].mxu0 %v1634
      %v1685 = vpop.f32.mrb[0].mxu0
      %v1686 = vadd.f32 0.0, %v1685
      %v1687 = vpop.f32.mrb[0].mxu0
      %v1688 = vpop.f32.mrb[0].mxu0
      %v1689 = vadd.f32 0.0, %v1688
      %v1690 = vpop.f32.mrb[0].mxu0
      %1691 = vmatprep.mubr.bf16.mxu0 0
      %1692 = vmatmul.mubr.bf16.gmra.mrb[0].mxu0 %v1637
      %v1693 = vpop.f32.mrb[0].mxu0
      %v1694 = vadd.f32 0.0, %v1693
      %v1695 = vpop.f32.mrb[0].mxu0
      %v1696 = vpop.f32.mrb[0].mxu0
      %v1697 = vadd.f32 0.0, %v1696
      %v1698 = vpop.f32.mrb[0].mxu0
      %1699 = vmatprep.mubr.bf16.mxu0 0
      %1700 = vmatmul.mubr.bf16.gmra.mrb[0].mxu0 %v1640
      %v1701 = vpop.f32.mrb[0].mxu0
      %v1702 = vadd.f32 0.0, %v1701
      %v1703 = vpop.f32.mrb[0].mxu0
      %v1704 = vpop.f32.mrb[0].mxu0
      %v1705 = vadd.f32 0.0, %v1704
      %v1706 = vpop.f32.mrb[0].mxu0
      %1707 = vmatprep.mubr.bf16.mxu0 0
      %1708 = vmatmul.mubr.bf16.gmra.mrb[0].mxu0 %v1643
      %v1709 = vpop.f32.mrb[0].mxu0
      %v1710 = vadd.f32 0.0, %v1709
      %v1711 = vpop.f32.mrb[0].mxu0
      %v1712 = vpop.f32.mrb[0].mxu0
      %v1713 = vadd.f32 0.0, %v1712
      %v1714 = vpop.f32.mrb[0].mxu0
      %1715 = vmatprep.mubr.bf16.mxu0 0
      %1716 = vmatmul.mubr.bf16.gmra.mrb[0].mxu0 %v1646
      %v1717 = vpop.f32.mrb[0].mxu0
      %v1718 = vadd.f32 0.0, %v1717
      %v1719 = vpop.f32.mrb[0].mxu0
      %v1720 = vpop.f32.mrb[0].mxu0
      %v1721 = vpop.f32.mrb[0].mxu0
      %1722 = vdwg.mxu0
      %v1723 = vadd.f32 %v1608, %v1686
      %v1724 = vadd.f32 %v1609, %v1689
      %v1725 = vadd.f32 %v1610, %v1694
      %v1726 = vadd.f32 %v1611, %v1697
      %v1727 = vadd.f32 %v1612, %v1702
      %v1728 = vadd.f32 %v1613, %v1705
      %v1729 = vadd.f32 %v1614, %v1710
      %v1730 = vadd.f32 %v1615, %v1713
      %v1731 = vadd.f32 %v1616, %v1718
      %v1732 = vld [vmem:[#allocation2 + $0xf3] sm:$0xff]
      %v1733 = vld [vmem:[#allocation2 + $0xfb] sm:$0xff]
      %v1734 = vld [vmem:[#allocation2 + $0x103] sm:$0xff]
      %v1735 = vld [vmem:[#allocation2 + $0x10b] sm:$0xff]
      %v1736 = vld [vmem:[#allocation2 + $0x113] sm:$0xff]
      %v1737 = vld [vmem:[#allocation2 + $0x11b] sm:$0xff]
      %v1738 = vld [vmem:[#allocation2 + $0x123] sm:$0xff]
      %v1739 = vld [vmem:[#allocation2 + $0x12b] sm:$0xff]
      %v1740 = vld [vmem:[#allocation2 + $0x133] sm:$0x7f]
      %v1741 = vpack.c.bf16 %v1733, %v1732
      %v1742 = vpack.c.bf16 %v1735, %v1734
      %v1743 = vpack.c.bf16 %v1737, %v1736
      %v1744 = vpack.c.bf16 %v1739, %v1738
      %v1745 = vpack.c.bf16 %v1740, %v1740
      %s1746 = scalar_lea.vmem %s5, 16
      %v1747 = vld [vmem:[%s1746] sm:$0xf]
      %v1749 = vsel %vm1247, %v1741, 0
      %v1752 = vsel %vm1247, %v1742, 0
      %v1755 = vsel %vm1247, %v1743, 0
      %v1758 = vsel %vm1247, %v1744, 0
      %v1761 = vsel %vm1247, %v1745, 0
      %v1764 = vsel %vm1336, %v1747, 0
      %1766 = vmatprep.subr.bf16.mxu0 0
      %1767 = vmatpush1.bf16.msra.mxu0 %v1764
      %1768 = vmatprep.subr.bf16.mxu0 0
      %1769 = vmatpush1.bf16.msra.mxu0 0
      %1770 = vmatprep.subr.bf16.mxu0 0
      %1771 = vmatpush1.bf16.msra.mxu0 0
      %1772 = vmatprep.subr.bf16.mxu0 0
      %1773 = vmatpush1.bf16.msra.mxu0 0
      %1774 = vmatprep.subr.bf16.mxu0 0
      %1775 = vmatpush1.bf16.msra.mxu0 0
      %1776 = vmatprep.subr.bf16.mxu0 0
      %1777 = vmatpush1.bf16.msra.mxu0 0
      %1778 = vmatprep.subr.bf16.mxu0 0
      %1779 = vmatpush1.bf16.msra.mxu0 0
      %1780 = vmatprep.subr.bf16.mxu0 0
      %1781 = vmatpush1.bf16.msra.mxu0 0
      %1782 = vmatprep.subr.bf16.mxu0 0
      %1783 = vmatpush1.bf16.msra.mxu0 0
      %1784 = vmatprep.subr.bf16.mxu0 0
      %1785 = vmatpush1.bf16.msra.mxu0 0
      %1786 = vmatprep.subr.bf16.mxu0 0
      %1787 = vmatpush1.bf16.msra.mxu0 0
      %1788 = vmatprep.subr.bf16.mxu0 0
      %1789 = vmatpush1.bf16.msra.mxu0 0
      %1790 = vmatprep.subr.bf16.mxu0 0
      %1791 = vmatpush1.bf16.msra.mxu0 0
      %1792 = vmatprep.subr.bf16.mxu0 0
      %1793 = vmatpush1.bf16.msra.mxu0 0
      %1794 = vmatprep.subr.bf16.mxu0 0
      %1795 = vmatpush1.bf16.msra.mxu0 0
      %1796 = vmatprep.subr.bf16.mxu0 0
      %1797 = vmatpush1.bf16.msra.mxu0 0
      %1798 = vmatprep.mubr.bf16.mxu0 0
      %1799 = vmatmul.mubr.bf16.gmra.mrb[0].mxu0 %v1749
      %v1800 = vpop.f32.mrb[0].mxu0
      %v1801 = vadd.f32 0.0, %v1800
      %v1802 = vpop.f32.mrb[0].mxu0
      %v1803 = vpop.f32.mrb[0].mxu0
      %v1804 = vadd.f32 0.0, %v1803
      %v1805 = vpop.f32.mrb[0].mxu0
      %1806 = vmatprep.mubr.bf16.mxu0 0
      %1807 = vmatmul.mubr.bf16.gmra.mrb[0].mxu0 %v1752
      %v1808 = vpop.f32.mrb[0].mxu0
      %v1809 = vadd.f32 0.0, %v1808
      %v1810 = vpop.f32.mrb[0].mxu0
      %v1811 = vpop.f32.mrb[0].mxu0
      %v1812 = vadd.f32 0.0, %v1811
      %v1813 = vpop.f32.mrb[0].mxu0
      %1814 = vmatprep.mubr.bf16.mxu0 0
      %1815 = vmatmul.mubr.bf16.gmra.mrb[0].mxu0 %v1755
      %v1816 = vpop.f32.mrb[0].mxu0
      %v1817 = vadd.f32 0.0, %v1816
      %v1818 = vpop.f32.mrb[0].mxu0
      %v1819 = vpop.f32.mrb[0].mxu0
      %v1820 = vadd.f32 0.0, %v1819
      %v1821 = vpop.f32.mrb[0].mxu0
      %1822 = vmatprep.mubr.bf16.mxu0 0
      %1823 = vmatmul.mubr.bf16.gmra.mrb[0].mxu0 %v1758
      %v1824 = vpop.f32.mrb[0].mxu0
      %v1825 = vadd.f32 0.0, %v1824
      %v1826 = vpop.f32.mrb[0].mxu0
      %v1827 = vpop.f32.mrb[0].mxu0
      %v1828 = vadd.f32 0.0, %v1827
      %v1829 = vpop.f32.mrb[0].mxu0
      %1830 = vmatprep.mubr.bf16.mxu0 0
      %1831 = vmatmul.mubr.bf16.gmra.mrb[0].mxu0 %v1761
      %v1832 = vpop.f32.mrb[0].mxu0
      %v1833 = vadd.f32 0.0, %v1832
      %v1834 = vpop.f32.mrb[0].mxu0
      %v1835 = vpop.f32.mrb[0].mxu0
      %v1836 = vpop.f32.mrb[0].mxu0
      %1837 = vdwg.mxu0
      %v1838 = vadd.f32 %v1723, %v1801
      %v1839 = vadd.f32 %v1724, %v1804
      %v1840 = vadd.f32 %v1725, %v1809
      %v1841 = vadd.f32 %v1726, %v1812
      %v1842 = vadd.f32 %v1727, %v1817
      %v1843 = vadd.f32 %v1728, %v1820
      %v1844 = vadd.f32 %v1729, %v1825
      %v1845 = vadd.f32 %v1730, %v1828
      %v1846 = vadd.f32 %v1731, %v1833
      %v1847 = vld [vmem:[#allocation2 + $0xa3] sm:$0xff]
      %v1848 = vld [vmem:[#allocation2 + $0xab] sm:$0xff]
      %v1849 = vld [vmem:[#allocation2 + $0xb3] sm:$0xff]
      %v1850 = vld [vmem:[#allocation2 + $0xbb] sm:$0xff]
      %v1851 = vld [vmem:[#allocation2 + $0xc3] sm:$0xff]
      %v1852 = vld [vmem:[#allocation2 + $0xcb] sm:$0xff]
      %v1853 = vld [vmem:[#allocation2 + $0xd3] sm:$0xff]
      %v1854 = vld [vmem:[#allocation2 + $0xdb] sm:$0xff]
      %v1855 = vld [vmem:[#allocation2 + $0xe3] sm:$0x7f]
      %v1856 = vpack.c.bf16 %v1848, %v1847
      %v1857 = vpack.c.bf16 %v1850, %v1849
      %v1858 = vpack.c.bf16 %v1852, %v1851
      %v1859 = vpack.c.bf16 %v1854, %v1853
      %v1860 = vpack.c.bf16 %v1855, %v1855
      %s1861 = scalar_lea.vmem %s5, 20
      %v1862 = vld [vmem:[%s1861] sm:$0xf]
      %v1864 = vsel %vm1247, %v1856, 0
      %v1867 = vsel %vm1247, %v1857, 0
      %v1870 = vsel %vm1247, %v1858, 0
      %v1873 = vsel %vm1247, %v1859, 0
      %v1876 = vsel %vm1247, %v1860, 0
      %v1879 = vsel %vm1336, %v1862, 0
      %1881 = vmatprep.subr.bf16.mxu0 0
      %1882 = vmatpush1.bf16.msra.mxu0 %v1879
      %1883 = vmatprep.subr.bf16.mxu0 0
      %1884 = vmatpush1.bf16.msra.mxu0 0
      %1885 = vmatprep.subr.bf16.mxu0 0
      %1886 = vmatpush1.bf16.msra.mxu0 0
      %1887 = vmatprep.subr.bf16.mxu0 0
      %1888 = vmatpush1.bf16.msra.mxu0 0
      %1889 = vmatprep.subr.bf16.mxu0 0
      %1890 = vmatpush1.bf16.msra.mxu0 0
      %1891 = vmatprep.subr.bf16.mxu0 0
      %1892 = vmatpush1.bf16.msra.mxu0 0
      %1893 = vmatprep.subr.bf16.mxu0 0
      %1894 = vmatpush1.bf16.msra.mxu0 0
      %1895 = vmatprep.subr.bf16.mxu0 0
      %1896 = vmatpush1.bf16.msra.mxu0 0
      %1897 = vmatprep.subr.bf16.mxu0 0
      %1898 = vmatpush1.bf16.msra.mxu0 0
      %1899 = vmatprep.subr.bf16.mxu0 0
      %1900 = vmatpush1.bf16.msra.mxu0 0
      %1901 = vmatprep.subr.bf16.mxu0 0
      %1902 = vmatpush1.bf16.msra.mxu0 0
      %1903 = vmatprep.subr.bf16.mxu0 0
      %1904 = vmatpush1.bf16.msra.mxu0 0
      %1905 = vmatprep.subr.bf16.mxu0 0
      %1906 = vmatpush1.bf16.msra.mxu0 0
      %1907 = vmatprep.subr.bf16.mxu0 0
      %1908 = vmatpush1.bf16.msra.mxu0 0
      %1909 = vmatprep.subr.bf16.mxu0 0
      %1910 = vmatpush1.bf16.msra.mxu0 0
      %1911 = vmatprep.subr.bf16.mxu0 0
      %1912 = vmatpush1.bf16.msra.mxu0 0
      %1913 = vmatprep.mubr.bf16.mxu0 0
      %1914 = vmatmul.mubr.bf16.gmra.mrb[0].mxu0 %v1864
      %v1915 = vpop.f32.mrb[0].mxu0
      %v1916 = vadd.f32 0.0, %v1915
      %v1917 = vpop.f32.mrb[0].mxu0
      %v1918 = vpop.f32.mrb[0].mxu0
      %v1919 = vadd.f32 0.0, %v1918
      %v1920 = vpop.f32.mrb[0].mxu0
      %1921 = vmatprep.mubr.bf16.mxu0 0
      %1922 = vmatmul.mubr.bf16.gmra.mrb[0].mxu0 %v1867
      %v1923 = vpop.f32.mrb[0].mxu0
      %v1924 = vadd.f32 0.0, %v1923
      %v1925 = vpop.f32.mrb[0].mxu0
      %v1926 = vpop.f32.mrb[0].mxu0
      %v1927 = vadd.f32 0.0, %v1926
      %v1928 = vpop.f32.mrb[0].mxu0
      %1929 = vmatprep.mubr.bf16.mxu0 0
      %1930 = vmatmul.mubr.bf16.gmra.mrb[0].mxu0 %v1870
      %v1931 = vpop.f32.mrb[0].mxu0
      %v1932 = vadd.f32 0.0, %v1931
      %v1933 = vpop.f32.mrb[0].mxu0
      %v1934 = vpop.f32.mrb[0].mxu0
      %v1935 = vadd.f32 0.0, %v1934
      %v1936 = vpop.f32.mrb[0].mxu0
      %1937 = vmatprep.mubr.bf16.mxu0 0
      %1938 = vmatmul.mubr.bf16.gmra.mrb[0].mxu0 %v1873
      %v1939 = vpop.f32.mrb[0].mxu0
      %v1940 = vadd.f32 0.0, %v1939
      %v1941 = vpop.f32.mrb[0].mxu0
      %v1942 = vpop.f32.mrb[0].mxu0
      %v1943 = vadd.f32 0.0, %v1942
      %v1944 = vpop.f32.mrb[0].mxu0
      %1945 = vmatprep.mubr.bf16.mxu0 0
      %1946 = vmatmul.mubr.bf16.gmra.mrb[0].mxu0 %v1876
      %v1947 = vpop.f32.mrb[0].mxu0
      %v1948 = vadd.f32 0.0, %v1947
      %v1949 = vpop.f32.mrb[0].mxu0
      %v1950 = vpop.f32.mrb[0].mxu0
      %v1951 = vpop.f32.mrb[0].mxu0
      %1952 = vdwg.mxu0
      %v1953 = vadd.f32 %v1838, %v1916
      %v1954 = vadd.f32 %v1839, %v1919
      %v1955 = vadd.f32 %v1840, %v1924
      %v1956 = vadd.f32 %v1841, %v1927
      %v1957 = vadd.f32 %v1842, %v1932
      %v1958 = vadd.f32 %v1843, %v1935
      %v1959 = vadd.f32 %v1844, %v1940
      %v1960 = vadd.f32 %v1845, %v1943
      %v1961 = vadd.f32 %v1846, %v1948
      %v1962 = vld [vmem:[#allocation2 + $0x9] sm:$0xff]
      %v1963 = vld [vmem:[#allocation2 + $0x11] sm:$0xff]
      %v1964 = vld [vmem:[#allocation2 + $0x19] sm:$0xff]
      %v1965 = vld [vmem:[#allocation2 + $0x21] sm:$0xff]
      %v1966 = vld [vmem:[#allocation2 + $0x29] sm:$0xff]
      %v1967 = vld [vmem:[#allocation2 + $0x31] sm:$0xff]
      %v1968 = vld [vmem:[#allocation2 + $0x39] sm:$0xff]
      %v1969 = vld [vmem:[#allocation2 + $0x41] sm:$0xff]
      %v1970 = vld [vmem:[#allocation2 + $0x49] sm:$0x7f]
      %v1971 = vpack.c.bf16 %v1963, %v1962
      %v1972 = vpack.c.bf16 %v1965, %v1964
      %v1973 = vpack.c.bf16 %v1967, %v1966
      %v1974 = vpack.c.bf16 %v1969, %v1968
      %v1975 = vpack.c.bf16 %v1970, %v1970
      %s1976 = scalar_lea.vmem %s5, 24
      %v1977 = vld [vmem:[%s1976] sm:$0xf]
      %v1979 = vsel %vm1247, %v1971, 0
      %v1982 = vsel %vm1247, %v1972, 0
      %v1985 = vsel %vm1247, %v1973, 0
      %v1988 = vsel %vm1247, %v1974, 0
      %v1991 = vsel %vm1247, %v1975, 0
      %v1994 = vsel %vm1336, %v1977, 0
      %1996 = vmatprep.subr.bf16.mxu0 0
      %1997 = vmatpush1.bf16.msra.mxu0 %v1994
      %1998 = vmatprep.subr.bf16.mxu0 0
      %1999 = vmatpush1.bf16.msra.mxu0 0
      %2000 = vmatprep.subr.bf16.mxu0 0
      %2001 = vmatpush1.bf16.msra.mxu0 0
      %2002 = vmatprep.subr.bf16.mxu0 0
      %2003 = vmatpush1.bf16.msra.mxu0 0
      %2004 = vmatprep.subr.bf16.mxu0 0
      %2005 = vmatpush1.bf16.msra.mxu0 0
      %2006 = vmatprep.subr.bf16.mxu0 0
      %2007 = vmatpush1.bf16.msra.mxu0 0
      %2008 = vmatprep.subr.bf16.mxu0 0
      %2009 = vmatpush1.bf16.msra.mxu0 0
      %2010 = vmatprep.subr.bf16.mxu0 0
      %2011 = vmatpush1.bf16.msra.mxu0 0
      %2012 = vmatprep.subr.bf16.mxu0 0
      %2013 = vmatpush1.bf16.msra.mxu0 0
      %2014 = vmatprep.subr.bf16.mxu0 0
      %2015 = vmatpush1.bf16.msra.mxu0 0
      %2016 = vmatprep.subr.bf16.mxu0 0
      %2017 = vmatpush1.bf16.msra.mxu0 0
      %2018 = vmatprep.subr.bf16.mxu0 0
      %2019 = vmatpush1.bf16.msra.mxu0 0
      %2020 = vmatprep.subr.bf16.mxu0 0
      %2021 = vmatpush1.bf16.msra.mxu0 0
      %2022 = vmatprep.subr.bf16.mxu0 0
      %2023 = vmatpush1.bf16.msra.mxu0 0
      %2024 = vmatprep.subr.bf16.mxu0 0
      %2025 = vmatpush1.bf16.msra.mxu0 0
      %2026 = vmatprep.subr.bf16.mxu0 0
      %2027 = vmatpush1.bf16.msra.mxu0 0
      %2028 = vmatprep.mubr.bf16.mxu0 0
      %2029 = vmatmul.mubr.bf16.gmra.mrb[0].mxu0 %v1979
      %v2030 = vpop.f32.mrb[0].mxu0
      %v2031 = vadd.f32 0.0, %v2030
      %v2032 = vpop.f32.mrb[0].mxu0
      %v2033 = vpop.f32.mrb[0].mxu0
      %v2034 = vadd.f32 0.0, %v2033
      %v2035 = vpop.f32.mrb[0].mxu0
      %2036 = vmatprep.mubr.bf16.mxu0 0
      %2037 = vmatmul.mubr.bf16.gmra.mrb[0].mxu0 %v1982
      %v2038 = vpop.f32.mrb[0].mxu0
      %v2039 = vadd.f32 0.0, %v2038
      %v2040 = vpop.f32.mrb[0].mxu0
      %v2041 = vpop.f32.mrb[0].mxu0
      %v2042 = vadd.f32 0.0, %v2041
      %v2043 = vpop.f32.mrb[0].mxu0
      %2044 = vmatprep.mubr.bf16.mxu0 0
      %2045 = vmatmul.mubr.bf16.gmra.mrb[0].mxu0 %v1985
      %v2046 = vpop.f32.mrb[0].mxu0
      %v2047 = vadd.f32 0.0, %v2046
      %v2048 = vpop.f32.mrb[0].mxu0
      %v2049 = vpop.f32.mrb[0].mxu0
      %v2050 = vadd.f32 0.0, %v2049
      %v2051 = vpop.f32.mrb[0].mxu0
      %2052 = vmatprep.mubr.bf16.mxu0 0
      %2053 = vmatmul.mubr.bf16.gmra.mrb[0].mxu0 %v1988
      %v2054 = vpop.f32.mrb[0].mxu0
      %v2055 = vadd.f32 0.0, %v2054
      %v2056 = vpop.f32.mrb[0].mxu0
      %v2057 = vpop.f32.mrb[0].mxu0
      %v2058 = vadd.f32 0.0, %v2057
      %v2059 = vpop.f32.mrb[0].mxu0
      %2060 = vmatprep.mubr.bf16.mxu0 0
      %2061 = vmatmul.mubr.bf16.gmra.mrb[0].mxu0 %v1991
      %v2062 = vpop.f32.mrb[0].mxu0
      %v2063 = vadd.f32 0.0, %v2062
      %v2064 = vpop.f32.mrb[0].mxu0
      %v2065 = vpop.f32.mrb[0].mxu0
      %v2066 = vpop.f32.mrb[0].mxu0
      %2067 = vdwg.mxu0
      %v2068 = vadd.f32 %v1953, %v2031
      %v2069 = vadd.f32 %v1954, %v2034
      %v2070 = vadd.f32 %v1955, %v2039
      %v2071 = vadd.f32 %v1956, %v2042
      %v2072 = vadd.f32 %v1957, %v2047
      %v2073 = vadd.f32 %v1958, %v2050
      %v2074 = vadd.f32 %v1959, %v2055
      %v2075 = vadd.f32 %v1960, %v2058
      %v2076 = vadd.f32 %v1961, %v2063
      %v2077 = vld [vmem:[#allocation2 + $0x5a] sm:$0xff]
      %v2078 = vld [vmem:[#allocation2 + $0x62] sm:$0xff]
      %v2079 = vld [vmem:[#allocation2 + $0x6a] sm:$0xff]
      %v2080 = vld [vmem:[#allocation2 + $0x72] sm:$0xff]
      %v2081 = vld [vmem:[#allocation2 + $0x7a] sm:$0xff]
      %v2082 = vld [vmem:[#allocation2 + $0x82] sm:$0xff]
      %v2083 = vld [vmem:[#allocation2 + $0x8a] sm:$0xff]
      %v2084 = vld [vmem:[#allocation2 + $0x92] sm:$0xff]
      %v2085 = vld [vmem:[#allocation2 + $0x9a] sm:$0x7f]
      %v2086 = vpack.c.bf16 %v2078, %v2077
      %v2087 = vpack.c.bf16 %v2080, %v2079
      %v2088 = vpack.c.bf16 %v2082, %v2081
      %v2089 = vpack.c.bf16 %v2084, %v2083
      %v2090 = vpack.c.bf16 %v2085, %v2085
      %s2091 = scalar_lea.vmem %s5, 28
      %v2092 = vld [vmem:[%s2091] sm:$0xf]
      %v2094 = vsel %vm1247, %v2086, 0
      %v2097 = vsel %vm1247, %v2087, 0
      %v2100 = vsel %vm1247, %v2088, 0
      %v2103 = vsel %vm1247, %v2089, 0
      %v2106 = vsel %vm1247, %v2090, 0
      %v2109 = vsel %vm1336, %v2092, 0
      %2111 = vmatprep.subr.bf16.mxu0 0
      %2112 = vmatpush1.bf16.msra.mxu0 %v2109
      %2113 = vmatprep.subr.bf16.mxu0 0
      %2114 = vmatpush1.bf16.msra.mxu0 0
      %2115 = vmatprep.subr.bf16.mxu0 0
      %2116 = vmatpush1.bf16.msra.mxu0 0
      %2117 = vmatprep.subr.bf16.mxu0 0
      %2118 = vmatpush1.bf16.msra.mxu0 0
      %2119 = vmatprep.subr.bf16.mxu0 0
      %2120 = vmatpush1.bf16.msra.mxu0 0
      %2121 = vmatprep.subr.bf16.mxu0 0
      %2122 = vmatpush1.bf16.msra.mxu0 0
      %2123 = vmatprep.subr.bf16.mxu0 0
      %2124 = vmatpush1.bf16.msra.mxu0 0
      %2125 = vmatprep.subr.bf16.mxu0 0
      %2126 = vmatpush1.bf16.msra.mxu0 0
      %2127 = vmatprep.subr.bf16.mxu0 0
      %2128 = vmatpush1.bf16.msra.mxu0 0
      %2129 = vmatprep.subr.bf16.mxu0 0
      %2130 = vmatpush1.bf16.msra.mxu0 0
      %2131 = vmatprep.subr.bf16.mxu0 0
      %2132 = vmatpush1.bf16.msra.mxu0 0
      %2133 = vmatprep.subr.bf16.mxu0 0
      %2134 = vmatpush1.bf16.msra.mxu0 0
      %2135 = vmatprep.subr.bf16.mxu0 0
      %2136 = vmatpush1.bf16.msra.mxu0 0
      %2137 = vmatprep.subr.bf16.mxu0 0
      %2138 = vmatpush1.bf16.msra.mxu0 0
      %2139 = vmatprep.subr.bf16.mxu0 0
      %2140 = vmatpush1.bf16.msra.mxu0 0
      %2141 = vmatprep.subr.bf16.mxu0 0
      %2142 = vmatpush1.bf16.msra.mxu0 0
      %2143 = vmatprep.mubr.bf16.mxu0 0
      %2144 = vmatmul.mubr.bf16.gmra.mrb[0].mxu0 %v2094
      %v2145 = vpop.f32.mrb[0].mxu0
      %v2146 = vadd.f32 0.0, %v2145
      %v2147 = vpop.f32.mrb[0].mxu0
      %v2148 = vpop.f32.mrb[0].mxu0
      %v2149 = vadd.f32 0.0, %v2148
      %v2150 = vpop.f32.mrb[0].mxu0
      %2151 = vmatprep.mubr.bf16.mxu0 0
      %2152 = vmatmul.mubr.bf16.gmra.mrb[0].mxu0 %v2097
      %v2153 = vpop.f32.mrb[0].mxu0
      %v2154 = vadd.f32 0.0, %v2153
      %v2155 = vpop.f32.mrb[0].mxu0
      %v2156 = vpop.f32.mrb[0].mxu0
      %v2157 = vadd.f32 0.0, %v2156
      %v2158 = vpop.f32.mrb[0].mxu0
      %2159 = vmatprep.mubr.bf16.mxu0 0
      %2160 = vmatmul.mubr.bf16.gmra.mrb[0].mxu0 %v2100
      %v2161 = vpop.f32.mrb[0].mxu0
      %v2162 = vadd.f32 0.0, %v2161
      %v2163 = vpop.f32.mrb[0].mxu0
      %v2164 = vpop.f32.mrb[0].mxu0
      %v2165 = vadd.f32 0.0, %v2164
      %v2166 = vpop.f32.mrb[0].mxu0
      %2167 = vmatprep.mubr.bf16.mxu0 0
      %2168 = vmatmul.mubr.bf16.gmra.mrb[0].mxu0 %v2103
      %v2169 = vpop.f32.mrb[0].mxu0
      %v2170 = vadd.f32 0.0, %v2169
      %v2171 = vpop.f32.mrb[0].mxu0
      %v2172 = vpop.f32.mrb[0].mxu0
      %v2173 = vadd.f32 0.0, %v2172
      %v2174 = vpop.f32.mrb[0].mxu0
      %2175 = vmatprep.mubr.bf16.mxu0 0
      %2176 = vmatmul.mubr.bf16.gmra.mrb[0].mxu0 %v2106
      %v2177 = vpop.f32.mrb[0].mxu0
      %v2178 = vadd.f32 0.0, %v2177
      %v2179 = vpop.f32.mrb[0].mxu0
      %v2180 = vpop.f32.mrb[0].mxu0
      %v2181 = vpop.f32.mrb[0].mxu0
      %2182 = vdwg.mxu0
      %v2183 = vadd.f32 %v2068, %v2146
      %v2184 = vadd.f32 %v2069, %v2149
      %v2185 = vadd.f32 %v2070, %v2154
      %v2186 = vadd.f32 %v2071, %v2157
      %v2187 = vadd.f32 %v2072, %v2162
      %v2188 = vadd.f32 %v2073, %v2165
      %v2189 = vadd.f32 %v2074, %v2170
      %v2190 = vadd.f32 %v2075, %v2173
      %v2191 = vadd.f32 %v2076, %v2178
      %v2192 = vld [vmem:[#allocation2 + $0xa] sm:$0xff]
      %v2193 = vld [vmem:[#allocation2 + $0x12] sm:$0xff]
      %v2194 = vld [vmem:[#allocation2 + $0x1a] sm:$0xff]
      %v2195 = vld [vmem:[#allocation2 + $0x22] sm:$0xff]
      %v2196 = vld [vmem:[#allocation2 + $0x2a] sm:$0xff]
      %v2197 = vld [vmem:[#allocation2 + $0x32] sm:$0xff]
      %v2198 = vld [vmem:[#allocation2 + $0x3a] sm:$0xff]
      %v2199 = vld [vmem:[#allocation2 + $0x42] sm:$0xff]
      %v2200 = vld [vmem:[#allocation2 + $0x4a] sm:$0x7f]
      %v2201 = vpack.c.bf16 %v2193, %v2192
      %v2202 = vpack.c.bf16 %v2195, %v2194
      %v2203 = vpack.c.bf16 %v2197, %v2196
      %v2204 = vpack.c.bf16 %v2199, %v2198
      %v2205 = vpack.c.bf16 %v2200, %v2200
      %s2206 = scalar_lea.vmem %s5, 32
      %v2207 = vld [vmem:[%s2206] sm:$0xf]
      %v2209 = vsel %vm1247, %v2201, 0
      %v2212 = vsel %vm1247, %v2202, 0
      %v2215 = vsel %vm1247, %v2203, 0
      %v2218 = vsel %vm1247, %v2204, 0
      %v2221 = vsel %vm1247, %v2205, 0
      %v2224 = vsel %vm1336, %v2207, 0
      %2226 = vmatprep.subr.bf16.mxu0 0
      %2227 = vmatpush1.bf16.msra.mxu0 %v2224
      %2228 = vmatprep.subr.bf16.mxu0 0
      %2229 = vmatpush1.bf16.msra.mxu0 0
      %2230 = vmatprep.subr.bf16.mxu0 0
      %2231 = vmatpush1.bf16.msra.mxu0 0
      %2232 = vmatprep.subr.bf16.mxu0 0
      %2233 = vmatpush1.bf16.msra.mxu0 0
      %2234 = vmatprep.subr.bf16.mxu0 0
      %2235 = vmatpush1.bf16.msra.mxu0 0
      %2236 = vmatprep.subr.bf16.mxu0 0
      %2237 = vmatpush1.bf16.msra.mxu0 0
      %2238 = vmatprep.subr.bf16.mxu0 0
      %2239 = vmatpush1.bf16.msra.mxu0 0
      %2240 = vmatprep.subr.bf16.mxu0 0
      %2241 = vmatpush1.bf16.msra.mxu0 0
      %2242 = vmatprep.subr.bf16.mxu0 0
      %2243 = vmatpush1.bf16.msra.mxu0 0
      %2244 = vmatprep.subr.bf16.mxu0 0
      %2245 = vmatpush1.bf16.msra.mxu0 0
      %2246 = vmatprep.subr.bf16.mxu0 0
      %2247 = vmatpush1.bf16.msra.mxu0 0
      %2248 = vmatprep.subr.bf16.mxu0 0
      %2249 = vmatpush1.bf16.msra.mxu0 0
      %2250 = vmatprep.subr.bf16.mxu0 0
      %2251 = vmatpush1.bf16.msra.mxu0 0
      %2252 = vmatprep.subr.bf16.mxu0 0
      %2253 = vmatpush1.bf16.msra.mxu0 0
      %2254 = vmatprep.subr.bf16.mxu0 0
      %2255 = vmatpush1.bf16.msra.mxu0 0
      %2256 = vmatprep.subr.bf16.mxu0 0
      %2257 = vmatpush1.bf16.msra.mxu0 0
      %2258 = vmatprep.mubr.bf16.mxu0 0
      %2259 = vmatmul.mubr.bf16.gmra.mrb[0].mxu0 %v2209
      %v2260 = vpop.f32.mrb[0].mxu0
      %v2261 = vadd.f32 0.0, %v2260
      %v2262 = vpop.f32.mrb[0].mxu0
      %v2263 = vpop.f32.mrb[0].mxu0
      %v2264 = vadd.f32 0.0, %v2263
      %v2265 = vpop.f32.mrb[0].mxu0
      %2266 = vmatprep.mubr.bf16.mxu0 0
      %2267 = vmatmul.mubr.bf16.gmra.mrb[0].mxu0 %v2212
      %v2268 = vpop.f32.mrb[0].mxu0
      %v2269 = vadd.f32 0.0, %v2268
      %v2270 = vpop.f32.mrb[0].mxu0
      %v2271 = vpop.f32.mrb[0].mxu0
      %v2272 = vadd.f32 0.0, %v2271
      %v2273 = vpop.f32.mrb[0].mxu0
      %2274 = vmatprep.mubr.bf16.mxu0 0
      %2275 = vmatmul.mubr.bf16.gmra.mrb[0].mxu0 %v2215
      %v2276 = vpop.f32.mrb[0].mxu0
      %v2277 = vadd.f32 0.0, %v2276
      %v2278 = vpop.f32.mrb[0].mxu0
      %v2279 = vpop.f32.mrb[0].mxu0
      %v2280 = vadd.f32 0.0, %v2279
      %v2281 = vpop.f32.mrb[0].mxu0
      %2282 = vmatprep.mubr.bf16.mxu0 0
      %2283 = vmatmul.mubr.bf16.gmra.mrb[0].mxu0 %v2218
      %v2284 = vpop.f32.mrb[0].mxu0
      %v2285 = vadd.f32 0.0, %v2284
      %v2286 = vpop.f32.mrb[0].mxu0
      %v2287 = vpop.f32.mrb[0].mxu0
      %v2288 = vadd.f32 0.0, %v2287
      %v2289 = vpop.f32.mrb[0].mxu0
      %2290 = vmatprep.mubr.bf16.mxu0 0
      %2291 = vmatmul.mubr.bf16.gmra.mrb[0].mxu0 %v2221
      %v2292 = vpop.f32.mrb[0].mxu0
      %v2293 = vadd.f32 0.0, %v2292
      %v2294 = vpop.f32.mrb[0].mxu0
      %v2295 = vpop.f32.mrb[0].mxu0
      %v2296 = vpop.f32.mrb[0].mxu0
      %2297 = vdwg.mxu0
      %v2298 = vadd.f32 %v2183, %v2261
      %v2299 = vadd.f32 %v2184, %v2264
      %v2300 = vadd.f32 %v2185, %v2269
      %v2301 = vadd.f32 %v2186, %v2272
      %v2302 = vadd.f32 %v2187, %v2277
      %v2303 = vadd.f32 %v2188, %v2280
      %v2304 = vadd.f32 %v2189, %v2285
      %v2305 = vadd.f32 %v2190, %v2288
      %v2306 = vadd.f32 %v2191, %v2293
      %v2307 = vld [vmem:[%s6] sm:$0x1]
      %v2309 = vlaneseq
      %v2310 = vshrl.u32 %v2309, 7
      %v2311 = vsub.s32 0, %v2310
      %v2312 = vrot.slane %v2307, %v2311
      %v2314 = vadd.f32 %v2298, %v2312
      %v2315 = vadd.f32 %v2299, %v2312
      %v2316 = vadd.f32 %v2300, %v2312
      %v2317 = vadd.f32 %v2301, %v2312
      %v2318 = vadd.f32 %v2302, %v2312
      %v2319 = vadd.f32 %v2303, %v2312
      %v2320 = vadd.f32 %v2304, %v2312
      %v2321 = vadd.f32 %v2305, %v2312
      %v2322 = vadd.f32 %v2306, %v2312
      %v2323 = vmax.f32 %v2314, 0.0
      %v2324 = vmax.f32 %v2315, 0.0
      %v2325 = vmax.f32 %v2316, 0.0
      %v2326 = vmax.f32 %v2317, 0.0
      %v2327 = vmax.f32 %v2318, 0.0
      %v2328 = vmax.f32 %v2319, 0.0
      %v2329 = vmax.f32 %v2320, 0.0
      %v2330 = vmax.f32 %v2321, 0.0
      %v2331 = vmax.f32 %v2322, 0.0
      %v2332 = vpack.c.bf16 %v2324, %v2323
      %v2333 = vpack.c.bf16 %v2326, %v2325
      %v2334 = vpack.c.bf16 %v2328, %v2327
      %v2335 = vpack.c.bf16 %v2330, %v2329
      %v2336 = vpack.c.bf16 %v2331, %v2331
      %v2337 = vld [vmem:[%s7] sm:$0xf]
      %v2338 = vld [vmem:[%s8] sm:$0x1]
      %v2340 = vlaneseq
      %v2341 = vshrl.u32 %v2340, 7
      %v2342 = vsub.s32 0, %v2341
      %v2343 = vrot.slane %v2338, %v2342
      %v2346 = vsel %vm1247, %v2332, 0
      %v2349 = vsel %vm1247, %v2333, 0
      %v2352 = vsel %vm1247, %v2334, 0
      %v2355 = vsel %vm1247, %v2335, 0
      %v2358 = vsel %vm1247, %v2336, 0
      %v2361 = vsel %vm1336, %v2337, 0
      %2363 = vmatprep.subr.bf16.mxu0 0
      %2364 = vmatpush1.bf16.msra.mxu0 %v2361
      %2365 = vmatprep.subr.bf16.mxu0 0
      %2366 = vmatpush1.bf16.msra.mxu0 0
      %2367 = vmatprep.subr.bf16.mxu0 0
      %2368 = vmatpush1.bf16.msra.mxu0 0
      %2369 = vmatprep.subr.bf16.mxu0 0
      %2370 = vmatpush1.bf16.msra.mxu0 0
      %2371 = vmatprep.subr.bf16.mxu0 0
      %2372 = vmatpush1.bf16.msra.mxu0 0
      %2373 = vmatprep.subr.bf16.mxu0 0
      %2374 = vmatpush1.bf16.msra.mxu0 0
      %2375 = vmatprep.subr.bf16.mxu0 0
      %2376 = vmatpush1.bf16.msra.mxu0 0
      %2377 = vmatprep.subr.bf16.mxu0 0
      %2378 = vmatpush1.bf16.msra.mxu0 0
      %2379 = vmatprep.subr.bf16.mxu0 0
      %2380 = vmatpush1.bf16.msra.mxu0 0
      %2381 = vmatprep.subr.bf16.mxu0 0
      %2382 = vmatpush1.bf16.msra.mxu0 0
      %2383 = vmatprep.subr.bf16.mxu0 0
      %2384 = vmatpush1.bf16.msra.mxu0 0
      %2385 = vmatprep.subr.bf16.mxu0 0
      %2386 = vmatpush1.bf16.msra.mxu0 0
      %2387 = vmatprep.subr.bf16.mxu0 0
      %2388 = vmatpush1.bf16.msra.mxu0 0
      %2389 = vmatprep.subr.bf16.mxu0 0
      %2390 = vmatpush1.bf16.msra.mxu0 0
      %2391 = vmatprep.subr.bf16.mxu0 0
      %2392 = vmatpush1.bf16.msra.mxu0 0
      %2393 = vmatprep.subr.bf16.mxu0 0
      %2394 = vmatpush1.bf16.msra.mxu0 0
      %2395 = vmatprep.mubr.bf16.mxu0 0
      %2396 = vmatmul.mubr.bf16.gmra.mrb[0].mxu0 %v2346
      %v2397 = vpop.f32.mrb[0].mxu0
      %v2398 = vadd.f32 %v2343, %v2397
      %v2399 = vpop.f32.mrb[0].mxu0
      %v2400 = vpop.f32.mrb[0].mxu0
      %v2401 = vadd.f32 %v2343, %v2400
      %v2402 = vpop.f32.mrb[0].mxu0
      %2403 = vmatprep.mubr.bf16.mxu0 0
      %2404 = vmatmul.mubr.bf16.gmra.mrb[0].mxu0 %v2349
      %v2405 = vpop.f32.mrb[0].mxu0
      %v2406 = vadd.f32 %v2343, %v2405
      %v2407 = vpop.f32.mrb[0].mxu0
      %v2408 = vpop.f32.mrb[0].mxu0
      %v2409 = vadd.f32 %v2343, %v2408
      %v2410 = vpop.f32.mrb[0].mxu0
      %2411 = vmatprep.mubr.bf16.mxu0 0
      %2412 = vmatmul.mubr.bf16.gmra.mrb[0].mxu0 %v2352
      %v2413 = vpop.f32.mrb[0].mxu0
      %v2414 = vadd.f32 %v2343, %v2413
      %v2415 = vpop.f32.mrb[0].mxu0
      %v2416 = vpop.f32.mrb[0].mxu0
      %v2417 = vadd.f32 %v2343, %v2416
      %v2418 = vpop.f32.mrb[0].mxu0
      %2419 = vmatprep.mubr.bf16.mxu0 0
      %2420 = vmatmul.mubr.bf16.gmra.mrb[0].mxu0 %v2355
      %v2421 = vpop.f32.mrb[0].mxu0
      %v2422 = vadd.f32 %v2343, %v2421
      %v2423 = vpop.f32.mrb[0].mxu0
      %v2424 = vpop.f32.mrb[0].mxu0
      %v2425 = vadd.f32 %v2343, %v2424
      %v2426 = vpop.f32.mrb[0].mxu0
      %2427 = vmatprep.mubr.bf16.mxu0 0
      %2428 = vmatmul.mubr.bf16.gmra.mrb[0].mxu0 %v2358
      %v2429 = vpop.f32.mrb[0].mxu0
      %v2430 = vadd.f32 %v2343, %v2429
      %v2431 = vpop.f32.mrb[0].mxu0
      %v2432 = vpop.f32.mrb[0].mxu0
      %v2433 = vpop.f32.mrb[0].mxu0
      %2434 = vdwg.mxu0
      %v2435 = vld [vmem:[%s2] sm:$0xff]
      %v2436 = vld [vmem:[%s2 + $0x8] sm:$0xff]
      %v2437 = vld [vmem:[%s2 + $0x10] sm:$0xff]
      %v2438 = vld [vmem:[%s2 + $0x18] sm:$0xff]
      %v2439 = vld [vmem:[%s2 + $0x20] sm:$0xff]
      %v2440 = vld [vmem:[%s2 + $0x28] sm:$0xff]
      %v2441 = vld [vmem:[%s2 + $0x30] sm:$0xff]
      %v2442 = vld [vmem:[%s2 + $0x38] sm:$0xff]
      %v2443 = vld [vmem:[%s2 + $0x40] sm:$0x7f]
      %2445 = vset.pattern.permute.xlu0 0
      %2446 = vperm.xlu0 %2445, %v2435
      %v2447 = vpop.permute.xlu0 %2446
      %2450 = vset.pattern.permute.xlu0 0
      %2451 = vperm.xlu0 %2450, %v2436
      %v2452 = vpop.permute.xlu0 %2451
      %2455 = vset.pattern.permute.xlu0 0
      %2456 = vperm.xlu0 %2455, %v2437
      %v2457 = vpop.permute.xlu0 %2456
      %2460 = vset.pattern.permute.xlu0 0
      %2461 = vperm.xlu0 %2460, %v2438
      %v2462 = vpop.permute.xlu0 %2461
      %2465 = vset.pattern.permute.xlu0 0
      %2466 = vperm.xlu0 %2465, %v2439
      %v2467 = vpop.permute.xlu0 %2466
      %2470 = vset.pattern.permute.xlu0 0
      %2471 = vperm.xlu0 %2470, %v2440
      %v2472 = vpop.permute.xlu0 %2471
      %2475 = vset.pattern.permute.xlu0 0
      %2476 = vperm.xlu0 %2475, %v2441
      %v2477 = vpop.permute.xlu0 %2476
      %2480 = vset.pattern.permute.xlu0 0
      %2481 = vperm.xlu0 %2480, %v2442
      %v2482 = vpop.permute.xlu0 %2481
      %2485 = vset.pattern.permute.xlu0 0
      %2486 = vperm.xlu0 %2485, %v2443
      %v2487 = vpop.permute.xlu0 %2486
      %v2489 = vmul.f32 %v2398, %v2447
      %v2490 = vmul.f32 %v2401, %v2452
      %v2491 = vmul.f32 %v2406, %v2457
      %v2492 = vmul.f32 %v2409, %v2462
      %v2493 = vmul.f32 %v2414, %v2467
      %v2494 = vmul.f32 %v2417, %v2472
      %v2495 = vmul.f32 %v2422, %v2477
      %v2496 = vmul.f32 %v2425, %v2482
      %v2497 = vmul.f32 %v2430, %v2487
      %vm2498 = vcmask 261120
      %v2499 = vsel %vm2498, %v2489, 0.0
      %v2500 = vsel %vm2498, %v2490, 0.0
      %v2501 = vadd.f32 %v2499, %v2500
      %v2502 = vsel %vm2498, %v2491, 0.0
      %v2503 = vadd.f32 %v2501, %v2502
      %v2504 = vsel %vm2498, %v2492, 0.0
      %v2505 = vadd.f32 %v2503, %v2504
      %v2506 = vsel %vm2498, %v2493, 0.0
      %v2507 = vadd.f32 %v2505, %v2506
      %v2508 = vsel %vm2498, %v2494, 0.0
      %v2509 = vadd.f32 %v2507, %v2508
      %v2510 = vsel %vm2498, %v2495, 0.0
      %v2511 = vadd.f32 %v2509, %v2510
      %v2512 = vsel %vm2498, %v2496, 0.0
      %v2513 = vadd.f32 %v2511, %v2512
      %vm2514 = vcmask 260096
      %v2515 = vsel %vm2514, %v2497, 0.0
      %v2516 = vadd.f32 %v2513, %v2515
      %v2517 = vrot.slane %v2516, 4
      %v2518 = vadd.f32 %v2516, %v2517
      %v2519 = vrot.slane %v2518, 2
      %v2520 = vadd.f32 %v2518, %v2519
      %v2521 = vrot.slane %v2520, 1
      %v2522 = vadd.f32 %v2520, %v2521
      %v2523 = vmul.f32 %v2522, 0.015625
      %v2524 = vld [vmem:[%s9] sm:$0xff]
      %v2525 = vld [vmem:[%s9 + $0x8] sm:$0xff]
      %v2526 = vld [vmem:[%s9 + $0x10] sm:$0xff]
      %v2527 = vld [vmem:[%s9 + $0x18] sm:$0xff]
      %v2528 = vld [vmem:[%s10] sm:$0x1]
      %v2530 = vsel %vm2498, %v2523, 0
      %2532 = vmatprep.subr.mxu0 0.0
      %2533 = vmatpush1.msra.mxu0 %v2524
      %2534 = vmatprep.subr.mxu0 0.0
      %2535 = vmatpush1.msra.mxu0 %v2525
      %2536 = vmatprep.subr.mxu0 0.0
      %2537 = vmatpush1.msra.mxu0 %v2526
      %2538 = vmatprep.subr.mxu0 0.0
      %2539 = vmatpush1.msra.mxu0 %v2527
      %2540 = vmatprep.subr.mxu0 0.0
      %2541 = vmatpush1.msra.mxu0 0.0
      %2542 = vmatprep.subr.mxu0 0.0
      %2543 = vmatpush1.msra.mxu0 0.0
      %2544 = vmatprep.subr.mxu0 0.0
      %2545 = vmatpush1.msra.mxu0 0.0
      %2546 = vmatprep.subr.mxu0 0.0
      %2547 = vmatpush1.msra.mxu0 0.0
      %2548 = vmatprep.subr.mxu0 0.0
      %2549 = vmatpush1.msra.mxu0 0.0
      %2550 = vmatprep.subr.mxu0 0.0
      %2551 = vmatpush1.msra.mxu0 0.0
      %2552 = vmatprep.subr.mxu0 0.0
      %2553 = vmatpush1.msra.mxu0 0.0
      %2554 = vmatprep.subr.mxu0 0.0
      %2555 = vmatpush1.msra.mxu0 0.0
      %2556 = vmatprep.subr.mxu0 0.0
      %2557 = vmatpush1.msra.mxu0 0.0
      %2558 = vmatprep.subr.mxu0 0.0
      %2559 = vmatpush1.msra.mxu0 0.0
      %2560 = vmatprep.subr.mxu0 0.0
      %2561 = vmatpush1.msra.mxu0 0.0
      %2562 = vmatprep.subr.mxu0 0.0
      %2563 = vmatpush1.msra.mxu0 0.0
      %2564 = vmatprep.subr.mxu0 0.0
      %2565 = vmatpush1.msra.mxu0 0.0
      %2566 = vmatprep.subr.mxu0 0.0
      %2567 = vmatpush1.msra.mxu0 0.0
      %2568 = vmatprep.subr.mxu0 0.0
      %2569 = vmatpush1.msra.mxu0 0.0
      %2570 = vmatprep.subr.mxu0 0.0
      %2571 = vmatpush1.msra.mxu0 0.0
      %2572 = vmatprep.subr.mxu0 0.0
      %2573 = vmatpush1.msra.mxu0 0.0
      %2574 = vmatprep.subr.mxu0 0.0
      %2575 = vmatpush1.msra.mxu0 0.0
      %2576 = vmatprep.subr.mxu0 0.0
      %2577 = vmatpush1.msra.mxu0 0.0
      %2578 = vmatprep.subr.mxu0 0.0
      %2579 = vmatpush1.msra.mxu0 0.0
      %2580 = vmatprep.subr.mxu0 0.0
      %2581 = vmatpush1.msra.mxu0 0.0
      %2582 = vmatprep.subr.mxu0 0.0
      %2583 = vmatpush1.msra.mxu0 0.0
      %2584 = vmatprep.subr.mxu0 0.0
      %2585 = vmatpush1.msra.mxu0 0.0
      %2586 = vmatprep.subr.mxu0 0.0
      %2587 = vmatpush1.msra.mxu0 0.0
      %2588 = vmatprep.subr.mxu0 0.0
      %2589 = vmatpush1.msra.mxu0 0.0
      %2590 = vmatprep.subr.mxu0 0.0
      %2591 = vmatpush1.msra.mxu0 0.0
      %2592 = vmatprep.subr.mxu0 0.0
      %2593 = vmatpush1.msra.mxu0 0.0
      %2594 = vmatprep.subr.mxu0 0.0
      %2595 = vmatpush1.msra.mxu0 0.0
      %2596 = vmatprep.mubr.f32.mxu0 0.0
      %2597 = vmatmul.mubr.f32.gmra.mrb[0].mxu0 %v2530
      %v2598 = vpop.f32.mrb[0].mxu0
      %v2599 = vadd.f32 %v2528, %v2598
      %v2600 = vpop.f32.mrb[0].mxu0
      %2601 = vdwg.mxu0
      %v2602 = vmax.f32 %v2599, 0.0
      %v2603 = vld [vmem:[%s11] sm:$0x3]
      %v2604 = vld [vmem:[%s12] sm:$0x1]
      %vm2605 = vcmask 15360
      %v2607 = vsel %vm2605, %v2602, 0
      %vm2609 = vcmask 1041408
      %v2611 = vsel %vm2609, %v2603, 0
      %2613 = vmatprep.subr.mxu0 0.0
      %2614 = vmatpush1.msra.mxu0 %v2611
      %2615 = vmatprep.subr.mxu0 0.0
      %2616 = vmatpush1.msra.mxu0 0.0
      %2617 = vmatprep.subr.mxu0 0.0
      %2618 = vmatpush1.msra.mxu0 0.0
      %2619 = vmatprep.subr.mxu0 0.0
      %2620 = vmatpush1.msra.mxu0 0.0
      %2621 = vmatprep.subr.mxu0 0.0
      %2622 = vmatpush1.msra.mxu0 0.0
      %2623 = vmatprep.subr.mxu0 0.0
      %2624 = vmatpush1.msra.mxu0 0.0
      %2625 = vmatprep.subr.mxu0 0.0
      %2626 = vmatpush1.msra.mxu0 0.0
      %2627 = vmatprep.subr.mxu0 0.0
      %2628 = vmatpush1.msra.mxu0 0.0
      %2629 = vmatprep.subr.mxu0 0.0
      %2630 = vmatpush1.msra.mxu0 0.0
      %2631 = vmatprep.subr.mxu0 0.0
      %2632 = vmatpush1.msra.mxu0 0.0
      %2633 = vmatprep.subr.mxu0 0.0
      %2634 = vmatpush1.msra.mxu0 0.0
      %2635 = vmatprep.subr.mxu0 0.0
      %2636 = vmatpush1.msra.mxu0 0.0
      %2637 = vmatprep.subr.mxu0 0.0
      %2638 = vmatpush1.msra.mxu0 0.0
      %2639 = vmatprep.subr.mxu0 0.0
      %2640 = vmatpush1.msra.mxu0 0.0
      %2641 = vmatprep.subr.mxu0 0.0
      %2642 = vmatpush1.msra.mxu0 0.0
      %2643 = vmatprep.subr.mxu0 0.0
      %2644 = vmatpush1.msra.mxu0 0.0
      %2645 = vmatprep.subr.mxu0 0.0
      %2646 = vmatpush1.msra.mxu0 0.0
      %2647 = vmatprep.subr.mxu0 0.0
      %2648 = vmatpush1.msra.mxu0 0.0
      %2649 = vmatprep.subr.mxu0 0.0
      %2650 = vmatpush1.msra.mxu0 0.0
      %2651 = vmatprep.subr.mxu0 0.0
      %2652 = vmatpush1.msra.mxu0 0.0
      %2653 = vmatprep.subr.mxu0 0.0
      %2654 = vmatpush1.msra.mxu0 0.0
      %2655 = vmatprep.subr.mxu0 0.0
      %2656 = vmatpush1.msra.mxu0 0.0
      %2657 = vmatprep.subr.mxu0 0.0
      %2658 = vmatpush1.msra.mxu0 0.0
      %2659 = vmatprep.subr.mxu0 0.0
      %2660 = vmatpush1.msra.mxu0 0.0
      %2661 = vmatprep.subr.mxu0 0.0
      %2662 = vmatpush1.msra.mxu0 0.0
      %2663 = vmatprep.subr.mxu0 0.0
      %2664 = vmatpush1.msra.mxu0 0.0
      %2665 = vmatprep.subr.mxu0 0.0
      %2666 = vmatpush1.msra.mxu0 0.0
      %2667 = vmatprep.subr.mxu0 0.0
      %2668 = vmatpush1.msra.mxu0 0.0
      %2669 = vmatprep.subr.mxu0 0.0
      %2670 = vmatpush1.msra.mxu0 0.0
      %2671 = vmatprep.subr.mxu0 0.0
      %2672 = vmatpush1.msra.mxu0 0.0
      %2673 = vmatprep.subr.mxu0 0.0
      %2674 = vmatpush1.msra.mxu0 0.0
      %2675 = vmatprep.subr.mxu0 0.0
      %2676 = vmatpush1.msra.mxu0 0.0
      %2677 = vmatprep.mubr.f32.mxu0 0.0
      %2678 = vmatmul.mubr.f32.gmra.mrb[0].mxu0 %v2607
      %v2679 = vpop.f32.mrb[0].mxu0
      %v2680 = vadd.f32 %v2604, %v2679
      %v2681 = vpop.f32.mrb[0].mxu0
      %2682 = vdwg.mxu0
      %v2683 = vxor.u32 %v2680, 2147483648
      %v2684 = vmul.f32 %v2683, 1.442695
      %v2685 = vpow.pop %v2684
      %v2686 = vadd.f32 %v2685, 1.0
      %v2687 = vrcp.pop %v2686
      %v2688 = vmul.f32 1.0, %v2687
      %v2689 = vld [vmem:[%s489 + $0x78] sm:$0xe]
      %v2690 = vld [vmem:[%s489 + $0x7c] sm:$0xf]
      %v2691 = vld [vmem:[%s489 + $0x80] sm:$0xf]
      %v2692 = vld [vmem:[%s489 + $0x84] sm:$0xf]
      %v2693 = vld [vmem:[%s489 + $0x88] sm:$0xf]
      %v2694 = vld [vmem:[%s489 + $0x8c] sm:$0xf]
      %v2695 = vld [vmem:[%s489 + $0x90] sm:$0xf]
      %v2696 = vld [vmem:[%s489 + $0x94] sm:$0xf]
      %v2697 = vld [vmem:[%s489 + $0x98] sm:$0xf]
      %v2698 = vld [vmem:[%s489 + $0x9c] sm:$0x1]
      %v2699 = vld [vmem:[%s13] sm:$0xf]
      %v2700 = vld [vmem:[%s13 + $0x4] sm:$0xf]
      %v2701 = vld [vmem:[%s14] sm:$0x1]
      %v2703 = vlaneseq
      %v2704 = vshrl.u32 %v2703, 7
      %v2705 = vsub.s32 0, %v2704
      %v2706 = vrot.slane %v2701, %v2705
      %v2718 = vunpack.c.l.b16 %v2689
      %v2719 = vunpack.c.l.b16 %v2690
      %v2720 = vunpack.c.l.b16 %v2691
      %v2721 = vunpack.c.l.b16 %v2692
      %v2722 = vunpack.c.l.b16 %v2693
      %v2723 = vunpack.c.l.b16 %v2694
      %v2724 = vunpack.c.l.b16 %v2695
      %v2725 = vunpack.c.l.b16 %v2696
      %v2726 = vunpack.c.l.b16 %v2697
      %v2727 = vunpack.c.l.b16 %v2698
      %v2728 = vpack.c.b16 %v2719, %v2718
      %v2729 = vpack.c.b16 %v2721, %v2720
      %v2730 = vpack.c.b16 %v2723, %v2722
      %v2731 = vpack.c.b16 %v2725, %v2724
      %v2732 = vpack.c.b16 %v2727, %v2726
      %vm2733 = vsmask.f32 6400
      %v2735 = vshrl.u32 %v2728, 16
      %v2737 = vrot.slane %v2735, 1
      %v2738 = vshll.u32 %v2728, 16
      %v2740 = vrot.slane %v2738, 2
      %v2741 = vor.u32 %v2737, %v2740
      %v2743 = vshrl.u32 %v2729, 16
      %v2745 = vrot.slane %v2743, 1
      %v2746 = vshll.u32 %v2729, 16
      %v2748 = vrot.slane %v2746, 2
      %v2749 = vor.u32 %v2745, %v2748
      %v2750 = vsel %vm2733, %v2741, %v2749
      %v2752 = vshrl.u32 %v2730, 16
      %v2754 = vrot.slane %v2752, 1
      %v2755 = vshll.u32 %v2730, 16
      %v2757 = vrot.slane %v2755, 2
      %v2758 = vor.u32 %v2754, %v2757
      %v2759 = vsel %vm2733, %v2749, %v2758
      %v2761 = vshrl.u32 %v2731, 16
      %v2763 = vrot.slane %v2761, 1
      %v2764 = vshll.u32 %v2731, 16
      %v2766 = vrot.slane %v2764, 2
      %v2767 = vor.u32 %v2763, %v2766
      %v2768 = vsel %vm2733, %v2758, %v2767
      %v2770 = vshrl.u32 %v2732, 16
      %v2772 = vrot.slane %v2770, 1
      %v2773 = vshll.u32 %v2732, 16
      %v2775 = vrot.slane %v2773, 2
      %v2776 = vor.u32 %v2772, %v2775
      %v2777 = vsel %vm2733, %v2767, %v2776
      %v2780 = vunpack.c.l.b16 %v2699
      %v2781 = vunpack.c.l.b16 %v2700
      %v2782 = vpack.c.b16 %v2781, %v2780
      %v2785 = vsel %vm655, %v2750, 0
      %v2788 = vsel %vm655, %v2759, 0
      %v2791 = vsel %vm655, %v2768, 0
      %v2794 = vsel %vm655, %v2777, 0
      %v2797 = vsel %vm655, %v2776, 0
      %2799 = vmatprep.subr.bf16.mxu0 0
      %2800 = vmatpush1.bf16.msra.mxu0 %v2782
      %2801 = vmatprep.subr.bf16.mxu0 0
      %2802 = vmatpush1.bf16.msra.mxu0 0
      %2803 = vmatprep.subr.bf16.mxu0 0
      %2804 = vmatpush1.bf16.msra.mxu0 0
      %2805 = vmatprep.subr.bf16.mxu0 0
      %2806 = vmatpush1.bf16.msra.mxu0 0
      %2807 = vmatprep.subr.bf16.mxu0 0
      %2808 = vmatpush1.bf16.msra.mxu0 0
      %2809 = vmatprep.subr.bf16.mxu0 0
      %2810 = vmatpush1.bf16.msra.mxu0 0
      %2811 = vmatprep.subr.bf16.mxu0 0
      %2812 = vmatpush1.bf16.msra.mxu0 0
      %2813 = vmatprep.subr.bf16.mxu0 0
      %2814 = vmatpush1.bf16.msra.mxu0 0
      %2815 = vmatprep.subr.bf16.mxu0 0
      %2816 = vmatpush1.bf16.msra.mxu0 0
      %2817 = vmatprep.subr.bf16.mxu0 0
      %2818 = vmatpush1.bf16.msra.mxu0 0
      %2819 = vmatprep.subr.bf16.mxu0 0
      %2820 = vmatpush1.bf16.msra.mxu0 0
      %2821 = vmatprep.subr.bf16.mxu0 0
      %2822 = vmatpush1.bf16.msra.mxu0 0
      %2823 = vmatprep.subr.bf16.mxu0 0
      %2824 = vmatpush1.bf16.msra.mxu0 0
      %2825 = vmatprep.subr.bf16.mxu0 0
      %2826 = vmatpush1.bf16.msra.mxu0 0
      %2827 = vmatprep.subr.bf16.mxu0 0
      %2828 = vmatpush1.bf16.msra.mxu0 0
      %2829 = vmatprep.subr.bf16.mxu0 0
      %2830 = vmatpush1.bf16.msra.mxu0 0
      %2831 = vmatprep.mubr.bf16.mxu0 0
      %2832 = vmatmul.mubr.bf16.gmra.mrb[0].mxu0 %v2785
      %v2833 = vpop.f32.mrb[0].mxu0
      %v2834 = vadd.f32 %v2706, %v2833
      %v2835 = vpop.f32.mrb[0].mxu0
      %v2836 = vpop.f32.mrb[0].mxu0
      %v2837 = vadd.f32 %v2706, %v2836
      %v2838 = vpop.f32.mrb[0].mxu0
      %2839 = vmatprep.mubr.bf16.mxu0 0
      %2840 = vmatmul.mubr.bf16.gmra.mrb[0].mxu0 %v2788
      %v2841 = vpop.f32.mrb[0].mxu0
      %v2842 = vadd.f32 %v2706, %v2841
      %v2843 = vpop.f32.mrb[0].mxu0
      %v2844 = vpop.f32.mrb[0].mxu0
      %v2845 = vadd.f32 %v2706, %v2844
      %v2846 = vpop.f32.mrb[0].mxu0
      %2847 = vmatprep.mubr.bf16.mxu0 0
      %2848 = vmatmul.mubr.bf16.gmra.mrb[0].mxu0 %v2791
      %v2849 = vpop.f32.mrb[0].mxu0
      %v2850 = vadd.f32 %v2706, %v2849
      %v2851 = vpop.f32.mrb[0].mxu0
      %v2852 = vpop.f32.mrb[0].mxu0
      %v2853 = vadd.f32 %v2706, %v2852
      %v2854 = vpop.f32.mrb[0].mxu0
      %2855 = vmatprep.mubr.bf16.mxu0 0
      %2856 = vmatmul.mubr.bf16.gmra.mrb[0].mxu0 %v2794
      %v2857 = vpop.f32.mrb[0].mxu0
      %v2858 = vadd.f32 %v2706, %v2857
      %v2859 = vpop.f32.mrb[0].mxu0
      %v2860 = vpop.f32.mrb[0].mxu0
      %v2861 = vadd.f32 %v2706, %v2860
      %v2862 = vpop.f32.mrb[0].mxu0
      %2863 = vmatprep.mubr.bf16.mxu0 0
      %2864 = vmatmul.mubr.bf16.gmra.mrb[0].mxu0 %v2797
      %v2865 = vpop.f32.mrb[0].mxu0
      %v2866 = vadd.f32 %v2706, %v2865
      %v2867 = vpop.f32.mrb[0].mxu0
      %v2868 = vpop.f32.mrb[0].mxu0
      %v2869 = vpop.f32.mrb[0].mxu0
      %2870 = vdwg.mxu0
      %v2871 = vlaneseq
      %v2872 = vshrl.u32 %v2871, 7
      %v2873 = vsub.s32 0, %v2872
      %v2874 = vrot.slane %v2688, %v2873
      %v2875 = vmul.f32 %v2398, %v2874
      %v2876 = vmul.f32 %v2401, %v2874
      %v2877 = vmul.f32 %v2406, %v2874
      %v2878 = vmul.f32 %v2409, %v2874
      %v2879 = vmul.f32 %v2414, %v2874
      %v2880 = vmul.f32 %v2417, %v2874
      %v2881 = vmul.f32 %v2422, %v2874
      %v2882 = vmul.f32 %v2425, %v2874
      %v2883 = vmul.f32 %v2430, %v2874
      %v2884 = vadd.f32 %v2875, %v2834
      %v2885 = vadd.f32 %v2876, %v2837
      %v2886 = vadd.f32 %v2877, %v2842
      %v2887 = vadd.f32 %v2878, %v2845
      %v2888 = vadd.f32 %v2879, %v2850
      %v2889 = vadd.f32 %v2880, %v2853
      %v2890 = vadd.f32 %v2881, %v2858
      %v2891 = vadd.f32 %v2882, %v2861
      %v2892 = vadd.f32 %v2883, %v2866
      %v2893 = vmax.f32 %v2884, 0.0
      %v2894 = vmax.f32 %v2885, 0.0
      %v2895 = vmax.f32 %v2886, 0.0
      %v2896 = vmax.f32 %v2887, 0.0
      %v2897 = vmax.f32 %v2888, 0.0
      %v2898 = vmax.f32 %v2889, 0.0
      %v2899 = vmax.f32 %v2890, 0.0
      %v2900 = vmax.f32 %v2891, 0.0
      %v2901 = vmax.f32 %v2892, 0.0
      %2902 = vst.msk [vmem:[%s494] sm:$0xff] %vm2498, %v2893
      %2903 = vst.msk [vmem:[%s494 + $0x8] sm:$0xff] %vm2498, %v2894
      %2904 = vst.msk [vmem:[%s494 + $0x10] sm:$0xff] %vm2498, %v2895
      %2905 = vst.msk [vmem:[%s494 + $0x18] sm:$0xff] %vm2498, %v2896
      %2906 = vst.msk [vmem:[%s494 + $0x20] sm:$0xff] %vm2498, %v2897
      %2907 = vst.msk [vmem:[%s494 + $0x28] sm:$0xff] %vm2498, %v2898
      %2908 = vst.msk [vmem:[%s494 + $0x30] sm:$0xff] %vm2498, %v2899
      %2909 = vst.msk [vmem:[%s494 + $0x38] sm:$0xff] %vm2498, %v2900
      %2910 = vst.msk [vmem:[%s494 + $0x40] sm:$0x7f] %vm2514, %v2901
      %vm2911 = vcmask 253952
      %2912 = vst.msk [vmem:[%s494 + $0x47] sm:$0x1] %vm2911, 0.0
      %p2913 = scmp.lt.s32.totalorder %s26, 1
      %s2914 = scalar_select %p2913, %s26, 1
      %s2915 = smul.addr %s2914, 9
      %s2916 = smul.addr %s2915, 8
      %s2917 = scalar_lea.vmem %s15, %s2916
      // Predicated region
      $region81: #{se_resnext_forward.1} parent=79 // pred_check
        %p2918 = pneg %p364
      $region82: #{se_resnext_forward.1} parent=79 // pred_check_branch
        %2920 = sbr.rel (%p2918) target = $region84
      $region83: #{se_resnext_forward.1} parent=79 // pred_region
        _
      $region84: #{se_resnext_forward.1} parent=79 // pred_fallthru
        _
    $region80: #{se_resnext_forward.1} parent=5 // pred_fallthru
      _
    %p2921 = scmp.le.s32.totalorder 2, %s21
    // Predicated region
    $region85: #{se_resnext_forward.1} parent=5 // pred_check
      %p2922 = pneg %p2921
    $region86: #{se_resnext_forward.1} parent=5 // pred_check_branch
      %2924 = sbr.rel (%p2922) target = $region88
    $region87: #{se_resnext_forward.1} parent=5 // pred_region
      %s2925 = ssub.s32 %s21, 2
      // Predicated region
      $region89: #{se_resnext_forward.1} parent=87 // pred_check
        %p2926 = pneg %p370
      $region90: #{se_resnext_forward.1} parent=87 // pred_check_branch
        %2928 = sbr.rel (%p2926) target = $region92
      $region91: #{se_resnext_forward.1} parent=87 // pred_region
        %p2929 = scmp.lt.s32.totalorder %s27, 1
        %s2930 = scalar_select %p2929, %s27, 1
        %s2931 = smul.addr %s2930, 9
        %s2932 = smul.addr %s2931, 8
        %s2933 = scalar_lea.vmem %s15, %s2932
      $region92: #{se_resnext_forward.1} parent=87 // pred_fallthru
        _
    $region88: #{se_resnext_forward.1} parent=5 // pred_fallthru
      _
  $region6: #{se_resnext_forward.1} parent=0 // loop_footer
    %s25 = sadd.s32 1, %s21
  $region7: #{se_resnext_forward.1} parent=0 // loop_footer_branch
    %20 = sbr.rel target = $region3
  $region8: #{se_resnext_forward.1} parent=0 // loop_exit
    _

</llo_original>
